<compile_context>
chip_gen: v5e
topology: v5e:2x2
jax: 0.10.0
libtpu: 0.0.40
codegen_flags: <defaults>
</compile_context>

<pallas_src>
import jax
import jax.numpy as jnp
import numpy as np
from jax import lax
from jax.experimental import pallas as pl
from jax.experimental.pallas import tpu as pltpu


VMEM_LIMIT = 32 * 1024 * 1024  # scoped-VMEM request; headroom on v7x (64 MiB phys)


def _pick_tile(m, target):
    """Largest multiple of 128 that divides m and is <= target; m itself if m <= target."""
    if m <= target:
        return m
    t = target - (target % 128)
    while t >= 128:
        if m % t == 0:
            return t
        t -= 128
    return m


# --------------------------------------------------------------------------
# Kernel 1: composite image  comp = fake * (1 - mask) + real * mask
#   fake/real: (B, C, HW), mask: (B, mC, HW) with mC in {1, C}; tiled over HW.
# --------------------------------------------------------------------------
def _composite_kernel(fake_ref, real_ref, mask_ref, out_ref):
    m = mask_ref[...]                                   # (1, mC, tc) broadcasts
    out_ref[...] = fake_ref[...] * (1.0 - m) + real_ref[...] * m


def composite(fake3, real3, mask3):
    B, C, HW = fake3.shape
    mC = mask3.shape[1]
    tc = _pick_tile(HW, 2048)
    img_spec = pl.BlockSpec((1, C, tc), lambda i, j: (i, 0, j))
    msk_spec = pl.BlockSpec((1, mC, tc), lambda i, j: (i, 0, j))
    return pl.pallas_call(
        _composite_kernel,
        out_shape=jax.ShapeDtypeStruct((B, C, HW), fake3.dtype),
        grid=(B, HW // tc),
        in_specs=[img_spec, img_spec, msk_spec],
        out_specs=img_spec,
        compiler_params=pltpu.CompilerParams(
            dimension_semantics=("parallel", "parallel"),
            vmem_limit_bytes=VMEM_LIMIT),
    )(fake3, real3, mask3)


# --------------------------------------------------------------------------
# Kernel 2: conv-as-matmul + ReLU, channels-first, bf16 output.
#   cols: (B3, K=Cin*9, M=HW) bf16, wt: (N=Cout, K) bf16, b: (N, 1) f32
#   out:  (B3, N, M) bf16       (HW on the lane axis -> lane-dense stores)
# --------------------------------------------------------------------------
def _conv_mm_relu_kernel(cols_ref, wt_ref, b_ref, out_ref):
    x = cols_ref[0]                                          # (K, tm) bf16
    y = jnp.dot(wt_ref[...], x,
                preferred_element_type=jnp.float32)          # (N, tm) f32
    out_ref[0] = jnp.maximum(y + b_ref[...], 0.0).astype(out_ref.dtype)


def conv_mm_relu(cols, wt, b):
    B3, K, M = cols.shape
    N = wt.shape[0]
    tm = _pick_tile(M, 512)
    flops = 2 * B3 * M * K * N
    bytes_accessed = (cols.size * cols.dtype.itemsize
                      + wt.size * wt.dtype.itemsize
                      + b.size * b.dtype.itemsize
                      + B3 * N * M * 2)
    return pl.pallas_call(
        _conv_mm_relu_kernel,
        out_shape=jax.ShapeDtypeStruct((B3, N, M), jnp.bfloat16),
        grid=(B3, M // tm),
        in_specs=[
            pl.BlockSpec((1, K, tm), lambda i, j: (i, 0, j)),
            pl.BlockSpec((N, K), lambda i, j: (0, 0)),       # weights resident
            pl.BlockSpec((N, 1), lambda i, j: (0, 0)),       # bias resident
        ],
        out_specs=pl.BlockSpec((1, N, tm), lambda i, j: (i, 0, j)),
        compiler_params=pltpu.CompilerParams(
            dimension_semantics=("parallel", "parallel"),
            vmem_limit_bytes=VMEM_LIMIT),
        cost_estimate=pl.CostEstimate(flops=flops, transcendentals=0,
                                      bytes_accessed=bytes_accessed),
    )(cols, wt, b)


# --------------------------------------------------------------------------
# Kernel 3: fused 3-stream gram + L1, tiled over HW, accumulated over batch.
#   feats4: (3, B, C, HW) bf16   ([fake | real | comp] stacked on axis 0)
#   Per (b, k) grid step: one (3C, tk) x (3C, tk)^T matmul is accumulated into
#   a resident (3C, 3C) f32 scratch; on the last HW tile the three diagonal
#   CxC blocks (gf, gr, gc) are sliced and UNSCALED sum|gf-gr|+|gc-gr| is
#   added to the (1,1) output.  All scaling (1/(C*HW) gram norm and
#   1/(B*C*C) mean) is hoisted outside the kernel.
# --------------------------------------------------------------------------
def _gram_l1_kernel(feats_ref, out_ref, gacc_ref):
    b = pl.program_id(0)
    k = pl.program_id(1)
    nk = pl.num_programs(1)

    @pl.when(jnp.logical_and(b == 0, k == 0))
    def _():
        out_ref[...] = jnp.zeros_like(out_ref)

    @pl.when(k == 0)
    def _():
        gacc_ref[...] = jnp.zeros_like(gacc_ref)

    C = feats_ref.shape[2]
    tk = feats_ref.shape[3]
    x3 = feats_ref[...].reshape(3 * C, tk)                          # (3C, tk) bf16
    gacc_ref[...] += lax.dot_general(x3, x3, (((1,), (1,)), ((), ())),
                                     preferred_element_type=jnp.float32)

    @pl.when(k == nk - 1)
    def _():
        g = gacc_ref[...]
        gf = g[0:C, 0:C]
        gr = g[C:2 * C, C:2 * C]
        gc = g[2 * C:3 * C, 2 * C:3 * C]
        out_ref[...] += (jnp.sum(jnp.abs(gf - gr), axis=(0, 1), keepdims=True) +
                         jnp.sum(jnp.abs(gc - gr), axis=(0, 1), keepdims=True))


def gram_l1(feats):
    """feats: (3B, C, HW) channels-first bf16, batch layout [fake | real | comp]."""
    B3, C, HW = feats.shape
    B = B3 // 3
    feats4 = feats.reshape(3, B, C, HW)
    tk = _pick_tile(HW, 2048)
    # TODO(synk): for large B on v7x, shard B across the two TensorCores with
    # a per-core partial output and sum outside; the serial accumulation here
    # keeps a single (1,1) resident output.
    out = pl.pallas_call(
        _gram_l1_kernel,
        out_shape=jax.ShapeDtypeStruct((1, 1), jnp.float32),
        grid=(B, HW // tk),
        in_specs=[pl.BlockSpec((3, 1, C, tk), lambda b, k: (0, b, 0, k))],
        out_specs=pl.BlockSpec((1, 1), lambda b, k: (0, 0)),
        scratch_shapes=[pltpu.VMEM((3 * C, 3 * C), jnp.float32)],
        compiler_params=pltpu.CompilerParams(
            dimension_semantics=("arbitrary", "arbitrary"),
            vmem_limit_bytes=VMEM_LIMIT),
        cost_estimate=pl.CostEstimate(
            flops=2 * B * (3 * C) * (3 * C) * HW,
            transcendentals=0,
            bytes_accessed=feats4.size * feats4.dtype.itemsize + 4),
    )(feats4)
    scale = 1.0 / (float(C * HW) * float(B * C * C))   # hoisted gram norm + L1 mean
    return out[0, 0] * scale


# --------------------------------------------------------------------------
# Synthetic deterministic feature extractor (3 levels of 3x3/s2 conv + ReLU),
# channels-first everywhere.  im2col produces (B, Cin*9, Ho*Wo): no transposes.
# --------------------------------------------------------------------------
# TODO(synk): move im2col into the conv kernel (9 shifted loads from a pl.ANY
# HBM ref) to cut conv input HBM traffic ~9x at real image sizes.
def im2col_cf(x, k=3, stride=2, pad=1):
    B, C, H, W = x.shape
    xp = jnp.pad(x, ((0, 0), (0, 0), (pad, pad), (pad, pad)))
    Ho = (H + 2 * pad - k) // stride + 1
    Wo = (W + 2 * pad - k) // stride + 1
    taps = []
    for di in range(k):
        for dj in range(k):
            taps.append(xp[:, :, di:di + stride * Ho:stride,
                               dj:dj + stride * Wo:stride])
    col = jnp.stack(taps, axis=2)                 # (B, C, 9, Ho, Wo)
    col = col.reshape(B, C * k * k, Ho * Wo)      # K index = c*9 + tap
    return col, Ho, Wo


def init_feature_extractor(key, c_in, channels):
    params = []
    cin = c_in
    for cout in channels:
        key, k1, k2 = jax.random.split(key, 3)
        fan_in = cin * 9
        w = jax.random.normal(k1, (fan_in, cout), jnp.float32) * (2.0 / fan_in) ** 0.5
        b = jax.random.normal(k2, (cout,), jnp.float32) * 0.01
        params.append((w, b))
        cin = cout
    return params


def feature_extractor(x, params):
    """x: (B3, C, H, W) f32 -> list of (B3, Cout, H'*W') bf16 features."""
    feats = []
    for (w, b) in params:
        B3 = x.shape[0]
        cols, Ho, Wo = im2col_cf(x)                          # (B3, K, HW)
        y = conv_mm_relu(cols.astype(jnp.bfloat16),          # bf16 MXU operands
                         w.T.astype(jnp.bfloat16),           # (N, K)
                         b.reshape(-1, 1))                   # (N, 1) f32
        feats.append(y)                                      # (B3, N, HW) bf16
        x = y.reshape(B3, w.shape[1], Ho, Wo)                # stays channels-first
    return feats


# --------------------------------------------------------------------------
# StyleLoss forward
# --------------------------------------------------------------------------
def style_loss(fake_img, real_img, mask, params, n_features=3):
    B, C, H, W = fake_img.shape
    mC = mask.shape[1]
    comp3 = composite(fake_img.reshape(B, C, H * W),
                      real_img.reshape(B, C, H * W),
                      mask.astype(fake_img.dtype).reshape(B, mC, H * W))
    comp_img = comp3.reshape(B, C, H, W)
    # TODO(synk): fold the blend into the level-1 conv path of the comp stream
    # to save one full image HBM read+write.

    # single feature-extractor pass over the stacked [fake | real | comp] batch
    stacked = jnp.concatenate([fake_img, real_img, comp_img], axis=0)  # (3B,C,H,W)
    feats = feature_extractor(stacked, params)

    total = jnp.float32(0.0)
    for i in range(n_features):
        total = total + gram_l1(feats[i])
    return total


# --------------------------------------------------------------------------
# Pure-JAX f32 reference (semantics of the PyTorch module with same extractor)
# --------------------------------------------------------------------------
def style_loss_ref(fake_img, real_img, mask, params, n_features=3):
    m = jnp.broadcast_to(mask, fake_img.shape).astype(fake_img.dtype)
    comp_img = fake_img * (1.0 - m) + real_img * m

    def extract(x):
        feats = []
        for (w, b) in params:
            B = x.shape[0]
            cols, Ho, Wo = im2col_cf(x)                       # (B, K, M)
            y = jnp.maximum(jnp.einsum('bkm,kn->bnm', cols, w) + b[None, :, None], 0.0)
            feats.append(y)                                   # (B, N, M)
            x = y.reshape(B, w.shape[1], Ho, Wo)
        return feats

    ff, rf, cf = extract(fake_img), extract(real_img), extract(comp_img)
    total = 0.0
    for i in range(n_features):
        _, C, HW = ff[i].shape

        def gram(x):
            return jnp.einsum('bcm,bdm->bcd', x, x) / (C * HW)

        gf, gr, gc = gram(ff[i]), gram(rf[i]), gram(cf[i])
        total = total + jnp.mean(jnp.abs(gf - gr)) + jnp.mean(jnp.abs(gc - gr))
    return total


if __name__ == "__main__":
    key = jax.random.PRNGKey(0)
    k1, k2, k3, kp = jax.random.split(key, 4)
    B, C, H, W = 2, 4, 16, 16
    fake = jax.random.normal(k1, (B, C, H, W), jnp.float32)
    real = jax.random.normal(k2, (B, C, H, W), jnp.float32)
    mask = (jax.random.uniform(k3, (B, 1, H, W)) > 0.5).astype(jnp.float32)

    params = init_feature_extractor(kp, C, (8, 16, 32))

    loss_fn = jax.jit(lambda f, r, m: style_loss(f, r, m, params))
    loss = jax.block_until_ready(loss_fn(fake, real, mask))

    ref = jax.block_until_ready(style_loss_ref(fake, real, mask, params))
    # bf16 MXU operands / bf16 feature storage trade <1% accuracy; f32 accumulation.
    np.testing.assert_allclose(np.asarray(loss), np.asarray(ref),
                               rtol=2e-2, atol=2e-3)
    print("KERNEL_OK")
</pallas_src>

<mosaic_0001>
module attributes {stable_mosaic.version = 11 : i64} {
  func.func @_composite_kernel(%arg0: i32, %arg1: i32, %arg2: memref<1x4x256xf32, #tpu.memory_space<vmem>>, %arg3: memref<1x4x256xf32, #tpu.memory_space<vmem>>, %arg4: memref<1x1x256xf32, #tpu.memory_space<vmem>>, %arg5: memref<1x4x256xf32, #tpu.memory_space<vmem>>) attributes {dimension_semantics = [#tpu.dimension_semantics<parallel>, #tpu.dimension_semantics<parallel>], iteration_bounds = array<i64: 2, 1>, scalar_prefetch = 0 : i64, scratch_operands = 0 : i64, tpu.core_type = #tpu.core_type<tc>, window_params = [{transform_indices = @transform_0, window_bounds = array<i64: 1, 4, 256>}, {transform_indices = @transform_1, window_bounds = array<i64: 1, 4, 256>}, {transform_indices = @transform_2, window_bounds = array<i64: 1, 1, 256>}, {transform_indices = @transform_3, window_bounds = array<i64: 1, 4, 256>}]} {
    %c0 = arith.constant 0 : index
    %c0_0 = arith.constant 0 : index
    %c0_1 = arith.constant 0 : index
    %0 = vector.load %arg4[%c0, %c0_0, %c0_1] : memref<1x1x256xf32, #tpu.memory_space<vmem>>, vector<1x1x256xf32>
    %c0_2 = arith.constant 0 : index
    %c0_3 = arith.constant 0 : index
    %c0_4 = arith.constant 0 : index
    %1 = vector.load %arg2[%c0_2, %c0_3, %c0_4] : memref<1x4x256xf32, #tpu.memory_space<vmem>>, vector<1x4x256xf32>
    %cst = arith.constant 1.000000e+00 : f32
    %2 = vector.broadcast %cst : f32 to vector<1x1x256xf32>
    %3 = arith.subf %2, %0 : vector<1x1x256xf32>
    %4 = vector.broadcast %3 : vector<1x1x256xf32> to vector<1x4x256xf32>
    %5 = arith.mulf %1, %4 : vector<1x4x256xf32>
    %c0_5 = arith.constant 0 : index
    %c0_6 = arith.constant 0 : index
    %c0_7 = arith.constant 0 : index
    %6 = vector.load %arg3[%c0_5, %c0_6, %c0_7] : memref<1x4x256xf32, #tpu.memory_space<vmem>>, vector<1x4x256xf32>
    %7 = vector.broadcast %0 : vector<1x1x256xf32> to vector<1x4x256xf32>
    %8 = arith.mulf %6, %7 : vector<1x4x256xf32>
    %9 = arith.addf %5, %8 : vector<1x4x256xf32>
    %c0_8 = arith.constant 0 : index
    %c0_9 = arith.constant 0 : index
    %c0_10 = arith.constant 0 : index
    %10 = vector.load %arg5[%c0_8, %c0_9, %c0_10] : memref<1x4x256xf32, #tpu.memory_space<vmem>>, vector<1x4x256xf32>
    tpu.vector_store %arg5[%c0_8, %c0_9, %c0_10], %9 {strides = array<i32>} : memref<1x4x256xf32, #tpu.memory_space<vmem>>, vector<1x4x256xf32>,
    return
  }
  func.func @transform_0(%arg0: i32, %arg1: i32) -> (i32, i32, i32) {
    %c0_i32 = arith.constant 0 : i32
    %c0_i32_0 = arith.constant 0 : i32
    return %arg0, %c0_i32, %arg1 : i32, i32, i32
  }
  func.func @transform_1(%arg0: i32, %arg1: i32) -> (i32, i32, i32) {
    %c0_i32 = arith.constant 0 : i32
    %c0_i32_0 = arith.constant 0 : i32
    return %arg0, %c0_i32, %arg1 : i32, i32, i32
  }
  func.func @transform_2(%arg0: i32, %arg1: i32) -> (i32, i32, i32) {
    %c0_i32 = arith.constant 0 : i32
    %c0_i32_0 = arith.constant 0 : i32
    return %arg0, %c0_i32, %arg1 : i32, i32, i32
  }
  func.func @transform_3(%arg0: i32, %arg1: i32) -> (i32, i32, i32) {
    %c0_i32 = arith.constant 0 : i32
    %c0_i32_0 = arith.constant 0 : i32
    return %arg0, %c0_i32, %arg1 : i32, i32, i32
  }
}

module attributes {stable_mosaic.version = 11 : i64} {
  func.func @_conv_mm_relu_kernel(%arg0: i32, %arg1: i32, %arg2: memref<1x36x64xbf16, #tpu.memory_space<vmem>>, %arg3: memref<8x36xbf16, #tpu.memory_space<vmem>>, %arg4: memref<8x1xf32, #tpu.memory_space<vmem>>, %arg5: memref<1x8x64xbf16, #tpu.memory_space<vmem>>) attributes {dimension_semantics = [#tpu.dimension_semantics<parallel>, #tpu.dimension_semantics<parallel>], iteration_bounds = array<i64: 6, 1>, scalar_prefetch = 0 : i64, scratch_operands = 0 : i64, tpu.core_type = #tpu.core_type<tc>, window_params = [{transform_indices = @transform_0, window_bounds = array<i64: 1, 36, 64>}, {pipeline_mode = #tpu.pipeline_mode<synchronous>, transform_indices = @transform_1, window_bounds = array<i64: 8, 36>}, {pipeline_mode = #tpu.pipeline_mode<synchronous>, transform_indices = @transform_2, window_bounds = array<i64: 8, 1>}, {transform_indices = @transform_3, window_bounds = array<i64: 1, 8, 64>}]} {
    %c0 = arith.constant 0 : index
    %c0_0 = arith.constant 0 : index
    %c0_1 = arith.constant 0 : index
    %0 = vector.load %arg2[%c0, %c0_0, %c0_1] : memref<1x36x64xbf16, #tpu.memory_space<vmem>>, vector<1x36x64xbf16>
    %1 = vector.shape_cast %0 : vector<1x36x64xbf16> to vector<36x64xbf16>
    %c0_2 = arith.constant 0 : index
    %c0_3 = arith.constant 0 : index
    %2 = vector.load %arg3[%c0_2, %c0_3] : memref<8x36xbf16, #tpu.memory_space<vmem>>, vector<8x36xbf16>
    %cst = arith.constant dense<0.000000e+00> : vector<8x64xf32>
    %3 = tpu.matmul %2, %1, %cst {dimension_numbers = #tpu.dot_dimension_numbers<[1], [0], [0], [1], [0, 0, 1, 1], [], []>} : vector<8x36xbf16>, vector<36x64xbf16>, vector<8x64xf32> -> vector<8x64xf32>
    %c0_4 = arith.constant 0 : index
    %c0_5 = arith.constant 0 : index
    %4 = vector.load %arg4[%c0_4, %c0_5] : memref<8x1xf32, #tpu.memory_space<vmem>>, vector<8x1xf32>
    %5 = vector.broadcast %4 : vector<8x1xf32> to vector<8x64xf32>
    %6 = arith.addf %3, %5 : vector<8x64xf32>
    %cst_6 = arith.constant 0.000000e+00 : f32
    %7 = vector.broadcast %cst_6 : f32 to vector<8x64xf32>
    %8 = arith.maximumf %6, %7 : vector<8x64xf32>
    %9 = arith.truncf %8 : vector<8x64xf32> to vector<8x64xbf16>
    %c0_7 = arith.constant 0 : index
    %c0_8 = arith.constant 0 : index
    %c0_9 = arith.constant 0 : index
    %10 = vector.load %arg5[%c0_7, %c0_8, %c0_9] : memref<1x8x64xbf16, #tpu.memory_space<vmem>>, vector<1x8x64xbf16>
    %11 = vector.shape_cast %10 : vector<1x8x64xbf16> to vector<8x64xbf16>
    %12 = vector.shape_cast %9 : vector<8x64xbf16> to vector<1x8x64xbf16>
    tpu.vector_store %arg5[%c0_7, %c0_8, %c0_9], %12 {strides = array<i32>} : memref<1x8x64xbf16, #tpu.memory_space<vmem>>, vector<1x8x64xbf16>,
    return
  }
  func.func @transform_0(%arg0: i32, %arg1: i32) -> (i32, i32, i32) {
    %c0_i32 = arith.constant 0 : i32
    %c0_i32_0 = arith.constant 0 : i32
    return %arg0, %c0_i32, %arg1 : i32, i32, i32
  }
  func.func @transform_1(%arg0: i32, %arg1: i32) -> (i32, i32) {
    %c0_i32 = arith.constant 0 : i32
    %c0_i32_0 = arith.constant 0 : i32
    %c0_i32_1 = arith.constant 0 : i32
    return %c0_i32, %c0_i32_0 : i32, i32
  }
  func.func @transform_2(%arg0: i32, %arg1: i32) -> (i32, i32) {
    %c0_i32 = arith.constant 0 : i32
    %c0_i32_0 = arith.constant 0 : i32
    %c0_i32_1 = arith.constant 0 : i32
    return %c0_i32, %c0_i32_0 : i32, i32
  }
  func.func @transform_3(%arg0: i32, %arg1: i32) -> (i32, i32, i32) {
    %c0_i32 = arith.constant 0 : i32
    %c0_i32_0 = arith.constant 0 : i32
    return %arg0, %c0_i32, %arg1 : i32, i32, i32
  }
}

module attributes {stable_mosaic.version = 11 : i64} {
  func.func @_conv_mm_relu_kernel(%arg0: i32, %arg1: i32, %arg2: memref<1x72x16xbf16, #tpu.memory_space<vmem>>, %arg3: memref<16x72xbf16, #tpu.memory_space<vmem>>, %arg4: memref<16x1xf32, #tpu.memory_space<vmem>>, %arg5: memref<1x16x16xbf16, #tpu.memory_space<vmem>>) attributes {dimension_semantics = [#tpu.dimension_semantics<parallel>, #tpu.dimension_semantics<parallel>], iteration_bounds = array<i64: 6, 1>, scalar_prefetch = 0 : i64, scratch_operands = 0 : i64, tpu.core_type = #tpu.core_type<tc>, window_params = [{transform_indices = @transform_0, window_bounds = array<i64: 1, 72, 16>}, {pipeline_mode = #tpu.pipeline_mode<synchronous>, transform_indices = @transform_1, window_bounds = array<i64: 16, 72>}, {pipeline_mode = #tpu.pipeline_mode<synchronous>, transform_indices = @transform_2, window_bounds = array<i64: 16, 1>}, {transform_indices = @transform_3, window_bounds = array<i64: 1, 16, 16>}]} {
    %c0 = arith.constant 0 : index
    %c0_0 = arith.constant 0 : index
    %c0_1 = arith.constant 0 : index
    %0 = vector.load %arg2[%c0, %c0_0, %c0_1] : memref<1x72x16xbf16, #tpu.memory_space<vmem>>, vector<1x72x16xbf16>
    %1 = vector.shape_cast %0 : vector<1x72x16xbf16> to vector<72x16xbf16>
    %c0_2 = arith.constant 0 : index
    %c0_3 = arith.constant 0 : index
    %2 = vector.load %arg3[%c0_2, %c0_3] : memref<16x72xbf16, #tpu.memory_space<vmem>>, vector<16x72xbf16>
    %cst = arith.constant dense<0.000000e+00> : vector<16x16xf32>
    %3 = tpu.matmul %2, %1, %cst {dimension_numbers = #tpu.dot_dimension_numbers<[1], [0], [0], [1], [0, 0, 1, 1], [], []>} : vector<16x72xbf16>, vector<72x16xbf16>, vector<16x16xf32> -> vector<16x16xf32>
    %c0_4 = arith.constant 0 : index
    %c0_5 = arith.constant 0 : index
    %4 = vector.load %arg4[%c0_4, %c0_5] : memref<16x1xf32, #tpu.memory_space<vmem>>, vector<16x1xf32>
    %5 = vector.broadcast %4 : vector<16x1xf32> to vector<16x16xf32>
    %6 = arith.addf %3, %5 : vector<16x16xf32>
    %cst_6 = arith.constant 0.000000e+00 : f32
    %7 = vector.broadcast %cst_6 : f32 to vector<16x16xf32>
    %8 = arith.maximumf %6, %7 : vector<16x16xf32>
    %9 = arith.truncf %8 : vector<16x16xf32> to vector<16x16xbf16>
    %c0_7 = arith.constant 0 : index
    %c0_8 = arith.constant 0 : index
    %c0_9 = arith.constant 0 : index
    %10 = vector.load %arg5[%c0_7, %c0_8, %c0_9] : memref<1x16x16xbf16, #tpu.memory_space<vmem>>, vector<1x16x16xbf16>
    %11 = vector.shape_cast %10 : vector<1x16x16xbf16> to vector<16x16xbf16>
    %12 = vector.shape_cast %9 : vector<16x16xbf16> to vector<1x16x16xbf16>
    tpu.vector_store %arg5[%c0_7, %c0_8, %c0_9], %12 {strides = array<i32>} : memref<1x16x16xbf16, #tpu.memory_space<vmem>>, vector<1x16x16xbf16>,
    return
  }
  func.func @transform_0(%arg0: i32, %arg1: i32) -> (i32, i32, i32) {
    %c0_i32 = arith.constant 0 : i32
    %c0_i32_0 = arith.constant 0 : i32
    return %arg0, %c0_i32, %arg1 : i32, i32, i32
  }
  func.func @transform_1(%arg0: i32, %arg1: i32) -> (i32, i32) {
    %c0_i32 = arith.constant 0 : i32
    %c0_i32_0 = arith.constant 0 : i32
    %c0_i32_1 = arith.constant 0 : i32
    return %c0_i32, %c0_i32_0 : i32, i32
  }
  func.func @transform_2(%arg0: i32, %arg1: i32) -> (i32, i32) {
    %c0_i32 = arith.constant 0 : i32
    %c0_i32_0 = arith.constant 0 : i32
    %c0_i32_1 = arith.constant 0 : i32
    return %c0_i32, %c0_i32_0 : i32, i32
  }
  func.func @transform_3(%arg0: i32, %arg1: i32) -> (i32, i32, i32) {
    %c0_i32 = arith.constant 0 : i32
    %c0_i32_0 = arith.constant 0 : i32
    return %arg0, %c0_i32, %arg1 : i32, i32, i32
  }
}

module attributes {stable_mosaic.version = 11 : i64} {
  func.func @_conv_mm_relu_kernel(%arg0: i32, %arg1: i32, %arg2: memref<1x144x4xbf16, #tpu.memory_space<vmem>>, %arg3: memref<32x144xbf16, #tpu.memory_space<vmem>>, %arg4: memref<32x1xf32, #tpu.memory_space<vmem>>, %arg5: memref<1x32x4xbf16, #tpu.memory_space<vmem>>) attributes {dimension_semantics = [#tpu.dimension_semantics<parallel>, #tpu.dimension_semantics<parallel>], iteration_bounds = array<i64: 6, 1>, scalar_prefetch = 0 : i64, scratch_operands = 0 : i64, tpu.core_type = #tpu.core_type<tc>, window_params = [{transform_indices = @transform_0, window_bounds = array<i64: 1, 144, 4>}, {pipeline_mode = #tpu.pipeline_mode<synchronous>, transform_indices = @transform_1, window_bounds = array<i64: 32, 144>}, {pipeline_mode = #tpu.pipeline_mode<synchronous>, transform_indices = @transform_2, window_bounds = array<i64: 32, 1>}, {transform_indices = @transform_3, window_bounds = array<i64: 1, 32, 4>}]} {
    %c0 = arith.constant 0 : index
    %c0_0 = arith.constant 0 : index
    %c0_1 = arith.constant 0 : index
    %0 = vector.load %arg2[%c0, %c0_0, %c0_1] : memref<1x144x4xbf16, #tpu.memory_space<vmem>>, vector<1x144x4xbf16>
    %1 = vector.shape_cast %0 : vector<1x144x4xbf16> to vector<144x4xbf16>
    %c0_2 = arith.constant 0 : index
    %c0_3 = arith.constant 0 : index
    %2 = vector.load %arg3[%c0_2, %c0_3] : memref<32x144xbf16, #tpu.memory_space<vmem>>, vector<32x144xbf16>
    %cst = arith.constant dense<0.000000e+00> : vector<32x4xf32>
    %3 = tpu.matmul %2, %1, %cst {dimension_numbers = #tpu.dot_dimension_numbers<[1], [0], [0], [1], [0, 0, 1, 1], [], []>} : vector<32x144xbf16>, vector<144x4xbf16>, vector<32x4xf32> -> vector<32x4xf32>
    %c0_4 = arith.constant 0 : index
    %c0_5 = arith.constant 0 : index
    %4 = vector.load %arg4[%c0_4, %c0_5] : memref<32x1xf32, #tpu.memory_space<vmem>>, vector<32x1xf32>
    %5 = vector.broadcast %4 : vector<32x1xf32> to vector<32x4xf32>
    %6 = arith.addf %3, %5 : vector<32x4xf32>
    %cst_6 = arith.constant 0.000000e+00 : f32
    %7 = vector.broadcast %cst_6 : f32 to vector<32x4xf32>
    %8 = arith.maximumf %6, %7 : vector<32x4xf32>
    %9 = arith.truncf %8 : vector<32x4xf32> to vector<32x4xbf16>
    %c0_7 = arith.constant 0 : index
    %c0_8 = arith.constant 0 : index
    %c0_9 = arith.constant 0 : index
    %10 = vector.load %arg5[%c0_7, %c0_8, %c0_9] : memref<1x32x4xbf16, #tpu.memory_space<vmem>>, vector<1x32x4xbf16>
    %11 = vector.shape_cast %10 : vector<1x32x4xbf16> to vector<32x4xbf16>
    %12 = vector.shape_cast %9 : vector<32x4xbf16> to vector<1x32x4xbf16>
    tpu.vector_store %arg5[%c0_7, %c0_8, %c0_9], %12 {strides = array<i32>} : memref<1x32x4xbf16, #tpu.memory_space<vmem>>, vector<1x32x4xbf16>,
    return
  }
  func.func @transform_0(%arg0: i32, %arg1: i32) -> (i32, i32, i32) {
    %c0_i32 = arith.constant 0 : i32
    %c0_i32_0 = arith.constant 0 : i32
    return %arg0, %c0_i32, %arg1 : i32, i32, i32
  }
  func.func @transform_1(%arg0: i32, %arg1: i32) -> (i32, i32) {
    %c0_i32 = arith.constant 0 : i32
    %c0_i32_0 = arith.constant 0 : i32
    %c0_i32_1 = arith.constant 0 : i32
    return %c0_i32, %c0_i32_0 : i32, i32
  }
  func.func @transform_2(%arg0: i32, %arg1: i32) -> (i32, i32) {
    %c0_i32 = arith.constant 0 : i32
    %c0_i32_0 = arith.constant 0 : i32
    %c0_i32_1 = arith.constant 0 : i32
    return %c0_i32, %c0_i32_0 : i32, i32
  }
  func.func @transform_3(%arg0: i32, %arg1: i32) -> (i32, i32, i32) {
    %c0_i32 = arith.constant 0 : i32
    %c0_i32_0 = arith.constant 0 : i32
    return %arg0, %c0_i32, %arg1 : i32, i32, i32
  }
}

module attributes {stable_mosaic.version = 11 : i64} {
  func.func @_gram_l1_kernel(%arg0: i32, %arg1: i32, %arg2: memref<3x1x32x4xbf16, #tpu.memory_space<vmem>>, %arg3: memref<1x1xf32, #tpu.memory_space<vmem>>, %arg4: memref<96x96xf32, #tpu.memory_space<vmem>>) attributes {dimension_semantics = [#tpu.dimension_semantics<arbitrary>, #tpu.dimension_semantics<arbitrary>], iteration_bounds = array<i64: 2, 1>, scalar_prefetch = 0 : i64, scratch_operands = 1 : i64, tpu.core_type = #tpu.core_type<tc>, window_params = [{transform_indices = @transform_0, window_bounds = array<i64: 3, 1, 32, 4>}, {pipeline_mode = #tpu.pipeline_mode<synchronous>, transform_indices = @transform_1, window_bounds = array<i64: 1, 1>}]} {
    %c0_i32 = arith.constant 0 : i32
    %0 = arith.cmpi eq, %arg0, %c0_i32 : i32
    %c0_i32_0 = arith.constant 0 : i32
    %1 = arith.cmpi eq, %arg1, %c0_i32_0 : i32
    %2 = arith.andi %0, %1 : i1
    %3 = arith.extui %2 : i1 to i32
    %c0_i32_1 = arith.constant 0 : i32
    %4 = arith.cmpi ne, %3, %c0_i32_1 : i32
    scf.if %4 {
      %cst_13 = arith.constant 0.000000e+00 : f32
      %17 = vector.broadcast %cst_13 : f32 to vector<1x1xf32>
      %c0_14 = arith.constant 0 : index
      %c0_15 = arith.constant 0 : index
      %18 = vector.load %arg3[%c0_14, %c0_15] : memref<1x1xf32, #tpu.memory_space<vmem>>, vector<1x1xf32>
      tpu.vector_store %arg3[%c0_14, %c0_15], %17 {strides = array<i32>} : memref<1x1xf32, #tpu.memory_space<vmem>>, vector<1x1xf32>,
    } else {
    }
    %c0_i32_2 = arith.constant 0 : i32
    %5 = arith.cmpi eq, %arg1, %c0_i32_2 : i32
    %6 = arith.extui %5 : i1 to i32
    %c0_i32_3 = arith.constant 0 : i32
    %7 = arith.cmpi ne, %6, %c0_i32_3 : i32
    scf.if %7 {
      %cst_13 = arith.constant 0.000000e+00 : f32
      %17 = vector.broadcast %cst_13 : f32 to vector<96x96xf32>
      %c0_14 = arith.constant 0 : index
      %c0_15 = arith.constant 0 : index
      %18 = vector.load %arg4[%c0_14, %c0_15] : memref<96x96xf32, #tpu.memory_space<vmem>>, vector<96x96xf32>
      tpu.vector_store %arg4[%c0_14, %c0_15], %17 {strides = array<i32>} : memref<96x96xf32, #tpu.memory_space<vmem>>, vector<96x96xf32>,
    } else {
    }
    %c0 = arith.constant 0 : index
    %c0_4 = arith.constant 0 : index
    %c0_5 = arith.constant 0 : index
    %c0_6 = arith.constant 0 : index
    %8 = vector.load %arg2[%c0, %c0_4, %c0_5, %c0_6] : memref<3x1x32x4xbf16, #tpu.memory_space<vmem>>, vector<3x1x32x4xbf16>
    %9 = vector.shape_cast %8 : vector<3x1x32x4xbf16> to vector<96x4xbf16>
    %c0_7 = arith.constant 0 : index
    %c0_8 = arith.constant 0 : index
    %10 = vector.load %arg4[%c0_7, %c0_8] : memref<96x96xf32, #tpu.memory_space<vmem>>, vector<96x96xf32>
    %cst = arith.constant dense<0.000000e+00> : vector<96x96xf32>
    %11 = tpu.matmul %9, %9, %cst {dimension_numbers = #tpu.dot_dimension_numbers<[1], [1], [0], [0], [0, 0, 1, 0], [], []>} : vector<96x4xbf16>, vector<96x4xbf16>, vector<96x96xf32> -> vector<96x96xf32>
    %12 = arith.addf %10, %11 : vector<96x96xf32>
    %c0_9 = arith.constant 0 : index
    %c0_10 = arith.constant 0 : index
    %13 = vector.load %arg4[%c0_9, %c0_10] : memref<96x96xf32, #tpu.memory_space<vmem>>, vector<96x96xf32>
    tpu.vector_store %arg4[%c0_9, %c0_10], %12 {strides = array<i32>} : memref<96x96xf32, #tpu.memory_space<vmem>>, vector<96x96xf32>,
    %c0_i32_11 = arith.constant 0 : i32
    %14 = arith.cmpi eq, %arg1, %c0_i32_11 : i32
    %15 = arith.extui %14 : i1 to i32
    %c0_i32_12 = arith.constant 0 : i32
    %16 = arith.cmpi ne, %15, %c0_i32_12 : i32
    scf.if %16 {
      %c0_13 = arith.constant 0 : index
      %c0_14 = arith.constant 0 : index
      %17 = vector.load %arg4[%c0_13, %c0_14] : memref<96x96xf32, #tpu.memory_space<vmem>>, vector<96x96xf32>
      %18 = vector.extract_strided_slice %17 {offsets = [0, 0], sizes = [32, 32], strides = [1, 1]} : vector<96x96xf32> to vector<32x32xf32>
      %19 = vector.extract_strided_slice %17 {offsets = [32, 32], sizes = [32, 32], strides = [1, 1]} : vector<96x96xf32> to vector<32x32xf32>
      %20 = vector.extract_strided_slice %17 {offsets = [64, 64], sizes = [32, 32], strides = [1, 1]} : vector<96x96xf32> to vector<32x32xf32>
      %c0_15 = arith.constant 0 : index
      %c0_16 = arith.constant 0 : index
      %21 = vector.load %arg3[%c0_15, %c0_16] : memref<1x1xf32, #tpu.memory_space<vmem>>, vector<1x1xf32>
      %22 = arith.subf %18, %19 : vector<32x32xf32>
      %23 = math.absf %22 : vector<32x32xf32>
      %24 = vector.shape_cast %23 : vector<32x32xf32> to vector<1x32x32xf32>
      %cst_17 = arith.constant dense<0.000000e+00> : vector<1xf32>
      %25 = vector.multi_reduction <add>, %24, %cst_17 [1, 2] : vector<1x32x32xf32> to vector<1xf32>
      %26 = vector.shape_cast %25 : vector<1xf32> to vector<1x1x1xf32>
      %27 = vector.extract %26[0, 0, 0] : f32 from vector<1x1x1xf32>
      %28 = vector.broadcast %27 : f32 to vector<1x1xf32>
      %29 = arith.subf %20, %19 : vector<32x32xf32>
      %30 = math.absf %29 : vector<32x32xf32>
      %31 = vector.shape_cast %30 : vector<32x32xf32> to vector<1x32x32xf32>
      %cst_18 = arith.constant dense<0.000000e+00> : vector<1xf32>
      %32 = vector.multi_reduction <add>, %31, %cst_18 [1, 2] : vector<1x32x32xf32> to vector<1xf32>
      %33 = vector.shape_cast %32 : vector<1xf32> to vector<1x1x1xf32>
      %34 = vector.extract %33[0, 0, 0] : f32 from vector<1x1x1xf32>
      %35 = vector.broadcast %34 : f32 to vector<1x1xf32>
      %36 = arith.addf %28, %35 : vector<1x1xf32>
      %37 = arith.addf %21, %36 : vector<1x1xf32>
      %c0_19 = arith.constant 0 : index
      %c0_20 = arith.constant 0 : index
      %38 = vector.load %arg3[%c0_19, %c0_20] : memref<1x1xf32, #tpu.memory_space<vmem>>, vector<1x1xf32>
      tpu.vector_store %arg3[%c0_19, %c0_20], %37 {strides = array<i32>} : memref<1x1xf32, #tpu.memory_space<vmem>>, vector<1x1xf32>,
    } else {
    }
    return
  }
  func.func @transform_0(%arg0: i32, %arg1: i32) -> (i32, i32, i32, i32) {
    %c0_i32 = arith.constant 0 : i32
    %c0_i32_0 = arith.constant 0 : i32
    %c0_i32_1 = arith.constant 0 : i32
    return %c0_i32, %arg0, %c0_i32_0, %arg1 : i32, i32, i32, i32
  }
  func.func @transform_1(%arg0: i32, %arg1: i32) -> (i32, i32) {
    %c0_i32 = arith.constant 0 : i32
    %c0_i32_0 = arith.constant 0 : i32
    %c0_i32_1 = arith.constant 0 : i32
    return %c0_i32, %c0_i32_0 : i32, i32
  }
}

module attributes {stable_mosaic.version = 11 : i64} {
  func.func @_gram_l1_kernel(%arg0: i32, %arg1: i32, %arg2: memref<3x1x16x16xbf16, #tpu.memory_space<vmem>>, %arg3: memref<1x1xf32, #tpu.memory_space<vmem>>, %arg4: memref<48x48xf32, #tpu.memory_space<vmem>>) attributes {dimension_semantics = [#tpu.dimension_semantics<arbitrary>, #tpu.dimension_semantics<arbitrary>], iteration_bounds = array<i64: 2, 1>, scalar_prefetch = 0 : i64, scratch_operands = 1 : i64, tpu.core_type = #tpu.core_type<tc>, window_params = [{transform_indices = @transform_0, window_bounds = array<i64: 3, 1, 16, 16>}, {pipeline_mode = #tpu.pipeline_mode<synchronous>, transform_indices = @transform_1, window_bounds = array<i64: 1, 1>}]} {
    %c0_i32 = arith.constant 0 : i32
    %0 = arith.cmpi eq, %arg0, %c0_i32 : i32
    %c0_i32_0 = arith.constant 0 : i32
    %1 = arith.cmpi eq, %arg1, %c0_i32_0 : i32
    %2 = arith.andi %0, %1 : i1
    %3 = arith.extui %2 : i1 to i32
    %c0_i32_1 = arith.constant 0 : i32
    %4 = arith.cmpi ne, %3, %c0_i32_1 : i32
    scf.if %4 {
      %cst_13 = arith.constant 0.000000e+00 : f32
      %17 = vector.broadcast %cst_13 : f32 to vector<1x1xf32>
      %c0_14 = arith.constant 0 : index
      %c0_15 = arith.constant 0 : index
      %18 = vector.load %arg3[%c0_14, %c0_15] : memref<1x1xf32, #tpu.memory_space<vmem>>, vector<1x1xf32>
      tpu.vector_store %arg3[%c0_14, %c0_15], %17 {strides = array<i32>} : memref<1x1xf32, #tpu.memory_space<vmem>>, vector<1x1xf32>,
    } else {
    }
    %c0_i32_2 = arith.constant 0 : i32
    %5 = arith.cmpi eq, %arg1, %c0_i32_2 : i32
    %6 = arith.extui %5 : i1 to i32
    %c0_i32_3 = arith.constant 0 : i32
    %7 = arith.cmpi ne, %6, %c0_i32_3 : i32
    scf.if %7 {
      %cst_13 = arith.constant 0.000000e+00 : f32
      %17 = vector.broadcast %cst_13 : f32 to vector<48x48xf32>
      %c0_14 = arith.constant 0 : index
      %c0_15 = arith.constant 0 : index
      %18 = vector.load %arg4[%c0_14, %c0_15] : memref<48x48xf32, #tpu.memory_space<vmem>>, vector<48x48xf32>
      tpu.vector_store %arg4[%c0_14, %c0_15], %17 {strides = array<i32>} : memref<48x48xf32, #tpu.memory_space<vmem>>, vector<48x48xf32>,
    } else {
    }
    %c0 = arith.constant 0 : index
    %c0_4 = arith.constant 0 : index
    %c0_5 = arith.constant 0 : index
    %c0_6 = arith.constant 0 : index
    %8 = vector.load %arg2[%c0, %c0_4, %c0_5, %c0_6] : memref<3x1x16x16xbf16, #tpu.memory_space<vmem>>, vector<3x1x16x16xbf16>
    %9 = vector.shape_cast %8 : vector<3x1x16x16xbf16> to vector<48x16xbf16>
    %c0_7 = arith.constant 0 : index
    %c0_8 = arith.constant 0 : index
    %10 = vector.load %arg4[%c0_7, %c0_8] : memref<48x48xf32, #tpu.memory_space<vmem>>, vector<48x48xf32>
    %cst = arith.constant dense<0.000000e+00> : vector<48x48xf32>
    %11 = tpu.matmul %9, %9, %cst {dimension_numbers = #tpu.dot_dimension_numbers<[1], [1], [0], [0], [0, 0, 1, 0], [], []>} : vector<48x16xbf16>, vector<48x16xbf16>, vector<48x48xf32> -> vector<48x48xf32>
    %12 = arith.addf %10, %11 : vector<48x48xf32>
    %c0_9 = arith.constant 0 : index
    %c0_10 = arith.constant 0 : index
    %13 = vector.load %arg4[%c0_9, %c0_10] : memref<48x48xf32, #tpu.memory_space<vmem>>, vector<48x48xf32>
    tpu.vector_store %arg4[%c0_9, %c0_10], %12 {strides = array<i32>} : memref<48x48xf32, #tpu.memory_space<vmem>>, vector<48x48xf32>,
    %c0_i32_11 = arith.constant 0 : i32
    %14 = arith.cmpi eq, %arg1, %c0_i32_11 : i32
    %15 = arith.extui %14 : i1 to i32
    %c0_i32_12 = arith.constant 0 : i32
    %16 = arith.cmpi ne, %15, %c0_i32_12 : i32
    scf.if %16 {
      %c0_13 = arith.constant 0 : index
      %c0_14 = arith.constant 0 : index
      %17 = vector.load %arg4[%c0_13, %c0_14] : memref<48x48xf32, #tpu.memory_space<vmem>>, vector<48x48xf32>
      %18 = vector.extract_strided_slice %17 {offsets = [0, 0], sizes = [16, 16], strides = [1, 1]} : vector<48x48xf32> to vector<16x16xf32>
      %19 = vector.extract_strided_slice %17 {offsets = [16, 16], sizes = [16, 16], strides = [1, 1]} : vector<48x48xf32> to vector<16x16xf32>
      %20 = vector.extract_strided_slice %17 {offsets = [32, 32], sizes = [16, 16], strides = [1, 1]} : vector<48x48xf32> to vector<16x16xf32>
      %c0_15 = arith.constant 0 : index
      %c0_16 = arith.constant 0 : index
      %21 = vector.load %arg3[%c0_15, %c0_16] : memref<1x1xf32, #tpu.memory_space<vmem>>, vector<1x1xf32>
      %22 = arith.subf %18, %19 : vector<16x16xf32>
      %23 = math.absf %22 : vector<16x16xf32>
      %24 = vector.shape_cast %23 : vector<16x16xf32> to vector<1x16x16xf32>
      %cst_17 = arith.constant dense<0.000000e+00> : vector<1xf32>
      %25 = vector.multi_reduction <add>, %24, %cst_17 [1, 2] : vector<1x16x16xf32> to vector<1xf32>
      %26 = vector.shape_cast %25 : vector<1xf32> to vector<1x1x1xf32>
      %27 = vector.extract %26[0, 0, 0] : f32 from vector<1x1x1xf32>
      %28 = vector.broadcast %27 : f32 to vector<1x1xf32>
      %29 = arith.subf %20, %19 : vector<16x16xf32>
      %30 = math.absf %29 : vector<16x16xf32>
      %31 = vector.shape_cast %30 : vector<16x16xf32> to vector<1x16x16xf32>
      %cst_18 = arith.constant dense<0.000000e+00> : vector<1xf32>
      %32 = vector.multi_reduction <add>, %31, %cst_18 [1, 2] : vector<1x16x16xf32> to vector<1xf32>
      %33 = vector.shape_cast %32 : vector<1xf32> to vector<1x1x1xf32>
      %34 = vector.extract %33[0, 0, 0] : f32 from vector<1x1x1xf32>
      %35 = vector.broadcast %34 : f32 to vector<1x1xf32>
      %36 = arith.addf %28, %35 : vector<1x1xf32>
      %37 = arith.addf %21, %36 : vector<1x1xf32>
      %c0_19 = arith.constant 0 : index
      %c0_20 = arith.constant 0 : index
      %38 = vector.load %arg3[%c0_19, %c0_20] : memref<1x1xf32, #tpu.memory_space<vmem>>, vector<1x1xf32>
      tpu.vector_store %arg3[%c0_19, %c0_20], %37 {strides = array<i32>} : memref<1x1xf32, #tpu.memory_space<vmem>>, vector<1x1xf32>,
    } else {
    }
    return
  }
  func.func @transform_0(%arg0: i32, %arg1: i32) -> (i32, i32, i32, i32) {
    %c0_i32 = arith.constant 0 : i32
    %c0_i32_0 = arith.constant 0 : i32
    %c0_i32_1 = arith.constant 0 : i32
    return %c0_i32, %arg0, %c0_i32_0, %arg1 : i32, i32, i32, i32
  }
  func.func @transform_1(%arg0: i32, %arg1: i32) -> (i32, i32) {
    %c0_i32 = arith.constant 0 : i32
    %c0_i32_0 = arith.constant 0 : i32
    %c0_i32_1 = arith.constant 0 : i32
    return %c0_i32, %c0_i32_0 : i32, i32
  }
}

module attributes {stable_mosaic.version = 11 : i64} {
  func.func @_gram_l1_kernel(%arg0: i32, %arg1: i32, %arg2: memref<3x1x8x64xbf16, #tpu.memory_space<vmem>>, %arg3: memref<1x1xf32, #tpu.memory_space<vmem>>, %arg4: memref<24x24xf32, #tpu.memory_space<vmem>>) attributes {dimension_semantics = [#tpu.dimension_semantics<arbitrary>, #tpu.dimension_semantics<arbitrary>], iteration_bounds = array<i64: 2, 1>, scalar_prefetch = 0 : i64, scratch_operands = 1 : i64, tpu.core_type = #tpu.core_type<tc>, window_params = [{transform_indices = @transform_0, window_bounds = array<i64: 3, 1, 8, 64>}, {pipeline_mode = #tpu.pipeline_mode<synchronous>, transform_indices = @transform_1, window_bounds = array<i64: 1, 1>}]} {
    %c0_i32 = arith.constant 0 : i32
    %0 = arith.cmpi eq, %arg0, %c0_i32 : i32
    %c0_i32_0 = arith.constant 0 : i32
    %1 = arith.cmpi eq, %arg1, %c0_i32_0 : i32
    %2 = arith.andi %0, %1 : i1
    %3 = arith.extui %2 : i1 to i32
    %c0_i32_1 = arith.constant 0 : i32
    %4 = arith.cmpi ne, %3, %c0_i32_1 : i32
    scf.if %4 {
      %cst_13 = arith.constant 0.000000e+00 : f32
      %17 = vector.broadcast %cst_13 : f32 to vector<1x1xf32>
      %c0_14 = arith.constant 0 : index
      %c0_15 = arith.constant 0 : index
      %18 = vector.load %arg3[%c0_14, %c0_15] : memref<1x1xf32, #tpu.memory_space<vmem>>, vector<1x1xf32>
      tpu.vector_store %arg3[%c0_14, %c0_15], %17 {strides = array<i32>} : memref<1x1xf32, #tpu.memory_space<vmem>>, vector<1x1xf32>,
    } else {
    }
    %c0_i32_2 = arith.constant 0 : i32
    %5 = arith.cmpi eq, %arg1, %c0_i32_2 : i32
    %6 = arith.extui %5 : i1 to i32
    %c0_i32_3 = arith.constant 0 : i32
    %7 = arith.cmpi ne, %6, %c0_i32_3 : i32
    scf.if %7 {
      %cst_13 = arith.constant 0.000000e+00 : f32
      %17 = vector.broadcast %cst_13 : f32 to vector<24x24xf32>
      %c0_14 = arith.constant 0 : index
      %c0_15 = arith.constant 0 : index
      %18 = vector.load %arg4[%c0_14, %c0_15] : memref<24x24xf32, #tpu.memory_space<vmem>>, vector<24x24xf32>
      tpu.vector_store %arg4[%c0_14, %c0_15], %17 {strides = array<i32>} : memref<24x24xf32, #tpu.memory_space<vmem>>, vector<24x24xf32>,
    } else {
    }
    %c0 = arith.constant 0 : index
    %c0_4 = arith.constant 0 : index
    %c0_5 = arith.constant 0 : index
    %c0_6 = arith.constant 0 : index
    %8 = vector.load %arg2[%c0, %c0_4, %c0_5, %c0_6] : memref<3x1x8x64xbf16, #tpu.memory_space<vmem>>, vector<3x1x8x64xbf16>
    %9 = vector.shape_cast %8 : vector<3x1x8x64xbf16> to vector<24x64xbf16>
    %c0_7 = arith.constant 0 : index
    %c0_8 = arith.constant 0 : index
    %10 = vector.load %arg4[%c0_7, %c0_8] : memref<24x24xf32, #tpu.memory_space<vmem>>, vector<24x24xf32>
    %cst = arith.constant dense<0.000000e+00> : vector<24x24xf32>
    %11 = tpu.matmul %9, %9, %cst {dimension_numbers = #tpu.dot_dimension_numbers<[1], [1], [0], [0], [0, 0, 1, 0], [], []>} : vector<24x64xbf16>, vector<24x64xbf16>, vector<24x24xf32> -> vector<24x24xf32>
    %12 = arith.addf %10, %11 : vector<24x24xf32>
    %c0_9 = arith.constant 0 : index
    %c0_10 = arith.constant 0 : index
    %13 = vector.load %arg4[%c0_9, %c0_10] : memref<24x24xf32, #tpu.memory_space<vmem>>, vector<24x24xf32>
    tpu.vector_store %arg4[%c0_9, %c0_10], %12 {strides = array<i32>} : memref<24x24xf32, #tpu.memory_space<vmem>>, vector<24x24xf32>,
    %c0_i32_11 = arith.constant 0 : i32
    %14 = arith.cmpi eq, %arg1, %c0_i32_11 : i32
    %15 = arith.extui %14 : i1 to i32
    %c0_i32_12 = arith.constant 0 : i32
    %16 = arith.cmpi ne, %15, %c0_i32_12 : i32
    scf.if %16 {
      %c0_13 = arith.constant 0 : index
      %c0_14 = arith.constant 0 : index
      %17 = vector.load %arg4[%c0_13, %c0_14] : memref<24x24xf32, #tpu.memory_space<vmem>>, vector<24x24xf32>
      %18 = vector.extract_strided_slice %17 {offsets = [0, 0], sizes = [8, 8], strides = [1, 1]} : vector<24x24xf32> to vector<8x8xf32>
      %19 = vector.extract_strided_slice %17 {offsets = [8, 8], sizes = [8, 8], strides = [1, 1]} : vector<24x24xf32> to vector<8x8xf32>
      %20 = vector.extract_strided_slice %17 {offsets = [16, 16], sizes = [8, 8], strides = [1, 1]} : vector<24x24xf32> to vector<8x8xf32>
      %c0_15 = arith.constant 0 : index
      %c0_16 = arith.constant 0 : index
      %21 = vector.load %arg3[%c0_15, %c0_16] : memref<1x1xf32, #tpu.memory_space<vmem>>, vector<1x1xf32>
      %22 = arith.subf %18, %19 : vector<8x8xf32>
      %23 = math.absf %22 : vector<8x8xf32>
      %24 = vector.shape_cast %23 : vector<8x8xf32> to vector<1x8x8xf32>
      %cst_17 = arith.constant dense<0.000000e+00> : vector<1xf32>
      %25 = vector.multi_reduction <add>, %24, %cst_17 [1, 2] : vector<1x8x8xf32> to vector<1xf32>
      %26 = vector.shape_cast %25 : vector<1xf32> to vector<1x1x1xf32>
      %27 = vector.extract %26[0, 0, 0] : f32 from vector<1x1x1xf32>
      %28 = vector.broadcast %27 : f32 to vector<1x1xf32>
      %29 = arith.subf %20, %19 : vector<8x8xf32>
      %30 = math.absf %29 : vector<8x8xf32>
      %31 = vector.shape_cast %30 : vector<8x8xf32> to vector<1x8x8xf32>
      %cst_18 = arith.constant dense<0.000000e+00> : vector<1xf32>
      %32 = vector.multi_reduction <add>, %31, %cst_18 [1, 2] : vector<1x8x8xf32> to vector<1xf32>
      %33 = vector.shape_cast %32 : vector<1xf32> to vector<1x1x1xf32>
      %34 = vector.extract %33[0, 0, 0] : f32 from vector<1x1x1xf32>
      %35 = vector.broadcast %34 : f32 to vector<1x1xf32>
      %36 = arith.addf %28, %35 : vector<1x1xf32>
      %37 = arith.addf %21, %36 : vector<1x1xf32>
      %c0_19 = arith.constant 0 : index
      %c0_20 = arith.constant 0 : index
      %38 = vector.load %arg3[%c0_19, %c0_20] : memref<1x1xf32, #tpu.memory_space<vmem>>, vector<1x1xf32>
      tpu.vector_store %arg3[%c0_19, %c0_20], %37 {strides = array<i32>} : memref<1x1xf32, #tpu.memory_space<vmem>>, vector<1x1xf32>,
    } else {
    }
    return
  }
  func.func @transform_0(%arg0: i32, %arg1: i32) -> (i32, i32, i32, i32) {
    %c0_i32 = arith.constant 0 : i32
    %c0_i32_0 = arith.constant 0 : i32
    %c0_i32_1 = arith.constant 0 : i32
    return %c0_i32, %arg0, %c0_i32_0, %arg1 : i32, i32, i32, i32
  }
  func.func @transform_1(%arg0: i32, %arg1: i32) -> (i32, i32) {
    %c0_i32 = arith.constant 0 : i32
    %c0_i32_0 = arith.constant 0 : i32
    %c0_i32_1 = arith.constant 0 : i32
    return %c0_i32, %c0_i32_0 : i32, i32
  }
}

</mosaic_0001>

<llo_original>
// kernel: _lambda_.7
$region0: #{_lambda_.7}
  #allocation0 [shape = 'u32[]', space=smem, size = 0x4, offset = 0x4, fixed_abs, tag = 'smem constant byte address 0x4 - core index']
  #allocation1 [shape = 'u32[72,128]{1,0:T(1,128)}', space=vmem, size = 0x9000, scoped, tag = 'internal scratch']
  %s0 = inlined_call_operand.vmem [shape: f32[2,4,256], index: 0, kind: input, shape index: {}]
  %s1 = inlined_call_operand.vmem [shape: f32[2,4,256], index: 1, kind: input, shape index: {}]
  %s2 = inlined_call_operand.vmem [shape: f32[2,1,256], index: 2, kind: input, shape index: {}]
  %s3 = inlined_call_operand.vmem [shape: f32[2,4,256], index: 3, kind: output, shape index: {}]
  %s4 = sld [smem:[#allocation0]]
  $region45: #{_lambda_.7} parent=0
    _
  %s6 = ssub.s32 1, %s4
  %s7 = scalar_select 0, %s6, %s4
  loop: start=0, step=1, limit=4
  $region2: #{_lambda_.7} parent=0 // loop_pre_header
    _
  $region3: #{_lambda_.7} parent=0 // loop_header
    %s9 = sphi 0, %s13
    %p10 = scmp.ge.s32.totalorder %s9, 4
    %s16 = sphi 0, %s28
    %s17 = sphi 0, %s24
    %s18 = sphi 0, %s16
    %s19 = sphi 0, %s17
    %s20 = sphi 0, %s18
    %s21 = sphi 0, %s19
    %s33 = sphi 0, %s35
    %s36 = sphi 0, %s33
    %s37 = sphi 0, %s36
    %s53 = sphi 0, %s37
    %s61 = sphi 0, %s63
    %s64 = sphi 0, %s61
    %s65 = sphi 0, %s64
    %s81 = sphi 0, %s65
    %s89 = sphi 0, %s91
    %s92 = sphi 0, %s89
    %s93 = sphi 0, %s92
    %s109 = sphi 0, %s93
    %s117 = sphi 0, %s119
    %s120 = sphi 0, %s117
    %s121 = sphi 0, %s120
    %s137 = sphi 0, %s121
  $region4: #{_lambda_.7} parent=0 // loop_header_branch
    %12 = sbr.rel (%p10) target = $region8
  $region5: #{_lambda_.7} parent=0 // loop_body
    %s14 = ssub.s32 %s9, 1
    %s15 = ssub.s32 %s9, 2
    %s22 = sadd.s32 1, %s17
    %p23 = scmp.ge.s32.totalorder %s22, 1
    %s24 = scalar_select %p23, 0, %s22
    %s25 = sadd.s32 1, %s16
    %s26 = scalar_select %p23, %s25, %s16
    %p27 = scmp.ge.s32.totalorder %s26, 2
    %s28 = scalar_select %p27, 0, %s26
    %s29 = ssub.s32 %s16, %s28
    %s30 = ssub.s32 %s17, %s24
    %s31 = sor.u32 %s29, %s30
    %p32 = scmp.eq.s32.totalorder %s31, 0
    %s34 = sadd.s32 %s33, 1
    %s35 = scalar_select %p32, %s33, %s34
    %p38 = pneg %p32
    %p39 = scmp.eq.s32.totalorder %s9, 1
    %p40 = por %p38, %p39
    %p41 = scmp.ne.s32.totalorder %s33, %s36
    %p42 = scmp.eq.s32.totalorder %s9, 0
    %p43 = por %p41, %p42
    %p44 = scmp.ne.s32.totalorder %s33, %s36
    %p45 = scmp.eq.s32.totalorder %s14, 1
    %p46 = por %p44, %p45
    %p47 = scmp.ne.s32.totalorder %s36, %s37
    %p48 = scmp.eq.s32.totalorder %s14, 0
    %p49 = por %p47, %p48
    %p50 = scmp.ne.s32.totalorder %s36, %s37
    %p51 = scmp.eq.s32.totalorder %s15, 1
    %p52 = por %p50, %p51
    %p54 = scmp.ne.s32.totalorder %s37, %s53
    %p55 = scmp.eq.s32.totalorder %s15, 0
    %p56 = por %p54, %p55
    %s57 = ssub.s32 %s16, %s28
    %s58 = ssub.s32 %s17, %s24
    %s59 = sor.u32 %s57, %s58
    %p60 = scmp.eq.s32.totalorder %s59, 0
    %s62 = sadd.s32 %s61, 1
    %s63 = scalar_select %p60, %s61, %s62
    %p66 = pneg %p60
    %p67 = scmp.eq.s32.totalorder %s9, 1
    %p68 = por %p66, %p67
    %p69 = scmp.ne.s32.totalorder %s61, %s64
    %p70 = scmp.eq.s32.totalorder %s9, 0
    %p71 = por %p69, %p70
    %p72 = scmp.ne.s32.totalorder %s61, %s64
    %p73 = scmp.eq.s32.totalorder %s14, 1
    %p74 = por %p72, %p73
    %p75 = scmp.ne.s32.totalorder %s64, %s65
    %p76 = scmp.eq.s32.totalorder %s14, 0
    %p77 = por %p75, %p76
    %p78 = scmp.ne.s32.totalorder %s64, %s65
    %p79 = scmp.eq.s32.totalorder %s15, 1
    %p80 = por %p78, %p79
    %p82 = scmp.ne.s32.totalorder %s65, %s81
    %p83 = scmp.eq.s32.totalorder %s15, 0
    %p84 = por %p82, %p83
    %s85 = ssub.s32 %s16, %s28
    %s86 = ssub.s32 %s17, %s24
    %s87 = sor.u32 %s85, %s86
    %p88 = scmp.eq.s32.totalorder %s87, 0
    %s90 = sadd.s32 %s89, 1
    %s91 = scalar_select %p88, %s89, %s90
    %p94 = pneg %p88
    %p95 = scmp.eq.s32.totalorder %s9, 1
    %p96 = por %p94, %p95
    %p97 = scmp.ne.s32.totalorder %s89, %s92
    %p98 = scmp.eq.s32.totalorder %s9, 0
    %p99 = por %p97, %p98
    %p100 = scmp.ne.s32.totalorder %s89, %s92
    %p101 = scmp.eq.s32.totalorder %s14, 1
    %p102 = por %p100, %p101
    %p103 = scmp.ne.s32.totalorder %s92, %s93
    %p104 = scmp.eq.s32.totalorder %s14, 0
    %p105 = por %p103, %p104
    %p106 = scmp.ne.s32.totalorder %s92, %s93
    %p107 = scmp.eq.s32.totalorder %s15, 1
    %p108 = por %p106, %p107
    %p110 = scmp.ne.s32.totalorder %s93, %s109
    %p111 = scmp.eq.s32.totalorder %s15, 0
    %p112 = por %p110, %p111
    %s113 = ssub.s32 %s16, %s28
    %s114 = ssub.s32 %s17, %s24
    %s115 = sor.u32 %s113, %s114
    %p116 = scmp.eq.s32.totalorder %s115, 0
    %s118 = sadd.s32 %s117, 1
    %s119 = scalar_select %p116, %s117, %s118
    %p122 = pneg %p116
    %p123 = scmp.eq.s32.totalorder %s9, 1
    %p124 = por %p122, %p123
    %p125 = scmp.ne.s32.totalorder %s117, %s120
    %p126 = scmp.eq.s32.totalorder %s9, 0
    %p127 = por %p125, %p126
    %p128 = scmp.ne.s32.totalorder %s117, %s120
    %p129 = scmp.eq.s32.totalorder %s14, 1
    %p130 = por %p128, %p129
    %p131 = scmp.ne.s32.totalorder %s120, %s121
    %p132 = scmp.eq.s32.totalorder %s14, 0
    %p133 = por %p131, %p132
    %p134 = scmp.ne.s32.totalorder %s120, %s121
    %p135 = scmp.eq.s32.totalorder %s15, 1
    %p136 = por %p134, %p135
    %p138 = scmp.ne.s32.totalorder %s121, %s137
    %p139 = scmp.eq.s32.totalorder %s15, 0
    %p140 = por %p138, %p139
    %p141 = scmp.le.s32.totalorder 1, %s9
    %p142 = scmp.lt.s32.totalorder %s9, 3
    %p143 = pnand %p141, %p142
    %p144 = pneg %p143
    // Predicated region
    $region9: #{_lambda_.7} parent=5 // pred_check
      _
    $region10: #{_lambda_.7} parent=5 // pred_check_branch
      %146 = sbr.rel (%p143) target = $region12
    $region11: #{_lambda_.7} parent=5 // pred_region
      %s147 = ssub.s32 %s9, 1
    $region12: #{_lambda_.7} parent=5 // pred_fallthru
      _
    %p148 = scmp.lt.s32.totalorder %s9, 2
    // Predicated region
    $region13: #{_lambda_.7} parent=5 // pred_check
      %p149 = pneg %p148
    $region14: #{_lambda_.7} parent=5 // pred_check_branch
      %151 = sbr.rel (%p149) target = $region16
    $region15: #{_lambda_.7} parent=5 // pred_region
      // Predicated region
      $region17: #{_lambda_.7} parent=15 // pred_check
        %p152 = pneg %p43
      $region18: #{_lambda_.7} parent=15 // pred_check_branch
        %154 = sbr.rel (%p152) target = $region20
      $region19: #{_lambda_.7} parent=15 // pred_region
        %s155 = smul.u32 2, %s17
        %p156 = scmp.lt.s32.totalorder %s16, 1
        %s157 = scalar_select %p156, %s16, 1
        %p158 = scmp.lt.s32.totalorder %s155, 1
        %s159 = scalar_select %p158, %s155, 1
        %s160 = smul.addr %s157, 2
        %s161 = sadd.s32 %s159, %s160
        %s162 = smul.addr %s161, 4
        %s163 = scalar_lea.vmem %s0, %s162
        %s164 = smul.u32 2, %s17
      $region20: #{_lambda_.7} parent=15 // pred_fallthru
        _
      // Predicated region
      $region21: #{_lambda_.7} parent=15 // pred_check
        %p165 = pneg %p71
      $region22: #{_lambda_.7} parent=15 // pred_check_branch
        %167 = sbr.rel (%p165) target = $region24
      $region23: #{_lambda_.7} parent=15 // pred_region
        %s168 = smul.u32 2, %s17
        %p169 = scmp.lt.s32.totalorder %s16, 1
        %s170 = scalar_select %p169, %s16, 1
        %p171 = scmp.lt.s32.totalorder %s168, 1
        %s172 = scalar_select %p171, %s168, 1
        %s173 = smul.addr %s170, 2
        %s174 = sadd.s32 %s172, %s173
        %s175 = smul.addr %s174, 4
        %s176 = scalar_lea.vmem %s1, %s175
        %s177 = smul.u32 2, %s17
      $region24: #{_lambda_.7} parent=15 // pred_fallthru
        _
      // Predicated region
      $region25: #{_lambda_.7} parent=15 // pred_check
        %p178 = pneg %p99
      $region26: #{_lambda_.7} parent=15 // pred_check_branch
        %180 = sbr.rel (%p178) target = $region28
      $region27: #{_lambda_.7} parent=15 // pred_region
        %s181 = smul.u32 2, %s17
        %p182 = scmp.lt.s32.totalorder %s16, 1
        %s183 = scalar_select %p182, %s16, 1
        %p184 = scmp.lt.s32.totalorder %s181, 1
        %s185 = scalar_select %p184, %s181, 1
        %s186 = smul.addr %s183, 2
        %s187 = sadd.s32 %s185, %s186
        %s188 = scalar_lea.vmem %s2, %s187
        %s189 = smul.u32 2, %s17
      $region28: #{_lambda_.7} parent=15 // pred_fallthru
        _
    $region16: #{_lambda_.7} parent=5 // pred_fallthru
      _
    %p190 = scmp.le.s32.totalorder 1, %s9
    %p191 = scmp.lt.s32.totalorder %s9, 3
    %p192 = pnand %p190, %p191
    %p193 = pneg %p192
    // Predicated region
    $region29: #{_lambda_.7} parent=5 // pred_check
      _
    $region30: #{_lambda_.7} parent=5 // pred_check_branch
      %195 = sbr.rel (%p192) target = $region32
    $region31: #{_lambda_.7} parent=5 // pred_region
      %s196 = ssub.s32 %s9, 1
      %s197 = smul.u32 2, %s19
      %p198 = scmp.lt.s32.totalorder %s18, 1
      %s199 = scalar_select %p198, %s18, 1
      %p200 = scmp.lt.s32.totalorder %s197, 1
      %s201 = scalar_select %p200, %s197, 1
      %s202 = smul.addr %s199, 2
      %s203 = sadd.s32 %s201, %s202
      %s204 = smul.addr %s203, 4
      %s205 = scalar_lea.vmem %s0, %s204
      %p206 = pneg %p49
      %p207 = pneg %p46
      %s208 = smul.u32 2, %s19
      %p209 = scmp.lt.s32.totalorder %s18, 1
      %s210 = scalar_select %p209, %s18, 1
      %p211 = scmp.lt.s32.totalorder %s208, 1
      %s212 = scalar_select %p211, %s208, 1
      %s213 = smul.addr %s210, 2
      %s214 = sadd.s32 %s212, %s213
      %s215 = smul.addr %s214, 4
      %s216 = scalar_lea.vmem %s1, %s215
      %p217 = pneg %p77
      %p218 = pneg %p74
      %s219 = smul.u32 2, %s19
      %p220 = scmp.lt.s32.totalorder %s18, 1
      %s221 = scalar_select %p220, %s18, 1
      %p222 = scmp.lt.s32.totalorder %s219, 1
      %s223 = scalar_select %p222, %s219, 1
      %s224 = smul.addr %s221, 2
      %s225 = sadd.s32 %s223, %s224
      %s226 = scalar_lea.vmem %s2, %s225
      %p227 = pneg %p105
      %p228 = pneg %p102
      %p229 = pneg %p133
      %p230 = pneg %p130
      %s231 = smul.u32 2, %s19
      %p232 = scmp.lt.s32.totalorder %s18, 1
      %s233 = scalar_select %p232, %s18, 1
      %p234 = scmp.lt.s32.totalorder %s231, 1
      %s235 = scalar_select %p234, %s231, 1
      %s236 = smul.addr %s233, 2
      %s237 = sadd.s32 %s235, %s236
      %s238 = smul.addr %s237, 4
      %s239 = scalar_lea.vmem %s3, %s238
      %s240 = smul.u32 2, %s19
      %p241 = scmp.lt.s32.totalorder %s18, 1
      %s242 = scalar_select %p241, %s18, 1
      %p243 = scmp.lt.s32.totalorder %s240, 1
      %s244 = scalar_select %p243, %s240, 1
      %s245 = smul.addr %s242, 2
      %s246 = sadd.s32 %s244, %s245
      %s247 = smul.addr %s246, 4
      %s248 = scalar_lea.vmem %s0, %s247
      %s249 = smul.u32 2, %s19
      %s250 = smul.u32 2, %s19
      %p251 = scmp.lt.s32.totalorder %s18, 1
      %s252 = scalar_select %p251, %s18, 1
      %p253 = scmp.lt.s32.totalorder %s250, 1
      %s254 = scalar_select %p253, %s250, 1
      %s255 = smul.addr %s252, 2
      %s256 = sadd.s32 %s254, %s255
      %s257 = smul.addr %s256, 4
      %s258 = scalar_lea.vmem %s1, %s257
      %s259 = smul.u32 2, %s19
      %s260 = smul.u32 2, %s19
      %p261 = scmp.lt.s32.totalorder %s18, 1
      %s262 = scalar_select %p261, %s18, 1
      %p263 = scmp.lt.s32.totalorder %s260, 1
      %s264 = scalar_select %p263, %s260, 1
      %s265 = smul.addr %s262, 2
      %s266 = sadd.s32 %s264, %s265
      %s267 = scalar_lea.vmem %s2, %s266
      %s268 = smul.u32 2, %s19
      %s269 = smul.u32 2, %s19
      %p270 = scmp.lt.s32.totalorder %s18, 1
      %s271 = scalar_select %p270, %s18, 1
      %p272 = scmp.lt.s32.totalorder %s269, 1
      %s273 = scalar_select %p272, %s269, 1
      %s274 = smul.addr %s271, 2
      %s275 = sadd.s32 %s273, %s274
      %s276 = smul.addr %s275, 4
      %s277 = scalar_lea.vmem %s3, %s276
      %s278 = smul.u32 2, %s19
      %v279 = vld [vmem:[%s267] sm:$0x3]
      %v280 = vld [vmem:[%s248] sm:$0xff]
      %v281 = vsub.f32 1.0, %v279
      %v283 = vperm.slane %v281, 0
      %v284 = vperm.slane %v281, 1
      %v285 = vrot.slane %v284, 4
      %vm286 = vcmask 1043456
      %v287 = vsel %vm286, %v283, %v285
      %v289 = vmul.f32 %v280, %v287
      %v290 = vld [vmem:[%s258] sm:$0xff]
      %v292 = vperm.slane %v279, 0
      %v293 = vperm.slane %v279, 1
      %v294 = vrot.slane %v293, 4
      %v295 = vsel %vm286, %v292, %v294
      %v297 = vmul.f32 %v290, %v295
      %v298 = vadd.f32 %v289, %v297
      %299 = vst [vmem:[%s277] sm:$0xff] %v298
      %s300 = smul.u32 2, %s19
      %p301 = scmp.lt.s32.totalorder %s18, 1
      %s302 = scalar_select %p301, %s18, 1
      %p303 = scmp.lt.s32.totalorder %s300, 1
      %s304 = scalar_select %p303, %s300, 1
      %s305 = smul.addr %s302, 2
      %s306 = sadd.s32 %s304, %s305
      %s307 = smul.addr %s306, 4
      %s308 = scalar_lea.vmem %s3, %s307
      // Predicated region
      $region33: #{_lambda_.7} parent=31 // pred_check
        %p309 = pneg %p130
      $region34: #{_lambda_.7} parent=31 // pred_check_branch
        %311 = sbr.rel (%p309) target = $region36
      $region35: #{_lambda_.7} parent=31 // pred_region
        %s312 = smul.u32 2, %s19
      $region36: #{_lambda_.7} parent=31 // pred_fallthru
        _
    $region32: #{_lambda_.7} parent=5 // pred_fallthru
      _
    %p313 = scmp.le.s32.totalorder 2, %s9
    // Predicated region
    $region37: #{_lambda_.7} parent=5 // pred_check
      %p314 = pneg %p313
    $region38: #{_lambda_.7} parent=5 // pred_check_branch
      %316 = sbr.rel (%p314) target = $region40
    $region39: #{_lambda_.7} parent=5 // pred_region
      %s317 = ssub.s32 %s9, 2
      // Predicated region
      $region41: #{_lambda_.7} parent=39 // pred_check
        %p318 = pneg %p136
      $region42: #{_lambda_.7} parent=39 // pred_check_branch
        %320 = sbr.rel (%p318) target = $region44
      $region43: #{_lambda_.7} parent=39 // pred_region
        %s321 = smul.u32 2, %s21
        %p322 = scmp.lt.s32.totalorder %s20, 1
        %s323 = scalar_select %p322, %s20, 1
        %p324 = scmp.lt.s32.totalorder %s321, 1
        %s325 = scalar_select %p324, %s321, 1
        %s326 = smul.addr %s323, 2
        %s327 = sadd.s32 %s325, %s326
        %s328 = smul.addr %s327, 4
        %s329 = scalar_lea.vmem %s3, %s328
      $region44: #{_lambda_.7} parent=39 // pred_fallthru
        _
    $region40: #{_lambda_.7} parent=5 // pred_fallthru
      _
  $region6: #{_lambda_.7} parent=0 // loop_footer
    %s13 = sadd.s32 1, %s9
  $region7: #{_lambda_.7} parent=0 // loop_footer_branch
    %8 = sbr.rel target = $region3
  $region8: #{_lambda_.7} parent=0 // loop_exit
    _

// kernel: _lambda_.8
$region0: #{_lambda_.8}
  #allocation0 [shape = 'u32[]', space=smem, size = 0x4, offset = 0x4, fixed_abs, tag = 'smem constant byte address 0x4 - core index']
  #allocation1 [shape = 'u32[72,128]{1,0:T(1,128)}', space=vmem, size = 0x9000, scoped, tag = 'internal scratch']
  %s0 = inlined_call_operand.vmem [shape: bf16[6,36,64], index: 0, kind: input, shape index: {}]
  %s1 = inlined_call_operand.vmem [shape: bf16[8,36], index: 1, kind: input, shape index: {}]
  %s2 = inlined_call_operand.vmem [shape: f32[8,1], index: 2, kind: input, shape index: {}]
  %s3 = inlined_call_operand.vmem [shape: bf16[6,8,64], index: 3, kind: output, shape index: {}]
  %s4 = sld [smem:[#allocation0]]
  $region45: #{_lambda_.8} parent=0
    _
  %s6 = ssub.s32 1, %s4
  %s7 = scalar_select 0, %s6, %s4
  loop: start=0, step=1, limit=8
  $region2: #{_lambda_.8} parent=0 // loop_pre_header
    _
  $region3: #{_lambda_.8} parent=0 // loop_header
    %s9 = sphi 0, %s13
    %p10 = scmp.ge.s32.totalorder %s9, 8
    %s16 = sphi 0, %s28
    %s17 = sphi 0, %s24
    %s18 = sphi 0, %s16
    %s19 = sphi 0, %s17
    %s20 = sphi 0, %s18
    %s21 = sphi 0, %s19
    %s33 = sphi 0, %s35
    %s36 = sphi 0, %s33
    %s37 = sphi 0, %s36
    %s53 = sphi 0, %s37
    %s57 = sphi 0, %s57
    %s59 = sphi 0, %s57
    %s60 = sphi 0, %s59
    %s74 = sphi 0, %s60
    %s78 = sphi 0, %s78
    %s80 = sphi 0, %s78
    %s81 = sphi 0, %s80
    %s95 = sphi 0, %s81
    %s103 = sphi 0, %s105
    %s106 = sphi 0, %s103
    %s107 = sphi 0, %s106
    %s123 = sphi 0, %s107
  $region4: #{_lambda_.8} parent=0 // loop_header_branch
    %12 = sbr.rel (%p10) target = $region8
  $region5: #{_lambda_.8} parent=0 // loop_body
    %s14 = ssub.s32 %s9, 1
    %s15 = ssub.s32 %s9, 2
    %s22 = sadd.s32 1, %s17
    %p23 = scmp.ge.s32.totalorder %s22, 1
    %s24 = scalar_select %p23, 0, %s22
    %s25 = sadd.s32 1, %s16
    %s26 = scalar_select %p23, %s25, %s16
    %p27 = scmp.ge.s32.totalorder %s26, 6
    %s28 = scalar_select %p27, 0, %s26
    %s29 = ssub.s32 %s16, %s28
    %s30 = ssub.s32 %s17, %s24
    %s31 = sor.u32 %s29, %s30
    %p32 = scmp.eq.s32.totalorder %s31, 0
    %s34 = sadd.s32 %s33, 1
    %s35 = scalar_select %p32, %s33, %s34
    %p38 = pneg %p32
    %p39 = scmp.eq.s32.totalorder %s9, 5
    %p40 = por %p38, %p39
    %p41 = scmp.ne.s32.totalorder %s33, %s36
    %p42 = scmp.eq.s32.totalorder %s9, 0
    %p43 = por %p41, %p42
    %p44 = scmp.ne.s32.totalorder %s33, %s36
    %p45 = scmp.eq.s32.totalorder %s14, 5
    %p46 = por %p44, %p45
    %p47 = scmp.ne.s32.totalorder %s36, %s37
    %p48 = scmp.eq.s32.totalorder %s14, 0
    %p49 = por %p47, %p48
    %p50 = scmp.ne.s32.totalorder %s36, %s37
    %p51 = scmp.eq.s32.totalorder %s15, 5
    %p52 = por %p50, %p51
    %p54 = scmp.ne.s32.totalorder %s37, %s53
    %p55 = scmp.eq.s32.totalorder %s15, 0
    %p56 = por %p54, %p55
    %s58 = sadd.s32 %s57, 1
    %p61 = scmp.eq.s32.totalorder %s9, 5
    %p62 = scmp.ne.s32.totalorder %s57, %s59
    %p63 = scmp.eq.s32.totalorder %s9, 0
    %p64 = por %p62, %p63
    %p65 = scmp.ne.s32.totalorder %s57, %s59
    %p66 = scmp.eq.s32.totalorder %s14, 5
    %p67 = por %p65, %p66
    %p68 = scmp.ne.s32.totalorder %s59, %s60
    %p69 = scmp.eq.s32.totalorder %s14, 0
    %p70 = por %p68, %p69
    %p71 = scmp.ne.s32.totalorder %s59, %s60
    %p72 = scmp.eq.s32.totalorder %s15, 5
    %p73 = por %p71, %p72
    %p75 = scmp.ne.s32.totalorder %s60, %s74
    %p76 = scmp.eq.s32.totalorder %s15, 0
    %p77 = por %p75, %p76
    %s79 = sadd.s32 %s78, 1
    %p82 = scmp.eq.s32.totalorder %s9, 5
    %p83 = scmp.ne.s32.totalorder %s78, %s80
    %p84 = scmp.eq.s32.totalorder %s9, 0
    %p85 = por %p83, %p84
    %p86 = scmp.ne.s32.totalorder %s78, %s80
    %p87 = scmp.eq.s32.totalorder %s14, 5
    %p88 = por %p86, %p87
    %p89 = scmp.ne.s32.totalorder %s80, %s81
    %p90 = scmp.eq.s32.totalorder %s14, 0
    %p91 = por %p89, %p90
    %p92 = scmp.ne.s32.totalorder %s80, %s81
    %p93 = scmp.eq.s32.totalorder %s15, 5
    %p94 = por %p92, %p93
    %p96 = scmp.ne.s32.totalorder %s81, %s95
    %p97 = scmp.eq.s32.totalorder %s15, 0
    %p98 = por %p96, %p97
    %s99 = ssub.s32 %s16, %s28
    %s100 = ssub.s32 %s17, %s24
    %s101 = sor.u32 %s99, %s100
    %p102 = scmp.eq.s32.totalorder %s101, 0
    %s104 = sadd.s32 %s103, 1
    %s105 = scalar_select %p102, %s103, %s104
    %p108 = pneg %p102
    %p109 = scmp.eq.s32.totalorder %s9, 5
    %p110 = por %p108, %p109
    %p111 = scmp.ne.s32.totalorder %s103, %s106
    %p112 = scmp.eq.s32.totalorder %s9, 0
    %p113 = por %p111, %p112
    %p114 = scmp.ne.s32.totalorder %s103, %s106
    %p115 = scmp.eq.s32.totalorder %s14, 5
    %p116 = por %p114, %p115
    %p117 = scmp.ne.s32.totalorder %s106, %s107
    %p118 = scmp.eq.s32.totalorder %s14, 0
    %p119 = por %p117, %p118
    %p120 = scmp.ne.s32.totalorder %s106, %s107
    %p121 = scmp.eq.s32.totalorder %s15, 5
    %p122 = por %p120, %p121
    %p124 = scmp.ne.s32.totalorder %s107, %s123
    %p125 = scmp.eq.s32.totalorder %s15, 0
    %p126 = por %p124, %p125
    %p127 = scmp.le.s32.totalorder 1, %s9
    %p128 = scmp.lt.s32.totalorder %s9, 7
    %p129 = pnand %p127, %p128
    %p130 = pneg %p129
    // Predicated region
    $region9: #{_lambda_.8} parent=5 // pred_check
      _
    $region10: #{_lambda_.8} parent=5 // pred_check_branch
      %132 = sbr.rel (%p129) target = $region12
    $region11: #{_lambda_.8} parent=5 // pred_region
      %s133 = ssub.s32 %s9, 1
      // Predicated region
      $region13: #{_lambda_.8} parent=11 // pred_check
        %p134 = pneg %p70
      $region14: #{_lambda_.8} parent=11 // pred_check_branch
        %136 = sbr.rel (%p134) target = $region16
      $region15: #{_lambda_.8} parent=11 // pred_region
        _
      $region16: #{_lambda_.8} parent=11 // pred_fallthru
        _
      // Predicated region
      $region17: #{_lambda_.8} parent=11 // pred_check
        %p137 = pneg %p91
      $region18: #{_lambda_.8} parent=11 // pred_check_branch
        %139 = sbr.rel (%p137) target = $region20
      $region19: #{_lambda_.8} parent=11 // pred_region
        _
      $region20: #{_lambda_.8} parent=11 // pred_fallthru
        _
    $region12: #{_lambda_.8} parent=5 // pred_fallthru
      _
    %p140 = scmp.lt.s32.totalorder %s9, 6
    // Predicated region
    $region21: #{_lambda_.8} parent=5 // pred_check
      %p141 = pneg %p140
    $region22: #{_lambda_.8} parent=5 // pred_check_branch
      %143 = sbr.rel (%p141) target = $region24
    $region23: #{_lambda_.8} parent=5 // pred_region
      // Predicated region
      $region25: #{_lambda_.8} parent=23 // pred_check
        %p144 = pneg %p43
      $region26: #{_lambda_.8} parent=23 // pred_check_branch
        %146 = sbr.rel (%p144) target = $region28
      $region27: #{_lambda_.8} parent=23 // pred_region
        %p147 = scmp.lt.s32.totalorder %s16, 5
        %s148 = scalar_select %p147, %s16, 5
        %p149 = scmp.lt.s32.totalorder %s17, 0
        %s150 = scalar_select %p149, %s17, 0
        %s151 = smul.addr %s148, 5
        %s152 = sadd.s32 %s150, %s151
        %s153 = smul.addr %s152, 4
        %s154 = scalar_lea.vmem %s0, %s153
      $region28: #{_lambda_.8} parent=23 // pred_fallthru
        _
    $region24: #{_lambda_.8} parent=5 // pred_fallthru
      _
    %p155 = scmp.le.s32.totalorder 1, %s9
    %p156 = scmp.lt.s32.totalorder %s9, 7
    %p157 = pnand %p155, %p156
    %p158 = pneg %p157
    // Predicated region
    $region29: #{_lambda_.8} parent=5 // pred_check
      _
    $region30: #{_lambda_.8} parent=5 // pred_check_branch
      %160 = sbr.rel (%p157) target = $region32
    $region31: #{_lambda_.8} parent=5 // pred_region
      %s161 = ssub.s32 %s9, 1
      %p162 = scmp.lt.s32.totalorder %s18, 5
      %s163 = scalar_select %p162, %s18, 5
      %p164 = scmp.lt.s32.totalorder %s19, 0
      %s165 = scalar_select %p164, %s19, 0
      %s166 = smul.addr %s163, 5
      %s167 = sadd.s32 %s165, %s166
      %s168 = smul.addr %s167, 4
      %s169 = scalar_lea.vmem %s0, %s168
      %p170 = pneg %p49
      %p171 = pneg %p46
      %p172 = pneg %p70
      %p173 = pneg %p67
      %p174 = pneg %p91
      %p175 = pneg %p88
      %p176 = pneg %p119
      %p177 = pneg %p116
      %p178 = scmp.lt.s32.totalorder %s18, 5
      %s179 = scalar_select %p178, %s18, 5
      %p180 = scmp.lt.s32.totalorder %s19, 0
      %s181 = scalar_select %p180, %s19, 0
      %s182 = sadd.s32 %s181, %s179
      %s183 = smul.addr %s182, 4
      %s184 = scalar_lea.vmem %s3, %s183
      %p185 = scmp.lt.s32.totalorder %s18, 5
      %s186 = scalar_select %p185, %s18, 5
      %p187 = scmp.lt.s32.totalorder %s19, 0
      %s188 = scalar_select %p187, %s19, 0
      %s189 = smul.addr %s186, 5
      %s190 = sadd.s32 %s188, %s189
      %s191 = smul.addr %s190, 4
      %s192 = scalar_lea.vmem %s0, %s191
      %p193 = scmp.lt.s32.totalorder %s18, 5
      %s194 = scalar_select %p193, %s18, 5
      %p195 = scmp.lt.s32.totalorder %s19, 0
      %s196 = scalar_select %p195, %s19, 0
      %s197 = sadd.s32 %s196, %s194
      %s198 = smul.addr %s197, 4
      %s199 = scalar_lea.vmem %s3, %s198
      %v201 = vld [vmem:[%s192] sm:$0xf]
      %v202 = vld [vmem:[%s192 + $0x4] sm:$0xf]
      %v203 = vld [vmem:[%s192 + $0x8] sm:$0xf]
      %v204 = vld [vmem:[%s192 + $0xc] sm:$0xf]
      %v205 = vld [vmem:[%s192 + $0x10] sm:$0x3]
      %v206 = vld [vmem:[%s1] sm:$0xf]
      %v207 = vld [vmem:[%s2] sm:$0xff]
      %209 = vset.pattern.permute.xlu0 0
      %210 = vperm.xlu0 %209, %v207
      %v211 = vpop.permute.xlu0 %210
      %v218 = vunpack.c.l.b16 %v201
      %v219 = vunpack.c.l.b16 %v202
      %v220 = vunpack.c.l.b16 %v203
      %v221 = vunpack.c.l.b16 %v204
      %v222 = vunpack.c.l.b16 %v205
      %v223 = vpack.c.b16 %v219, %v218
      %v224 = vpack.c.b16 %v221, %v220
      %v225 = vpack.c.b16 %v222, %v222
      %vm228 = vcmask 293888
      %v230 = vsel %vm228, %v206, 0
      %vm232 = vcmask 1041408
      %v234 = vsel %vm232, %v225, 0
      %236 = vmatpush.bf16.msra.mxu0 0
      %237 = vmatpush.bf16.msra.mxu0 0
      %238 = vmatpush.bf16.msra.mxu0 0
      %239 = vmatpush.bf16.msra.mxu0 0
      %240 = vmatpush.bf16.msra.mxu0 0
      %241 = vmatpush.bf16.msra.mxu0 %v234
      %242 = vmatpush.bf16.msra.mxu0 %v224
      %243 = vmatpush.bf16.msra.mxu0 %v223
      %244 = vmatmul.bf16.gmra.mxu0 %v230
      %v245 = vpop.f32.mrf.mxu0
      %v246 = vadd.f32 %v211, %v245
      %v247 = vpop.f32.mrf.mxu0
      %248 = vdwg.mxu0
      %v249 = vmax.f32 %v246, 0.0
      %v250 = vpack.c.bf16 %v249, %v249
      %vm251 = vcmask 519168
      %252 = vst.msk [vmem:[%s199] sm:$0xf] %vm251, %v250
      %p253 = scmp.lt.s32.totalorder %s18, 5
      %s254 = scalar_select %p253, %s18, 5
      %p255 = scmp.lt.s32.totalorder %s19, 0
      %s256 = scalar_select %p255, %s19, 0
      %s257 = sadd.s32 %s256, %s254
      %s258 = smul.addr %s257, 4
      %s259 = scalar_lea.vmem %s3, %s258
      // Predicated region
      $region33: #{_lambda_.8} parent=31 // pred_check
        %p260 = pneg %p116
      $region34: #{_lambda_.8} parent=31 // pred_check_branch
        %262 = sbr.rel (%p260) target = $region36
      $region35: #{_lambda_.8} parent=31 // pred_region
        _
      $region36: #{_lambda_.8} parent=31 // pred_fallthru
        _
    $region32: #{_lambda_.8} parent=5 // pred_fallthru
      _
    %p263 = scmp.le.s32.totalorder 2, %s9
    // Predicated region
    $region37: #{_lambda_.8} parent=5 // pred_check
      %p264 = pneg %p263
    $region38: #{_lambda_.8} parent=5 // pred_check_branch
      %266 = sbr.rel (%p264) target = $region40
    $region39: #{_lambda_.8} parent=5 // pred_region
      %s267 = ssub.s32 %s9, 2
      // Predicated region
      $region41: #{_lambda_.8} parent=39 // pred_check
        %p268 = pneg %p122
      $region42: #{_lambda_.8} parent=39 // pred_check_branch
        %270 = sbr.rel (%p268) target = $region44
      $region43: #{_lambda_.8} parent=39 // pred_region
        %p271 = scmp.lt.s32.totalorder %s20, 5
        %s272 = scalar_select %p271, %s20, 5
        %p273 = scmp.lt.s32.totalorder %s21, 0
        %s274 = scalar_select %p273, %s21, 0
        %s275 = sadd.s32 %s274, %s272
        %s276 = smul.addr %s275, 4
        %s277 = scalar_lea.vmem %s3, %s276
      $region44: #{_lambda_.8} parent=39 // pred_fallthru
        _
    $region40: #{_lambda_.8} parent=5 // pred_fallthru
      _
  $region6: #{_lambda_.8} parent=0 // loop_footer
    %s13 = sadd.s32 1, %s9
  $region7: #{_lambda_.8} parent=0 // loop_footer_branch
    %8 = sbr.rel target = $region3
  $region8: #{_lambda_.8} parent=0 // loop_exit
    _

// kernel: _lambda_.9
$region0: #{_lambda_.9}
  #allocation0 [shape = 'u32[]', space=smem, size = 0x4, offset = 0x4, fixed_abs, tag = 'smem constant byte address 0x4 - core index']
  #allocation1 [shape = 'u32[72,128]{1,0:T(1,128)}', space=vmem, size = 0x9000, scoped, tag = 'internal scratch']
  %s0 = inlined_call_operand.vmem [shape: bf16[6,72,16], index: 0, kind: input, shape index: {}]
  %s1 = inlined_call_operand.vmem [shape: bf16[16,72], index: 1, kind: input, shape index: {}]
  %s2 = inlined_call_operand.vmem [shape: f32[16,1], index: 2, kind: input, shape index: {}]
  %s3 = inlined_call_operand.vmem [shape: bf16[6,16,16], index: 3, kind: output, shape index: {}]
  %s4 = sld [smem:[#allocation0]]
  $region45: #{_lambda_.9} parent=0
    _
  %s6 = ssub.s32 1, %s4
  %s7 = scalar_select 0, %s6, %s4
  loop: start=0, step=1, limit=8
  $region2: #{_lambda_.9} parent=0 // loop_pre_header
    _
  $region3: #{_lambda_.9} parent=0 // loop_header
    %s9 = sphi 0, %s13
    %p10 = scmp.ge.s32.totalorder %s9, 8
    %s16 = sphi 0, %s28
    %s17 = sphi 0, %s24
    %s18 = sphi 0, %s16
    %s19 = sphi 0, %s17
    %s20 = sphi 0, %s18
    %s21 = sphi 0, %s19
    %s33 = sphi 0, %s35
    %s36 = sphi 0, %s33
    %s37 = sphi 0, %s36
    %s53 = sphi 0, %s37
    %s57 = sphi 0, %s57
    %s59 = sphi 0, %s57
    %s60 = sphi 0, %s59
    %s74 = sphi 0, %s60
    %s78 = sphi 0, %s78
    %s80 = sphi 0, %s78
    %s81 = sphi 0, %s80
    %s95 = sphi 0, %s81
    %s103 = sphi 0, %s105
    %s106 = sphi 0, %s103
    %s107 = sphi 0, %s106
    %s123 = sphi 0, %s107
  $region4: #{_lambda_.9} parent=0 // loop_header_branch
    %12 = sbr.rel (%p10) target = $region8
  $region5: #{_lambda_.9} parent=0 // loop_body
    %s14 = ssub.s32 %s9, 1
    %s15 = ssub.s32 %s9, 2
    %s22 = sadd.s32 1, %s17
    %p23 = scmp.ge.s32.totalorder %s22, 1
    %s24 = scalar_select %p23, 0, %s22
    %s25 = sadd.s32 1, %s16
    %s26 = scalar_select %p23, %s25, %s16
    %p27 = scmp.ge.s32.totalorder %s26, 6
    %s28 = scalar_select %p27, 0, %s26
    %s29 = ssub.s32 %s16, %s28
    %s30 = ssub.s32 %s17, %s24
    %s31 = sor.u32 %s29, %s30
    %p32 = scmp.eq.s32.totalorder %s31, 0
    %s34 = sadd.s32 %s33, 1
    %s35 = scalar_select %p32, %s33, %s34
    %p38 = pneg %p32
    %p39 = scmp.eq.s32.totalorder %s9, 5
    %p40 = por %p38, %p39
    %p41 = scmp.ne.s32.totalorder %s33, %s36
    %p42 = scmp.eq.s32.totalorder %s9, 0
    %p43 = por %p41, %p42
    %p44 = scmp.ne.s32.totalorder %s33, %s36
    %p45 = scmp.eq.s32.totalorder %s14, 5
    %p46 = por %p44, %p45
    %p47 = scmp.ne.s32.totalorder %s36, %s37
    %p48 = scmp.eq.s32.totalorder %s14, 0
    %p49 = por %p47, %p48
    %p50 = scmp.ne.s32.totalorder %s36, %s37
    %p51 = scmp.eq.s32.totalorder %s15, 5
    %p52 = por %p50, %p51
    %p54 = scmp.ne.s32.totalorder %s37, %s53
    %p55 = scmp.eq.s32.totalorder %s15, 0
    %p56 = por %p54, %p55
    %s58 = sadd.s32 %s57, 1
    %p61 = scmp.eq.s32.totalorder %s9, 5
    %p62 = scmp.ne.s32.totalorder %s57, %s59
    %p63 = scmp.eq.s32.totalorder %s9, 0
    %p64 = por %p62, %p63
    %p65 = scmp.ne.s32.totalorder %s57, %s59
    %p66 = scmp.eq.s32.totalorder %s14, 5
    %p67 = por %p65, %p66
    %p68 = scmp.ne.s32.totalorder %s59, %s60
    %p69 = scmp.eq.s32.totalorder %s14, 0
    %p70 = por %p68, %p69
    %p71 = scmp.ne.s32.totalorder %s59, %s60
    %p72 = scmp.eq.s32.totalorder %s15, 5
    %p73 = por %p71, %p72
    %p75 = scmp.ne.s32.totalorder %s60, %s74
    %p76 = scmp.eq.s32.totalorder %s15, 0
    %p77 = por %p75, %p76
    %s79 = sadd.s32 %s78, 1
    %p82 = scmp.eq.s32.totalorder %s9, 5
    %p83 = scmp.ne.s32.totalorder %s78, %s80
    %p84 = scmp.eq.s32.totalorder %s9, 0
    %p85 = por %p83, %p84
    %p86 = scmp.ne.s32.totalorder %s78, %s80
    %p87 = scmp.eq.s32.totalorder %s14, 5
    %p88 = por %p86, %p87
    %p89 = scmp.ne.s32.totalorder %s80, %s81
    %p90 = scmp.eq.s32.totalorder %s14, 0
    %p91 = por %p89, %p90
    %p92 = scmp.ne.s32.totalorder %s80, %s81
    %p93 = scmp.eq.s32.totalorder %s15, 5
    %p94 = por %p92, %p93
    %p96 = scmp.ne.s32.totalorder %s81, %s95
    %p97 = scmp.eq.s32.totalorder %s15, 0
    %p98 = por %p96, %p97
    %s99 = ssub.s32 %s16, %s28
    %s100 = ssub.s32 %s17, %s24
    %s101 = sor.u32 %s99, %s100
    %p102 = scmp.eq.s32.totalorder %s101, 0
    %s104 = sadd.s32 %s103, 1
    %s105 = scalar_select %p102, %s103, %s104
    %p108 = pneg %p102
    %p109 = scmp.eq.s32.totalorder %s9, 5
    %p110 = por %p108, %p109
    %p111 = scmp.ne.s32.totalorder %s103, %s106
    %p112 = scmp.eq.s32.totalorder %s9, 0
    %p113 = por %p111, %p112
    %p114 = scmp.ne.s32.totalorder %s103, %s106
    %p115 = scmp.eq.s32.totalorder %s14, 5
    %p116 = por %p114, %p115
    %p117 = scmp.ne.s32.totalorder %s106, %s107
    %p118 = scmp.eq.s32.totalorder %s14, 0
    %p119 = por %p117, %p118
    %p120 = scmp.ne.s32.totalorder %s106, %s107
    %p121 = scmp.eq.s32.totalorder %s15, 5
    %p122 = por %p120, %p121
    %p124 = scmp.ne.s32.totalorder %s107, %s123
    %p125 = scmp.eq.s32.totalorder %s15, 0
    %p126 = por %p124, %p125
    %p127 = scmp.le.s32.totalorder 1, %s9
    %p128 = scmp.lt.s32.totalorder %s9, 7
    %p129 = pnand %p127, %p128
    %p130 = pneg %p129
    // Predicated region
    $region9: #{_lambda_.9} parent=5 // pred_check
      _
    $region10: #{_lambda_.9} parent=5 // pred_check_branch
      %132 = sbr.rel (%p129) target = $region12
    $region11: #{_lambda_.9} parent=5 // pred_region
      %s133 = ssub.s32 %s9, 1
      // Predicated region
      $region13: #{_lambda_.9} parent=11 // pred_check
        %p134 = pneg %p70
      $region14: #{_lambda_.9} parent=11 // pred_check_branch
        %136 = sbr.rel (%p134) target = $region16
      $region15: #{_lambda_.9} parent=11 // pred_region
        _
      $region16: #{_lambda_.9} parent=11 // pred_fallthru
        _
      // Predicated region
      $region17: #{_lambda_.9} parent=11 // pred_check
        %p137 = pneg %p91
      $region18: #{_lambda_.9} parent=11 // pred_check_branch
        %139 = sbr.rel (%p137) target = $region20
      $region19: #{_lambda_.9} parent=11 // pred_region
        _
      $region20: #{_lambda_.9} parent=11 // pred_fallthru
        _
    $region12: #{_lambda_.9} parent=5 // pred_fallthru
      _
    %p140 = scmp.lt.s32.totalorder %s9, 6
    // Predicated region
    $region21: #{_lambda_.9} parent=5 // pred_check
      %p141 = pneg %p140
    $region22: #{_lambda_.9} parent=5 // pred_check_branch
      %143 = sbr.rel (%p141) target = $region24
    $region23: #{_lambda_.9} parent=5 // pred_region
      // Predicated region
      $region25: #{_lambda_.9} parent=23 // pred_check
        %p144 = pneg %p43
      $region26: #{_lambda_.9} parent=23 // pred_check_branch
        %146 = sbr.rel (%p144) target = $region28
      $region27: #{_lambda_.9} parent=23 // pred_region
        %p147 = scmp.lt.s32.totalorder %s16, 5
        %s148 = scalar_select %p147, %s16, 5
        %p149 = scmp.lt.s32.totalorder %s17, 0
        %s150 = scalar_select %p149, %s17, 0
        %s151 = smul.addr %s148, 9
        %s152 = sadd.s32 %s150, %s151
        %s153 = smul.addr %s152, 4
        %s154 = scalar_lea.vmem %s0, %s153
      $region28: #{_lambda_.9} parent=23 // pred_fallthru
        _
    $region24: #{_lambda_.9} parent=5 // pred_fallthru
      _
    %p155 = scmp.le.s32.totalorder 1, %s9
    %p156 = scmp.lt.s32.totalorder %s9, 7
    %p157 = pnand %p155, %p156
    %p158 = pneg %p157
    // Predicated region
    $region29: #{_lambda_.9} parent=5 // pred_check
      _
    $region30: #{_lambda_.9} parent=5 // pred_check_branch
      %160 = sbr.rel (%p157) target = $region32
    $region31: #{_lambda_.9} parent=5 // pred_region
      %s161 = ssub.s32 %s9, 1
      %p162 = scmp.lt.s32.totalorder %s18, 5
      %s163 = scalar_select %p162, %s18, 5
      %p164 = scmp.lt.s32.totalorder %s19, 0
      %s165 = scalar_select %p164, %s19, 0
      %s166 = smul.addr %s163, 9
      %s167 = sadd.s32 %s165, %s166
      %s168 = smul.addr %s167, 4
      %s169 = scalar_lea.vmem %s0, %s168
      %p170 = pneg %p49
      %p171 = pneg %p46
      %p172 = pneg %p70
      %p173 = pneg %p67
      %p174 = pneg %p91
      %p175 = pneg %p88
      %p176 = pneg %p119
      %p177 = pneg %p116
      %p178 = scmp.lt.s32.totalorder %s18, 5
      %s179 = scalar_select %p178, %s18, 5
      %p180 = scmp.lt.s32.totalorder %s19, 0
      %s181 = scalar_select %p180, %s19, 0
      %s182 = smul.addr %s179, 2
      %s183 = sadd.s32 %s181, %s182
      %s184 = smul.addr %s183, 4
      %s185 = scalar_lea.vmem %s3, %s184
      %p186 = scmp.lt.s32.totalorder %s18, 5
      %s187 = scalar_select %p186, %s18, 5
      %p188 = scmp.lt.s32.totalorder %s19, 0
      %s189 = scalar_select %p188, %s19, 0
      %s190 = smul.addr %s187, 9
      %s191 = sadd.s32 %s189, %s190
      %s192 = smul.addr %s191, 4
      %s193 = scalar_lea.vmem %s0, %s192
      %p194 = scmp.lt.s32.totalorder %s18, 5
      %s195 = scalar_select %p194, %s18, 5
      %p196 = scmp.lt.s32.totalorder %s19, 0
      %s197 = scalar_select %p196, %s19, 0
      %s198 = smul.addr %s195, 2
      %s199 = sadd.s32 %s197, %s198
      %s200 = smul.addr %s199, 4
      %s201 = scalar_lea.vmem %s3, %s200
      %v203 = vld [vmem:[%s193] sm:$0xf]
      %v204 = vld [vmem:[%s193 + $0x4] sm:$0xf]
      %v205 = vld [vmem:[%s193 + $0x8] sm:$0xf]
      %v206 = vld [vmem:[%s193 + $0xc] sm:$0xf]
      %v207 = vld [vmem:[%s193 + $0x10] sm:$0xf]
      %v208 = vld [vmem:[%s193 + $0x14] sm:$0xf]
      %v209 = vld [vmem:[%s193 + $0x18] sm:$0xf]
      %v210 = vld [vmem:[%s193 + $0x1c] sm:$0xf]
      %v211 = vld [vmem:[%s193 + $0x20] sm:$0xf]
      %v212 = vld [vmem:[%s1] sm:$0xf]
      %v213 = vld [vmem:[%s1 + $0x4] sm:$0xf]
      %v214 = vld [vmem:[%s2] sm:$0xff]
      %v215 = vld [vmem:[%s2 + $0x8] sm:$0xff]
      %217 = vset.pattern.permute.xlu0 0
      %218 = vperm.xlu0 %217, %v214
      %v219 = vpop.permute.xlu0 %218
      %222 = vset.pattern.permute.xlu0 0
      %223 = vperm.xlu0 %222, %v215
      %v224 = vpop.permute.xlu0 %223
      %v228 = vunpack.c.l.b16 %v212
      %v229 = vunpack.c.l.b16 %v213
      %v230 = vpack.c.b16 %v229, %v228
      %v240 = vunpack.c.l.b16 %v203
      %v241 = vunpack.c.l.b16 %v204
      %v242 = vunpack.c.l.b16 %v205
      %v243 = vunpack.c.l.b16 %v206
      %v244 = vunpack.c.l.b16 %v207
      %v245 = vunpack.c.l.b16 %v208
      %v246 = vunpack.c.l.b16 %v209
      %v247 = vunpack.c.l.b16 %v210
      %v248 = vunpack.c.l.b16 %v211
      %v249 = vpack.c.b16 %v241, %v240
      %v250 = vpack.c.b16 %v243, %v242
      %v251 = vpack.c.b16 %v245, %v244
      %v252 = vpack.c.b16 %v247, %v246
      %v253 = vpack.c.b16 %v248, %v248
      %vm258 = vcmask 588800
      %v260 = vsel %vm258, %v230, 0
      %vm262 = vcmask 1043456
      %v264 = vsel %vm262, %v253, 0
      %266 = vmatpush.bf16.msra.mxu0 0
      %267 = vmatpush.bf16.msra.mxu0 0
      %268 = vmatpush.bf16.msra.mxu0 0
      %269 = vmatpush.bf16.msra.mxu0 %v264
      %270 = vmatpush.bf16.msra.mxu0 %v252
      %271 = vmatpush.bf16.msra.mxu0 %v251
      %272 = vmatpush.bf16.msra.mxu0 %v250
      %273 = vmatpush.bf16.msra.mxu0 %v249
      %274 = vmatmul.bf16.gmra.mxu0 %v260
      %v275 = vpop.f32.mrf.mxu0
      %v276 = vadd.f32 %v219, %v275
      %v277 = vpop.f32.mrf.mxu0
      %v278 = vadd.f32 %v224, %v277
      %279 = vdwg.mxu0
      %v280 = vmax.f32 %v276, 0.0
      %v281 = vmax.f32 %v278, 0.0
      %v282 = vpack.c.bf16 %v280, %v280
      %v283 = vpack.c.bf16 %v281, %v281
      %vm284 = vcmask 125952
      %285 = vst.msk [vmem:[%s201] sm:$0xf] %vm284, %v282
      %286 = vst.msk [vmem:[%s201 + $0x4] sm:$0xf] %vm284, %v283
      %p287 = scmp.lt.s32.totalorder %s18, 5
      %s288 = scalar_select %p287, %s18, 5
      %p289 = scmp.lt.s32.totalorder %s19, 0
      %s290 = scalar_select %p289, %s19, 0
      %s291 = smul.addr %s288, 2
      %s292 = sadd.s32 %s290, %s291
      %s293 = smul.addr %s292, 4
      %s294 = scalar_lea.vmem %s3, %s293
      // Predicated region
      $region33: #{_lambda_.9} parent=31 // pred_check
        %p295 = pneg %p116
      $region34: #{_lambda_.9} parent=31 // pred_check_branch
        %297 = sbr.rel (%p295) target = $region36
      $region35: #{_lambda_.9} parent=31 // pred_region
        _
      $region36: #{_lambda_.9} parent=31 // pred_fallthru
        _
    $region32: #{_lambda_.9} parent=5 // pred_fallthru
      _
    %p298 = scmp.le.s32.totalorder 2, %s9
    // Predicated region
    $region37: #{_lambda_.9} parent=5 // pred_check
      %p299 = pneg %p298
    $region38: #{_lambda_.9} parent=5 // pred_check_branch
      %301 = sbr.rel (%p299) target = $region40
    $region39: #{_lambda_.9} parent=5 // pred_region
      %s302 = ssub.s32 %s9, 2
      // Predicated region
      $region41: #{_lambda_.9} parent=39 // pred_check
        %p303 = pneg %p122
      $region42: #{_lambda_.9} parent=39 // pred_check_branch
        %305 = sbr.rel (%p303) target = $region44
      $region43: #{_lambda_.9} parent=39 // pred_region
        %p306 = scmp.lt.s32.totalorder %s20, 5
        %s307 = scalar_select %p306, %s20, 5
        %p308 = scmp.lt.s32.totalorder %s21, 0
        %s309 = scalar_select %p308, %s21, 0
        %s310 = smul.addr %s307, 2
        %s311 = sadd.s32 %s309, %s310
        %s312 = smul.addr %s311, 4
        %s313 = scalar_lea.vmem %s3, %s312
      $region44: #{_lambda_.9} parent=39 // pred_fallthru
        _
    $region40: #{_lambda_.9} parent=5 // pred_fallthru
      _
  $region6: #{_lambda_.9} parent=0 // loop_footer
    %s13 = sadd.s32 1, %s9
  $region7: #{_lambda_.9} parent=0 // loop_footer_branch
    %8 = sbr.rel target = $region3
  $region8: #{_lambda_.9} parent=0 // loop_exit
    _

// kernel: _lambda_.10
$region0: #{_lambda_.10}
  #allocation0 [shape = 'u32[]', space=smem, size = 0x4, offset = 0x4, fixed_abs, tag = 'smem constant byte address 0x4 - core index']
  #allocation1 [shape = 'u32[72,128]{1,0:T(1,128)}', space=vmem, size = 0x9000, scoped, tag = 'internal scratch']
  %s0 = inlined_call_operand.vmem [shape: bf16[6,144,4], index: 0, kind: input, shape index: {}]
  %s1 = inlined_call_operand.vmem [shape: bf16[32,144], index: 1, kind: input, shape index: {}]
  %s2 = inlined_call_operand.vmem [shape: f32[32,1], index: 2, kind: input, shape index: {}]
  %s3 = inlined_call_operand.vmem [shape: bf16[6,32,4], index: 3, kind: output, shape index: {}]
  %s4 = sld [smem:[#allocation0]]
  $region45: #{_lambda_.10} parent=0
    _
  %s6 = ssub.s32 1, %s4
  %s7 = scalar_select 0, %s6, %s4
  loop: start=0, step=1, limit=8
  $region2: #{_lambda_.10} parent=0 // loop_pre_header
    _
  $region3: #{_lambda_.10} parent=0 // loop_header
    %s9 = sphi 0, %s13
    %p10 = scmp.ge.s32.totalorder %s9, 8
    %s16 = sphi 0, %s28
    %s17 = sphi 0, %s24
    %s18 = sphi 0, %s16
    %s19 = sphi 0, %s17
    %s20 = sphi 0, %s18
    %s21 = sphi 0, %s19
    %s33 = sphi 0, %s35
    %s36 = sphi 0, %s33
    %s37 = sphi 0, %s36
    %s53 = sphi 0, %s37
    %s57 = sphi 0, %s57
    %s59 = sphi 0, %s57
    %s60 = sphi 0, %s59
    %s74 = sphi 0, %s60
    %s78 = sphi 0, %s78
    %s80 = sphi 0, %s78
    %s81 = sphi 0, %s80
    %s95 = sphi 0, %s81
    %s103 = sphi 0, %s105
    %s106 = sphi 0, %s103
    %s107 = sphi 0, %s106
    %s123 = sphi 0, %s107
  $region4: #{_lambda_.10} parent=0 // loop_header_branch
    %12 = sbr.rel (%p10) target = $region8
  $region5: #{_lambda_.10} parent=0 // loop_body
    %s14 = ssub.s32 %s9, 1
    %s15 = ssub.s32 %s9, 2
    %s22 = sadd.s32 1, %s17
    %p23 = scmp.ge.s32.totalorder %s22, 1
    %s24 = scalar_select %p23, 0, %s22
    %s25 = sadd.s32 1, %s16
    %s26 = scalar_select %p23, %s25, %s16
    %p27 = scmp.ge.s32.totalorder %s26, 6
    %s28 = scalar_select %p27, 0, %s26
    %s29 = ssub.s32 %s16, %s28
    %s30 = ssub.s32 %s17, %s24
    %s31 = sor.u32 %s29, %s30
    %p32 = scmp.eq.s32.totalorder %s31, 0
    %s34 = sadd.s32 %s33, 1
    %s35 = scalar_select %p32, %s33, %s34
    %p38 = pneg %p32
    %p39 = scmp.eq.s32.totalorder %s9, 5
    %p40 = por %p38, %p39
    %p41 = scmp.ne.s32.totalorder %s33, %s36
    %p42 = scmp.eq.s32.totalorder %s9, 0
    %p43 = por %p41, %p42
    %p44 = scmp.ne.s32.totalorder %s33, %s36
    %p45 = scmp.eq.s32.totalorder %s14, 5
    %p46 = por %p44, %p45
    %p47 = scmp.ne.s32.totalorder %s36, %s37
    %p48 = scmp.eq.s32.totalorder %s14, 0
    %p49 = por %p47, %p48
    %p50 = scmp.ne.s32.totalorder %s36, %s37
    %p51 = scmp.eq.s32.totalorder %s15, 5
    %p52 = por %p50, %p51
    %p54 = scmp.ne.s32.totalorder %s37, %s53
    %p55 = scmp.eq.s32.totalorder %s15, 0
    %p56 = por %p54, %p55
    %s58 = sadd.s32 %s57, 1
    %p61 = scmp.eq.s32.totalorder %s9, 5
    %p62 = scmp.ne.s32.totalorder %s57, %s59
    %p63 = scmp.eq.s32.totalorder %s9, 0
    %p64 = por %p62, %p63
    %p65 = scmp.ne.s32.totalorder %s57, %s59
    %p66 = scmp.eq.s32.totalorder %s14, 5
    %p67 = por %p65, %p66
    %p68 = scmp.ne.s32.totalorder %s59, %s60
    %p69 = scmp.eq.s32.totalorder %s14, 0
    %p70 = por %p68, %p69
    %p71 = scmp.ne.s32.totalorder %s59, %s60
    %p72 = scmp.eq.s32.totalorder %s15, 5
    %p73 = por %p71, %p72
    %p75 = scmp.ne.s32.totalorder %s60, %s74
    %p76 = scmp.eq.s32.totalorder %s15, 0
    %p77 = por %p75, %p76
    %s79 = sadd.s32 %s78, 1
    %p82 = scmp.eq.s32.totalorder %s9, 5
    %p83 = scmp.ne.s32.totalorder %s78, %s80
    %p84 = scmp.eq.s32.totalorder %s9, 0
    %p85 = por %p83, %p84
    %p86 = scmp.ne.s32.totalorder %s78, %s80
    %p87 = scmp.eq.s32.totalorder %s14, 5
    %p88 = por %p86, %p87
    %p89 = scmp.ne.s32.totalorder %s80, %s81
    %p90 = scmp.eq.s32.totalorder %s14, 0
    %p91 = por %p89, %p90
    %p92 = scmp.ne.s32.totalorder %s80, %s81
    %p93 = scmp.eq.s32.totalorder %s15, 5
    %p94 = por %p92, %p93
    %p96 = scmp.ne.s32.totalorder %s81, %s95
    %p97 = scmp.eq.s32.totalorder %s15, 0
    %p98 = por %p96, %p97
    %s99 = ssub.s32 %s16, %s28
    %s100 = ssub.s32 %s17, %s24
    %s101 = sor.u32 %s99, %s100
    %p102 = scmp.eq.s32.totalorder %s101, 0
    %s104 = sadd.s32 %s103, 1
    %s105 = scalar_select %p102, %s103, %s104
    %p108 = pneg %p102
    %p109 = scmp.eq.s32.totalorder %s9, 5
    %p110 = por %p108, %p109
    %p111 = scmp.ne.s32.totalorder %s103, %s106
    %p112 = scmp.eq.s32.totalorder %s9, 0
    %p113 = por %p111, %p112
    %p114 = scmp.ne.s32.totalorder %s103, %s106
    %p115 = scmp.eq.s32.totalorder %s14, 5
    %p116 = por %p114, %p115
    %p117 = scmp.ne.s32.totalorder %s106, %s107
    %p118 = scmp.eq.s32.totalorder %s14, 0
    %p119 = por %p117, %p118
    %p120 = scmp.ne.s32.totalorder %s106, %s107
    %p121 = scmp.eq.s32.totalorder %s15, 5
    %p122 = por %p120, %p121
    %p124 = scmp.ne.s32.totalorder %s107, %s123
    %p125 = scmp.eq.s32.totalorder %s15, 0
    %p126 = por %p124, %p125
    %p127 = scmp.le.s32.totalorder 1, %s9
    %p128 = scmp.lt.s32.totalorder %s9, 7
    %p129 = pnand %p127, %p128
    %p130 = pneg %p129
    // Predicated region
    $region9: #{_lambda_.10} parent=5 // pred_check
      _
    $region10: #{_lambda_.10} parent=5 // pred_check_branch
      %132 = sbr.rel (%p129) target = $region12
    $region11: #{_lambda_.10} parent=5 // pred_region
      %s133 = ssub.s32 %s9, 1
      // Predicated region
      $region13: #{_lambda_.10} parent=11 // pred_check
        %p134 = pneg %p70
      $region14: #{_lambda_.10} parent=11 // pred_check_branch
        %136 = sbr.rel (%p134) target = $region16
      $region15: #{_lambda_.10} parent=11 // pred_region
        _
      $region16: #{_lambda_.10} parent=11 // pred_fallthru
        _
      // Predicated region
      $region17: #{_lambda_.10} parent=11 // pred_check
        %p137 = pneg %p91
      $region18: #{_lambda_.10} parent=11 // pred_check_branch
        %139 = sbr.rel (%p137) target = $region20
      $region19: #{_lambda_.10} parent=11 // pred_region
        _
      $region20: #{_lambda_.10} parent=11 // pred_fallthru
        _
    $region12: #{_lambda_.10} parent=5 // pred_fallthru
      _
    %p140 = scmp.lt.s32.totalorder %s9, 6
    // Predicated region
    $region21: #{_lambda_.10} parent=5 // pred_check
      %p141 = pneg %p140
    $region22: #{_lambda_.10} parent=5 // pred_check_branch
      %143 = sbr.rel (%p141) target = $region24
    $region23: #{_lambda_.10} parent=5 // pred_region
      // Predicated region
      $region25: #{_lambda_.10} parent=23 // pred_check
        %p144 = pneg %p43
      $region26: #{_lambda_.10} parent=23 // pred_check_branch
        %146 = sbr.rel (%p144) target = $region28
      $region27: #{_lambda_.10} parent=23 // pred_region
        %p147 = scmp.lt.s32.totalorder %s16, 5
        %s148 = scalar_select %p147, %s16, 5
        %p149 = scmp.lt.s32.totalorder %s17, 0
        %s150 = scalar_select %p149, %s17, 0
        %s151 = smul.addr %s148, 18
        %s152 = sadd.s32 %s150, %s151
        %s153 = smul.addr %s152, 4
        %s154 = scalar_lea.vmem %s0, %s153
      $region28: #{_lambda_.10} parent=23 // pred_fallthru
        _
    $region24: #{_lambda_.10} parent=5 // pred_fallthru
      _
    %p155 = scmp.le.s32.totalorder 1, %s9
    %p156 = scmp.lt.s32.totalorder %s9, 7
    %p157 = pnand %p155, %p156
    %p158 = pneg %p157
    // Predicated region
    $region29: #{_lambda_.10} parent=5 // pred_check
      _
    $region30: #{_lambda_.10} parent=5 // pred_check_branch
      %160 = sbr.rel (%p157) target = $region32
    $region31: #{_lambda_.10} parent=5 // pred_region
      %s161 = ssub.s32 %s9, 1
      %p162 = scmp.lt.s32.totalorder %s18, 5
      %s163 = scalar_select %p162, %s18, 5
      %p164 = scmp.lt.s32.totalorder %s19, 0
      %s165 = scalar_select %p164, %s19, 0
      %s166 = smul.addr %s163, 18
      %s167 = sadd.s32 %s165, %s166
      %s168 = smul.addr %s167, 4
      %s169 = scalar_lea.vmem %s0, %s168
      %p170 = pneg %p49
      %p171 = pneg %p46
      %p172 = pneg %p70
      %p173 = pneg %p67
      %p174 = pneg %p91
      %p175 = pneg %p88
      %p176 = pneg %p119
      %p177 = pneg %p116
      %p178 = scmp.lt.s32.totalorder %s18, 5
      %s179 = scalar_select %p178, %s18, 5
      %p180 = scmp.lt.s32.totalorder %s19, 0
      %s181 = scalar_select %p180, %s19, 0
      %s182 = smul.addr %s179, 4
      %s183 = sadd.s32 %s181, %s182
      %s184 = smul.addr %s183, 4
      %s185 = scalar_lea.vmem %s3, %s184
      %p186 = scmp.lt.s32.totalorder %s18, 5
      %s187 = scalar_select %p186, %s18, 5
      %p188 = scmp.lt.s32.totalorder %s19, 0
      %s189 = scalar_select %p188, %s19, 0
      %s190 = smul.addr %s187, 18
      %s191 = sadd.s32 %s189, %s190
      %s192 = smul.addr %s191, 4
      %s193 = scalar_lea.vmem %s0, %s192
      %p194 = scmp.lt.s32.totalorder %s18, 5
      %s195 = scalar_select %p194, %s18, 5
      %p196 = scmp.lt.s32.totalorder %s19, 0
      %s197 = scalar_select %p196, %s19, 0
      %s198 = smul.addr %s195, 4
      %s199 = sadd.s32 %s197, %s198
      %s200 = smul.addr %s199, 4
      %s201 = scalar_lea.vmem %s3, %s200
      %v203 = vld [vmem:[%s193] sm:$0xf]
      %v204 = vld [vmem:[%s193 + $0x4] sm:$0xf]
      %v205 = vld [vmem:[%s193 + $0x8] sm:$0xf]
      %v206 = vld [vmem:[%s193 + $0xc] sm:$0xf]
      %v207 = vld [vmem:[%s193 + $0x10] sm:$0xf]
      %v208 = vld [vmem:[%s193 + $0x14] sm:$0xf]
      %v209 = vld [vmem:[%s193 + $0x18] sm:$0xf]
      %v210 = vld [vmem:[%s193 + $0x1c] sm:$0xf]
      %v211 = vld [vmem:[%s193 + $0x20] sm:$0xf]
      %v212 = vld [vmem:[%s193 + $0x24] sm:$0xf]
      %v213 = vld [vmem:[%s193 + $0x28] sm:$0xf]
      %v214 = vld [vmem:[%s193 + $0x2c] sm:$0xf]
      %v215 = vld [vmem:[%s193 + $0x30] sm:$0xf]
      %v216 = vld [vmem:[%s193 + $0x34] sm:$0xf]
      %v217 = vld [vmem:[%s193 + $0x38] sm:$0xf]
      %v218 = vld [vmem:[%s193 + $0x3c] sm:$0xf]
      %v219 = vld [vmem:[%s193 + $0x40] sm:$0xf]
      %v220 = vld [vmem:[%s193 + $0x44] sm:$0xf]
      %v221 = vld [vmem:[%s1] sm:$0xff]
      %v222 = vld [vmem:[%s1 + $0x8] sm:$0xff]
      %v223 = vld [vmem:[%s1 + $0x10] sm:$0xff]
      %v224 = vld [vmem:[%s1 + $0x18] sm:$0xff]
      %v225 = vld [vmem:[%s2] sm:$0xff]
      %v226 = vld [vmem:[%s2 + $0x8] sm:$0xff]
      %v227 = vld [vmem:[%s2 + $0x10] sm:$0xff]
      %v228 = vld [vmem:[%s2 + $0x18] sm:$0xff]
      %230 = vset.pattern.permute.xlu0 0
      %231 = vperm.xlu0 %230, %v225
      %v232 = vpop.permute.xlu0 %231
      %235 = vset.pattern.permute.xlu0 0
      %236 = vperm.xlu0 %235, %v226
      %v237 = vpop.permute.xlu0 %236
      %240 = vset.pattern.permute.xlu0 0
      %241 = vperm.xlu0 %240, %v227
      %v242 = vpop.permute.xlu0 %241
      %245 = vset.pattern.permute.xlu0 0
      %246 = vperm.xlu0 %245, %v228
      %v247 = vpop.permute.xlu0 %246
      %v253 = vunpack.c.l.b16 %v221
      %v254 = vunpack.c.h.b16 %v221
      %v255 = vunpack.c.l.b16 %v222
      %v256 = vunpack.c.h.b16 %v222
      %v257 = vunpack.c.l.b16 %v223
      %v258 = vunpack.c.h.b16 %v223
      %v259 = vunpack.c.l.b16 %v224
      %v260 = vunpack.c.h.b16 %v224
      %v261 = vpack.c.b16 %v255, %v253
      %v262 = vpack.c.b16 %v256, %v254
      %v263 = vpack.c.b16 %v259, %v257
      %v264 = vpack.c.b16 %v260, %v258
      %v285 = vunpack.c.l.b16 %v203
      %v286 = vunpack.c.l.b16 %v204
      %v287 = vunpack.c.l.b16 %v205
      %v288 = vunpack.c.l.b16 %v206
      %v289 = vunpack.c.l.b16 %v207
      %v290 = vunpack.c.l.b16 %v208
      %v291 = vunpack.c.l.b16 %v209
      %v292 = vunpack.c.l.b16 %v210
      %v293 = vunpack.c.l.b16 %v211
      %v294 = vunpack.c.l.b16 %v212
      %v295 = vunpack.c.l.b16 %v213
      %v296 = vunpack.c.l.b16 %v214
      %v297 = vunpack.c.l.b16 %v215
      %v298 = vunpack.c.l.b16 %v216
      %v299 = vunpack.c.l.b16 %v217
      %v300 = vunpack.c.l.b16 %v218
      %v301 = vunpack.c.l.b16 %v219
      %v302 = vunpack.c.l.b16 %v220
      %v303 = vpack.c.b16 %v286, %v285
      %v304 = vpack.c.b16 %v288, %v287
      %v305 = vpack.c.b16 %v290, %v289
      %v306 = vpack.c.b16 %v292, %v291
      %v307 = vpack.c.b16 %v294, %v293
      %v308 = vpack.c.b16 %v296, %v295
      %v309 = vpack.c.b16 %v298, %v297
      %v310 = vpack.c.b16 %v300, %v299
      %v311 = vpack.c.b16 %v302, %v301
      %vm321 = vcmask 130048
      %v323 = vsel %vm321, %v262, 0
      %v326 = vsel %vm321, %v264, 0
      %328 = vmatpush.bf16.msra.mxu0 %v310
      %329 = vmatpush.bf16.msra.mxu0 %v309
      %330 = vmatpush.bf16.msra.mxu0 %v308
      %331 = vmatpush.bf16.msra.mxu0 %v307
      %332 = vmatpush.bf16.msra.mxu0 %v306
      %333 = vmatpush.bf16.msra.mxu0 %v305
      %334 = vmatpush.bf16.msra.mxu0 %v304
      %335 = vmatpush.bf16.msra.mxu0 %v303
      %336 = vmatmul.bf16.gmra.mxu0 %v261
      %v337 = vpop.f32.mrf.mxu0
      %v338 = vadd.f32 %v232, %v337
      %v339 = vpop.f32.mrf.mxu0
      %v340 = vadd.f32 %v237, %v339
      %341 = vmatmul.bf16.gmra.mxu0 %v263
      %v342 = vpop.f32.mrf.mxu0
      %v343 = vadd.f32 %v242, %v342
      %v344 = vpop.f32.mrf.mxu0
      %v345 = vadd.f32 %v247, %v344
      %346 = vdwg.mxu0
      %347 = vmatpush.bf16.msra.mxu0 0
      %348 = vmatpush.bf16.msra.mxu0 0
      %349 = vmatpush.bf16.msra.mxu0 0
      %350 = vmatpush.bf16.msra.mxu0 0
      %351 = vmatpush.bf16.msra.mxu0 0
      %352 = vmatpush.bf16.msra.mxu0 0
      %353 = vmatpush.bf16.msra.mxu0 0
      %354 = vmatpush.bf16.msra.mxu0 %v311
      %355 = vmatmul.bf16.gmra.mxu0 %v323
      %v356 = vpop.f32.mrf.mxu0
      %v357 = vadd.f32 %v338, %v356
      %v358 = vpop.f32.mrf.mxu0
      %v359 = vadd.f32 %v340, %v358
      %360 = vmatmul.bf16.gmra.mxu0 %v326
      %v361 = vpop.f32.mrf.mxu0
      %v362 = vadd.f32 %v343, %v361
      %v363 = vpop.f32.mrf.mxu0
      %v364 = vadd.f32 %v345, %v363
      %365 = vdwg.mxu0
      %v366 = vmax.f32 %v357, 0.0
      %v367 = vmax.f32 %v359, 0.0
      %v368 = vmax.f32 %v362, 0.0
      %v369 = vmax.f32 %v364, 0.0
      %v370 = vpack.c.bf16 %v366, %v366
      %v371 = vpack.c.bf16 %v367, %v367
      %v372 = vpack.c.bf16 %v368, %v368
      %v373 = vpack.c.bf16 %v369, %v369
      %vm374 = vcmask 27648
      %375 = vst.msk [vmem:[%s201] sm:$0xf] %vm374, %v370
      %376 = vst.msk [vmem:[%s201 + $0x4] sm:$0xf] %vm374, %v371
      %377 = vst.msk [vmem:[%s201 + $0x8] sm:$0xf] %vm374, %v372
      %378 = vst.msk [vmem:[%s201 + $0xc] sm:$0xf] %vm374, %v373
      %p379 = scmp.lt.s32.totalorder %s18, 5
      %s380 = scalar_select %p379, %s18, 5
      %p381 = scmp.lt.s32.totalorder %s19, 0
      %s382 = scalar_select %p381, %s19, 0
      %s383 = smul.addr %s380, 4
      %s384 = sadd.s32 %s382, %s383
      %s385 = smul.addr %s384, 4
      %s386 = scalar_lea.vmem %s3, %s385
      // Predicated region
      $region33: #{_lambda_.10} parent=31 // pred_check
        %p387 = pneg %p116
      $region34: #{_lambda_.10} parent=31 // pred_check_branch
        %389 = sbr.rel (%p387) target = $region36
      $region35: #{_lambda_.10} parent=31 // pred_region
        _
      $region36: #{_lambda_.10} parent=31 // pred_fallthru
        _
    $region32: #{_lambda_.10} parent=5 // pred_fallthru
      _
    %p390 = scmp.le.s32.totalorder 2, %s9
    // Predicated region
    $region37: #{_lambda_.10} parent=5 // pred_check
      %p391 = pneg %p390
    $region38: #{_lambda_.10} parent=5 // pred_check_branch
      %393 = sbr.rel (%p391) target = $region40
    $region39: #{_lambda_.10} parent=5 // pred_region
      %s394 = ssub.s32 %s9, 2
      // Predicated region
      $region41: #{_lambda_.10} parent=39 // pred_check
        %p395 = pneg %p122
      $region42: #{_lambda_.10} parent=39 // pred_check_branch
        %397 = sbr.rel (%p395) target = $region44
      $region43: #{_lambda_.10} parent=39 // pred_region
        %p398 = scmp.lt.s32.totalorder %s20, 5
        %s399 = scalar_select %p398, %s20, 5
        %p400 = scmp.lt.s32.totalorder %s21, 0
        %s401 = scalar_select %p400, %s21, 0
        %s402 = smul.addr %s399, 4
        %s403 = sadd.s32 %s401, %s402
        %s404 = smul.addr %s403, 4
        %s405 = scalar_lea.vmem %s3, %s404
      $region44: #{_lambda_.10} parent=39 // pred_fallthru
        _
    $region40: #{_lambda_.10} parent=5 // pred_fallthru
      _
  $region6: #{_lambda_.10} parent=0 // loop_footer
    %s13 = sadd.s32 1, %s9
  $region7: #{_lambda_.10} parent=0 // loop_footer_branch
    %8 = sbr.rel target = $region3
  $region8: #{_lambda_.10} parent=0 // loop_exit
    _

// kernel: _lambda_.13
$region0: #{_lambda_.13}
  #allocation0 [shape = 'u32[]', space=smem, size = 0x4, offset = 0x4, fixed_abs, tag = 'smem constant byte address 0x4 - core index']
  #allocation1 [shape = 'u32[72,128]{1,0:T(1,128)}', space=vmem, size = 0x9000, scoped, tag = 'internal scratch']
  #allocation2 [shape = 'f32[96,96]{1,0:T(8,128)}', space=vmem, size = 0xc000, scoped, tag = 'scratch operand']
  %s0 = inlined_call_operand.vmem [shape: bf16[3,2,32,4], index: 0, kind: input, shape index: {}]
  %s1 = inlined_call_operand.hbm [shape: f32[1,1], index: 1, kind: output, shape index: {}]
  %s2 = sld [smem:[#allocation0]]
  $region90: #{_lambda_.13} parent=0
    _
  %s4 = ssub.s32 1, %s2
  %s5 = scalar_select 0, %s4, %s2
  $region1: #{_lambda_.13} parent=0
    #allocation3 [shape = 'u8[49152]{0}', space=vmem, size = 0xc000, scoped, tag = 'input window, operand 0']
    #allocation4 [shape = 'u8[512]{0}', space=vmem, size = 0x400, scoped, tag = 'output window, operand 0, single buffered']
    #allocation5 [shape = 's32[2]{0}', space=sflag, size = 0x8, scoped, tag = 'scoped memory for _lambda_.13']
    %6 = vsyncpa [#allocation5], 0
    loop: start=0, step=1, limit=4
    $region2: #{_lambda_.13} parent=1 // loop_pre_header
      _
    $region3: #{_lambda_.13} parent=1 // loop_header
      %s8 = sphi 0, %s12
      %p9 = scmp.ge.s32.totalorder %s8, 4
      %s15 = sphi 0, %s27
      %s16 = sphi 0, %s23
      %s17 = sphi 0, %s15
      %s18 = sphi 0, %s16
      %s19 = sphi 0, %s17
      %s20 = sphi 0, %s18
      %s32 = sphi 0, %s34
      %s35 = sphi 0, %s32
      %s36 = sphi 0, %s35
      %s52 = sphi 0, %s36
      %s56 = sphi 0, %s56
      %s58 = sphi 0, %s56
      %s59 = sphi 0, %s58
      %s73 = sphi 0, %s59
    $region4: #{_lambda_.13} parent=1 // loop_header_branch
      %11 = sbr.rel (%p9) target = $region8
    $region5: #{_lambda_.13} parent=1 // loop_body
      %s13 = ssub.s32 %s8, 1
      %s14 = ssub.s32 %s8, 2
      %s21 = sadd.s32 1, %s16
      %p22 = scmp.ge.s32.totalorder %s21, 1
      %s23 = scalar_select %p22, 0, %s21
      %s24 = sadd.s32 1, %s15
      %s25 = scalar_select %p22, %s24, %s15
      %p26 = scmp.ge.s32.totalorder %s25, 2
      %s27 = scalar_select %p26, 0, %s25
      %s28 = ssub.s32 %s15, %s27
      %s29 = ssub.s32 %s16, %s23
      %s30 = sor.u32 %s28, %s29
      %p31 = scmp.eq.s32.totalorder %s30, 0
      %s33 = sadd.s32 %s32, 1
      %s34 = scalar_select %p31, %s32, %s33
      %p37 = pneg %p31
      %p38 = scmp.eq.s32.totalorder %s8, 1
      %p39 = por %p37, %p38
      %p40 = scmp.ne.s32.totalorder %s32, %s35
      %p41 = scmp.eq.s32.totalorder %s8, 0
      %p42 = por %p40, %p41
      %p43 = scmp.ne.s32.totalorder %s32, %s35
      %p44 = scmp.eq.s32.totalorder %s13, 1
      %p45 = por %p43, %p44
      %p46 = scmp.ne.s32.totalorder %s35, %s36
      %p47 = scmp.eq.s32.totalorder %s13, 0
      %p48 = por %p46, %p47
      %p49 = scmp.ne.s32.totalorder %s35, %s36
      %p50 = scmp.eq.s32.totalorder %s14, 1
      %p51 = por %p49, %p50
      %p53 = scmp.ne.s32.totalorder %s36, %s52
      %p54 = scmp.eq.s32.totalorder %s14, 0
      %p55 = por %p53, %p54
      %s57 = sadd.s32 %s56, 1
      %p60 = scmp.eq.s32.totalorder %s8, 1
      %p61 = scmp.ne.s32.totalorder %s56, %s58
      %p62 = scmp.eq.s32.totalorder %s8, 0
      %p63 = por %p61, %p62
      %p64 = scmp.ne.s32.totalorder %s56, %s58
      %p65 = scmp.eq.s32.totalorder %s13, 1
      %p66 = por %p64, %p65
      %p67 = scmp.ne.s32.totalorder %s58, %s59
      %p68 = scmp.eq.s32.totalorder %s13, 0
      %p69 = por %p67, %p68
      %p70 = scmp.ne.s32.totalorder %s58, %s59
      %p71 = scmp.eq.s32.totalorder %s14, 1
      %p72 = por %p70, %p71
      %p74 = scmp.ne.s32.totalorder %s59, %s73
      %p75 = scmp.eq.s32.totalorder %s14, 0
      %p76 = por %p74, %p75
      %p77 = scmp.le.s32.totalorder 1, %s8
      %p78 = scmp.lt.s32.totalorder %s8, 3
      %p79 = pnand %p77, %p78
      %p80 = pneg %p79
      // Predicated region
      $region9: #{_lambda_.13} parent=5 // pred_check
        _
      $region10: #{_lambda_.13} parent=5 // pred_check_branch
        %82 = sbr.rel (%p79) target = $region12
      $region11: #{_lambda_.13} parent=5 // pred_region
        %s83 = ssub.s32 %s8, 1
      $region12: #{_lambda_.13} parent=5 // pred_fallthru
        _
      %p84 = scmp.lt.s32.totalorder %s8, 2
      // Predicated region
      $region13: #{_lambda_.13} parent=5 // pred_check
        %p85 = pneg %p84
      $region14: #{_lambda_.13} parent=5 // pred_check_branch
        %87 = sbr.rel (%p85) target = $region16
      $region15: #{_lambda_.13} parent=5 // pred_region
        // Predicated region
        $region17: #{_lambda_.13} parent=15 // pred_check
          %p88 = pneg %p42
        $region18: #{_lambda_.13} parent=15 // pred_check_branch
          %90 = sbr.rel (%p88) target = $region20
        $region19: #{_lambda_.13} parent=15 // pred_region
          %s91 = sand.u32 %s32, 1
          %s92 = sand.u32 %s32, 1
          %s93 = smul.addr %s92, 48
          %s94 = scalar_lea.vmem [#allocation3], %s93
          %s95 = smul.addr %s15, 4
          %s96 = sadd.s32 %s16, %s95
          %s97 = smul.addr %s96, 4
          %s98 = scalar_lea.vmem %s0, %s97
          // Predicated region
          $region21: #{_lambda_.13} parent=19 // pred_check
            _
          $region22: #{_lambda_.13} parent=19 // pred_check_branch
            %100 = sbr.rel (0) target = $region24
          $region23: #{_lambda_.13} parent=19 // pred_region
            // Predicated region
            $region25: #{_lambda_.13} parent=23 // pred_check
              _
            $region26: #{_lambda_.13} parent=23 // pred_check_branch
              %102 = sbr.rel target = $region28
            $region27: #{_lambda_.13} parent=23 // pred_region
              // Predicated region
              $region40: #{_lambda_.13} parent=27 // pred_check
                _
              $region41: #{_lambda_.13} parent=27 // pred_check_branch
                %140 = sbr.rel (0) target = $region43
              $region42: #{_lambda_.13} parent=27 // pred_region
                loop: start=0, step=1, limit=1
                $region44: #{_lambda_.13} parent=42 // loop_pre_header
                  _
                $region45: #{_lambda_.13} parent=42 // loop_header
                  %s142 = sphi 0, %s146
                  %p143 = scmp.ge.s32.totalorder %s142, 1
                  %s147 = sphi %s98, %s98
                  %s148 = sphi %s94, %s94
                $region46: #{_lambda_.13} parent=42 // loop_header_branch
                  %145 = sbr.rel (%p143) target = $region50
                $region47: #{_lambda_.13} parent=42 // loop_body
                  _
                $region48: #{_lambda_.13} parent=42 // loop_footer
                  %s146 = sadd.s32 1, %s142
                $region49: #{_lambda_.13} parent=42 // loop_footer_branch
                  %141 = sbr.rel target = $region45
                $region50: #{_lambda_.13} parent=42 // loop_exit
                  _
                %s150 = ssub.s32 16, 1
                loop: start=0, step=1, limit=1
                $region51: #{_lambda_.13} parent=42 // loop_pre_header
                  _
                $region52: #{_lambda_.13} parent=42 // loop_header
                  %s152 = sphi 0, %s156
                  %p153 = scmp.ge.s32.totalorder %s152, 1
                  %s157 = sphi %s98, %s98
                  %s158 = sphi %s94, %s94
                $region53: #{_lambda_.13} parent=42 // loop_header_branch
                  %155 = sbr.rel (%p153) target = $region57
                $region54: #{_lambda_.13} parent=42 // loop_body
                  %v159 = vld [vmem:[%s157] sm:%s150]
                  %160 = vst [vmem:[%s158] sm:%s150] %v159
                  %v161 = vld [vmem:[%s157 + $0x4] sm:%s150]
                  %162 = vst [vmem:[%s158 + $0x4] sm:%s150] %v161
                  %v163 = vld [vmem:[%s157 + $0x8] sm:%s150]
                  %164 = vst [vmem:[%s158 + $0x8] sm:%s150] %v163
                  %v165 = vld [vmem:[%s157 + $0xc] sm:%s150]
                  %166 = vst [vmem:[%s158 + $0xc] sm:%s150] %v165
                  %v167 = vld [vmem:[%s157 + $0x20] sm:%s150]
                  %168 = vst [vmem:[%s158 + $0x10] sm:%s150] %v167
                  %v169 = vld [vmem:[%s157 + $0x24] sm:%s150]
                  %170 = vst [vmem:[%s158 + $0x14] sm:%s150] %v169
                  %v171 = vld [vmem:[%s157 + $0x28] sm:%s150]
                  %172 = vst [vmem:[%s158 + $0x18] sm:%s150] %v171
                  %v173 = vld [vmem:[%s157 + $0x2c] sm:%s150]
                  %174 = vst [vmem:[%s158 + $0x1c] sm:%s150] %v173
                  %v175 = vld [vmem:[%s157 + $0x40] sm:%s150]
                  %176 = vst [vmem:[%s158 + $0x20] sm:%s150] %v175
                  %v177 = vld [vmem:[%s157 + $0x44] sm:%s150]
                  %178 = vst [vmem:[%s158 + $0x24] sm:%s150] %v177
                  %v179 = vld [vmem:[%s157 + $0x48] sm:%s150]
                  %180 = vst [vmem:[%s158 + $0x28] sm:%s150] %v179
                  %v181 = vld [vmem:[%s157 + $0x4c] sm:%s150]
                  %182 = vst [vmem:[%s158 + $0x2c] sm:%s150] %v181
                $region55: #{_lambda_.13} parent=42 // loop_footer
                  %s156 = sadd.s32 1, %s152
                $region56: #{_lambda_.13} parent=42 // loop_footer_branch
                  %151 = sbr.rel target = $region52
                $region57: #{_lambda_.13} parent=42 // loop_exit
                  _
              $region43: #{_lambda_.13} parent=27 // pred_fallthru
                _
            $region28: #{_lambda_.13} parent=23 // pred_fallthru
              _
            // Predicated region
            $region29: #{_lambda_.13} parent=23 // pred_check
              _
            $region30: #{_lambda_.13} parent=23 // pred_check_branch
              %104 = sbr.rel (0) target = $region32
            $region31: #{_lambda_.13} parent=23 // pred_region
              %s106 = ssub.s32 16, 1
              loop: start=0, step=1, limit=1
              $region33: #{_lambda_.13} parent=31 // loop_pre_header
                _
              $region34: #{_lambda_.13} parent=31 // loop_header
                %s108 = sphi 0, %s112
                %p109 = scmp.ge.s32.totalorder %s108, 1
                %s113 = sphi %s98, %s98
                %s114 = sphi %s94, %s94
              $region35: #{_lambda_.13} parent=31 // loop_header_branch
                %111 = sbr.rel (%p109) target = $region39
              $region36: #{_lambda_.13} parent=31 // loop_body
                %v115 = vld [vmem:[%s113] sm:%s106]
                %116 = vst [vmem:[%s114] sm:%s106] %v115
                %v117 = vld [vmem:[%s113 + $0x4] sm:%s106]
                %118 = vst [vmem:[%s114 + $0x4] sm:%s106] %v117
                %v119 = vld [vmem:[%s113 + $0x8] sm:%s106]
                %120 = vst [vmem:[%s114 + $0x8] sm:%s106] %v119
                %v121 = vld [vmem:[%s113 + $0xc] sm:%s106]
                %122 = vst [vmem:[%s114 + $0xc] sm:%s106] %v121
                %v123 = vld [vmem:[%s113 + $0x20] sm:%s106]
                %124 = vst [vmem:[%s114 + $0x10] sm:%s106] %v123
                %v125 = vld [vmem:[%s113 + $0x24] sm:%s106]
                %126 = vst [vmem:[%s114 + $0x14] sm:%s106] %v125
                %v127 = vld [vmem:[%s113 + $0x28] sm:%s106]
                %128 = vst [vmem:[%s114 + $0x18] sm:%s106] %v127
                %v129 = vld [vmem:[%s113 + $0x2c] sm:%s106]
                %130 = vst [vmem:[%s114 + $0x1c] sm:%s106] %v129
                %v131 = vld [vmem:[%s113 + $0x40] sm:%s106]
                %132 = vst [vmem:[%s114 + $0x20] sm:%s106] %v131
                %v133 = vld [vmem:[%s113 + $0x44] sm:%s106]
                %134 = vst [vmem:[%s114 + $0x24] sm:%s106] %v133
                %v135 = vld [vmem:[%s113 + $0x48] sm:%s106]
                %136 = vst [vmem:[%s114 + $0x28] sm:%s106] %v135
                %v137 = vld [vmem:[%s113 + $0x4c] sm:%s106]
                %138 = vst [vmem:[%s114 + $0x2c] sm:%s106] %v137
              $region37: #{_lambda_.13} parent=31 // loop_footer
                %s112 = sadd.s32 1, %s108
              $region38: #{_lambda_.13} parent=31 // loop_footer_branch
                %107 = sbr.rel target = $region34
              $region39: #{_lambda_.13} parent=31 // loop_exit
                _
            $region32: #{_lambda_.13} parent=23 // pred_fallthru
              _
          $region24: #{_lambda_.13} parent=19 // pred_fallthru
            _
          %183 = vnop
        $region20: #{_lambda_.13} parent=15 // pred_fallthru
          _
      $region16: #{_lambda_.13} parent=5 // pred_fallthru
        _
      %p184 = scmp.le.s32.totalorder 1, %s8
      %p185 = scmp.lt.s32.totalorder %s8, 3
      %p186 = pnand %p184, %p185
      %p187 = pneg %p186
      // Predicated region
      $region58: #{_lambda_.13} parent=5 // pred_check
        _
      $region59: #{_lambda_.13} parent=5 // pred_check_branch
        %189 = sbr.rel (%p186) target = $region61
      $region60: #{_lambda_.13} parent=5 // pred_region
        %s190 = ssub.s32 %s8, 1
        %s191 = sand.u32 %s35, 1
        %s192 = sand.u32 %s35, 1
        %s193 = smul.addr %s192, 48
        %s194 = scalar_lea.vmem [#allocation3], %s193
        // Predicated region
        $region62: #{_lambda_.13} parent=60 // pred_check
          %p195 = pneg %p48
        $region63: #{_lambda_.13} parent=60 // pred_check_branch
          %197 = sbr.rel (%p195) target = $region65
        $region64: #{_lambda_.13} parent=60 // pred_region
          _
        $region65: #{_lambda_.13} parent=60 // pred_fallthru
          _
        %s198 = sand.u32 %s35, 1
        %s199 = sand.u32 %s35, 1
        %s200 = smul.addr %s199, 48
        %s201 = scalar_lea.vmem [#allocation3], %s200
        %p202 = pneg %p48
        %p203 = pneg %p45
        %p204 = pneg %p69
        %p205 = pneg %p66
        %p207 = scmp.eq.s32.totalorder %s17, 0
        %p208 = scmp.eq.s32.totalorder %s18, 0
        %p209 = pnand %p207, %p208
        %p210 = pneg %p209
        // Predicated region
        $region66: #{_lambda_.13} parent=60 // pred_check
          _
        $region67: #{_lambda_.13} parent=60 // pred_check_branch
          %212 = sbr.rel (%p209) target = $region69
        $region68: #{_lambda_.13} parent=60 // pred_region
          %vm213 = vcmask 0
          %214 = vst.msk [vmem:[#allocation4] sm:$0x1] %vm213, 0.0
        $region69: #{_lambda_.13} parent=60 // pred_fallthru
          _
        // Predicated region
        $region70: #{_lambda_.13} parent=60 // pred_check
          %p215 = pneg %p208
        $region71: #{_lambda_.13} parent=60 // pred_check_branch
          %217 = sbr.rel (%p215) target = $region73
        $region72: #{_lambda_.13} parent=60 // pred_region
          %vm218 = vcmask 785408
          %219 = vst.msk [vmem:[#allocation2] sm:$0xff] %vm218, 0.0
          %220 = vst.msk [vmem:[#allocation2 + $0x8] sm:$0xff] %vm218, 0.0
          %221 = vst.msk [vmem:[#allocation2 + $0x10] sm:$0xff] %vm218, 0.0
          %222 = vst.msk [vmem:[#allocation2 + $0x18] sm:$0xff] %vm218, 0.0
          %223 = vst.msk [vmem:[#allocation2 + $0x20] sm:$0xff] %vm218, 0.0
          %224 = vst.msk [vmem:[#allocation2 + $0x28] sm:$0xff] %vm218, 0.0
          %225 = vst.msk [vmem:[#allocation2 + $0x30] sm:$0xff] %vm218, 0.0
          %226 = vst.msk [vmem:[#allocation2 + $0x38] sm:$0xff] %vm218, 0.0
          %227 = vst.msk [vmem:[#allocation2 + $0x40] sm:$0xff] %vm218, 0.0
          %228 = vst.msk [vmem:[#allocation2 + $0x48] sm:$0xff] %vm218, 0.0
          %229 = vst.msk [vmem:[#allocation2 + $0x50] sm:$0xff] %vm218, 0.0
          %230 = vst.msk [vmem:[#allocation2 + $0x58] sm:$0xff] %vm218, 0.0
        $region73: #{_lambda_.13} parent=60 // pred_fallthru
          _
        %v231 = vld [vmem:[%s194] sm:$0xf]
        %v232 = vld [vmem:[%s194 + $0x4] sm:$0xf]
        %v233 = vld [vmem:[%s194 + $0x8] sm:$0xf]
        %v234 = vld [vmem:[%s194 + $0xc] sm:$0xf]
        %v235 = vld [vmem:[%s194 + $0x10] sm:$0xf]
        %v236 = vld [vmem:[%s194 + $0x14] sm:$0xf]
        %v237 = vld [vmem:[%s194 + $0x18] sm:$0xf]
        %v238 = vld [vmem:[%s194 + $0x1c] sm:$0xf]
        %v239 = vld [vmem:[%s194 + $0x20] sm:$0xf]
        %v240 = vld [vmem:[%s194 + $0x24] sm:$0xf]
        %v241 = vld [vmem:[%s194 + $0x28] sm:$0xf]
        %v242 = vld [vmem:[%s194 + $0x2c] sm:$0xf]
        %v243 = vld [vmem:[#allocation2] sm:$0xff]
        %v244 = vld [vmem:[#allocation2 + $0x8] sm:$0xff]
        %v245 = vld [vmem:[#allocation2 + $0x10] sm:$0xff]
        %v246 = vld [vmem:[#allocation2 + $0x18] sm:$0xff]
        %v247 = vld [vmem:[#allocation2 + $0x20] sm:$0xff]
        %v248 = vld [vmem:[#allocation2 + $0x28] sm:$0xff]
        %v249 = vld [vmem:[#allocation2 + $0x30] sm:$0xff]
        %v250 = vld [vmem:[#allocation2 + $0x38] sm:$0xff]
        %v251 = vld [vmem:[#allocation2 + $0x40] sm:$0xff]
        %v252 = vld [vmem:[#allocation2 + $0x48] sm:$0xff]
        %v253 = vld [vmem:[#allocation2 + $0x50] sm:$0xff]
        %v254 = vld [vmem:[#allocation2 + $0x58] sm:$0xff]
        %v267 = vunpack.c.l.b16 %v231
        %v268 = vunpack.c.l.b16 %v232
        %v269 = vunpack.c.l.b16 %v233
        %v270 = vunpack.c.l.b16 %v234
        %v271 = vunpack.c.l.b16 %v235
        %v272 = vunpack.c.l.b16 %v236
        %v273 = vunpack.c.l.b16 %v237
        %v274 = vunpack.c.l.b16 %v238
        %v275 = vunpack.c.l.b16 %v239
        %v276 = vunpack.c.l.b16 %v240
        %v277 = vunpack.c.l.b16 %v241
        %v278 = vunpack.c.l.b16 %v242
        %v279 = vpack.c.b16 %v268, %v267
        %v280 = vpack.c.b16 %v270, %v269
        %v281 = vpack.c.b16 %v272, %v271
        %v282 = vpack.c.b16 %v274, %v273
        %v283 = vpack.c.b16 %v276, %v275
        %v284 = vpack.c.b16 %v278, %v277
        %vm285 = vcmask 31744
        %v287 = vsel %vm285, %v279, 0
        %v290 = vsel %vm285, %v280, 0
        %v293 = vsel %vm285, %v281, 0
        %v296 = vsel %vm285, %v282, 0
        %v299 = vsel %vm285, %v283, 0
        %v302 = vsel %vm285, %v284, 0
        %304 = vmatpush.bf16.xpose.msra.mxu0 0
        %305 = vmatpush.bf16.xpose.msra.mxu0 0
        %306 = vmatpush.bf16.xpose.msra.mxu0 %v302
        %307 = vmatpush.bf16.xpose.msra.mxu0 %v299
        %308 = vmatpush.bf16.xpose.msra.mxu0 %v296
        %309 = vmatpush.bf16.xpose.msra.mxu0 %v293
        %310 = vmatpush.bf16.xpose.msra.mxu0 %v290
        %311 = vmatpush.bf16.xpose.msra.mxu0 %v287
        %312 = vmatmul.bf16.gmra.mxu0 %v287
        %v313 = vpop.f32.mrf.mxu0
        %v314 = vadd.f32 0.0, %v313
        %v315 = vpop.f32.mrf.mxu0
        %v316 = vadd.f32 0.0, %v315
        %317 = vmatmul.bf16.gmra.mxu0 %v290
        %v318 = vpop.f32.mrf.mxu0
        %v319 = vadd.f32 0.0, %v318
        %v320 = vpop.f32.mrf.mxu0
        %v321 = vadd.f32 0.0, %v320
        %322 = vmatmul.bf16.gmra.mxu0 %v293
        %v323 = vpop.f32.mrf.mxu0
        %v324 = vadd.f32 0.0, %v323
        %v325 = vpop.f32.mrf.mxu0
        %v326 = vadd.f32 0.0, %v325
        %327 = vmatmul.bf16.gmra.mxu0 %v296
        %v328 = vpop.f32.mrf.mxu0
        %v329 = vadd.f32 0.0, %v328
        %v330 = vpop.f32.mrf.mxu0
        %v331 = vadd.f32 0.0, %v330
        %332 = vmatmul.bf16.gmra.mxu0 %v299
        %v333 = vpop.f32.mrf.mxu0
        %v334 = vadd.f32 0.0, %v333
        %v335 = vpop.f32.mrf.mxu0
        %v336 = vadd.f32 0.0, %v335
        %337 = vmatmul.bf16.gmra.mxu0 %v302
        %v338 = vpop.f32.mrf.mxu0
        %v339 = vadd.f32 0.0, %v338
        %v340 = vpop.f32.mrf.mxu0
        %v341 = vadd.f32 0.0, %v340
        %342 = vdwg.mxu0
        %v343 = vadd.f32 %v243, %v314
        %v344 = vadd.f32 %v244, %v316
        %v345 = vadd.f32 %v245, %v319
        %v346 = vadd.f32 %v246, %v321
        %v347 = vadd.f32 %v247, %v324
        %v348 = vadd.f32 %v248, %v326
        %v349 = vadd.f32 %v249, %v329
        %v350 = vadd.f32 %v250, %v331
        %v351 = vadd.f32 %v251, %v334
        %v352 = vadd.f32 %v252, %v336
        %v353 = vadd.f32 %v253, %v339
        %v354 = vadd.f32 %v254, %v341
        %vm355 = vcmask 785408
        %356 = vst.msk [vmem:[#allocation2] sm:$0xff] %vm355, %v343
        %357 = vst.msk [vmem:[#allocation2 + $0x8] sm:$0xff] %vm355, %v344
        %358 = vst.msk [vmem:[#allocation2 + $0x10] sm:$0xff] %vm355, %v345
        %359 = vst.msk [vmem:[#allocation2 + $0x18] sm:$0xff] %vm355, %v346
        %360 = vst.msk [vmem:[#allocation2 + $0x20] sm:$0xff] %vm355, %v347
        %361 = vst.msk [vmem:[#allocation2 + $0x28] sm:$0xff] %vm355, %v348
        %362 = vst.msk [vmem:[#allocation2 + $0x30] sm:$0xff] %vm355, %v349
        %363 = vst.msk [vmem:[#allocation2 + $0x38] sm:$0xff] %vm355, %v350
        %364 = vst.msk [vmem:[#allocation2 + $0x40] sm:$0xff] %vm355, %v351
        %365 = vst.msk [vmem:[#allocation2 + $0x48] sm:$0xff] %vm355, %v352
        %366 = vst.msk [vmem:[#allocation2 + $0x50] sm:$0xff] %vm355, %v353
        %367 = vst.msk [vmem:[#allocation2 + $0x58] sm:$0xff] %vm355, %v354
        // Predicated region
        $region74: #{_lambda_.13} parent=60 // pred_check
          %p368 = pneg %p208
        $region75: #{_lambda_.13} parent=60 // pred_check_branch
          %370 = sbr.rel (%p368) target = $region77
        $region76: #{_lambda_.13} parent=60 // pred_region
          %v371 = vld [vmem:[#allocation2] sm:$0xff]
          %v372 = vld [vmem:[#allocation2 + $0x8] sm:$0xff]
          %v373 = vld [vmem:[#allocation2 + $0x10] sm:$0xff]
          %v374 = vld [vmem:[#allocation2 + $0x18] sm:$0xff]
          %v375 = vld [vmem:[#allocation2 + $0x20] sm:$0xff]
          %v376 = vld [vmem:[#allocation2 + $0x28] sm:$0xff]
          %v377 = vld [vmem:[#allocation2 + $0x30] sm:$0xff]
          %v378 = vld [vmem:[#allocation2 + $0x38] sm:$0xff]
          %v379 = vld [vmem:[#allocation2 + $0x40] sm:$0xff]
          %v380 = vld [vmem:[#allocation2 + $0x48] sm:$0xff]
          %v381 = vld [vmem:[#allocation2 + $0x50] sm:$0xff]
          %v382 = vld [vmem:[#allocation2 + $0x58] sm:$0xff]
          %v383 = vld [vmem:[#allocation4] sm:$0x1]
          %388 = vrot.lane.b32.xlu0 %v375, 96
          %v389 = vpop.permute.xlu0 %388
          %390 = vrot.lane.b32.xlu0 %v376, 96
          %v391 = vpop.permute.xlu0 %390
          %392 = vrot.lane.b32.xlu0 %v377, 96
          %v393 = vpop.permute.xlu0 %392
          %394 = vrot.lane.b32.xlu0 %v378, 96
          %v395 = vpop.permute.xlu0 %394
          %v400 = vsub.f32 %v371, %v389
          %v401 = vsub.f32 %v372, %v391
          %v402 = vsub.f32 %v373, %v393
          %v403 = vsub.f32 %v374, %v395
          %v404 = vand.u32 2147483647, %v400
          %v405 = vand.u32 2147483647, %v401
          %v406 = vand.u32 2147483647, %v402
          %v407 = vand.u32 2147483647, %v403
          %vm408 = vcmask 261120
          %v409 = vsel %vm408, %v404, 0.0
          %v410 = vsel %vm408, %v405, 0.0
          %v411 = vadd.f32 %v409, %v410
          %v412 = vsel %vm408, %v406, 0.0
          %v413 = vadd.f32 %v411, %v412
          %v414 = vsel %vm408, %v407, 0.0
          %v415 = vadd.f32 %v413, %v414
          %416 = vadd.xlane.f32.xlu0 %v415
          %v417 = vpop.xlane.xlu0 %416
          %v418 = vrot.slane %v417, 4
          %v419 = vadd.f32 %v417, %v418
          %v420 = vrot.slane %v419, 2
          %v421 = vadd.f32 %v419, %v420
          %v422 = vrot.slane %v421, 1
          %v423 = vadd.f32 %v421, %v422
          %s424 = vtos %v423
          %v425 = vstv %s424
          %426 = vrot.lane.b32.xlu0 %v375, 32
          %v427 = vpop.permute.xlu0 %426
          %428 = vrot.lane.b32.xlu0 %v376, 32
          %v429 = vpop.permute.xlu0 %428
          %430 = vrot.lane.b32.xlu0 %v377, 32
          %v431 = vpop.permute.xlu0 %430
          %432 = vrot.lane.b32.xlu0 %v378, 32
          %v433 = vpop.permute.xlu0 %432
          %v438 = vsub.f32 %v379, %v427
          %v439 = vsub.f32 %v380, %v429
          %v440 = vsub.f32 %v381, %v431
          %v441 = vsub.f32 %v382, %v433
          %v442 = vand.u32 2147483647, %v438
          %v443 = vand.u32 2147483647, %v439
          %v444 = vand.u32 2147483647, %v440
          %v445 = vand.u32 2147483647, %v441
          %450 = vrot.lane.b32.xlu0 %v442, 64
          %v451 = vpop.permute.xlu0 %450
          %452 = vrot.lane.b32.xlu0 %v443, 64
          %v453 = vpop.permute.xlu0 %452
          %454 = vrot.lane.b32.xlu0 %v444, 64
          %v455 = vpop.permute.xlu0 %454
          %456 = vrot.lane.b32.xlu0 %v445, 64
          %v457 = vpop.permute.xlu0 %456
          %v462 = vsel %vm408, %v451, 0.0
          %v463 = vsel %vm408, %v453, 0.0
          %v464 = vadd.f32 %v462, %v463
          %v465 = vsel %vm408, %v455, 0.0
          %v466 = vadd.f32 %v464, %v465
          %v467 = vsel %vm408, %v457, 0.0
          %v468 = vadd.f32 %v466, %v467
          %469 = vadd.xlane.f32.xlu0 %v468
          %v470 = vpop.xlane.xlu0 %469
          %v471 = vrot.slane %v470, 4
          %v472 = vadd.f32 %v470, %v471
          %v473 = vrot.slane %v472, 2
          %v474 = vadd.f32 %v472, %v473
          %v475 = vrot.slane %v474, 1
          %v476 = vadd.f32 %v474, %v475
          %s477 = vtos %v476
          %v478 = vstv %s477
          %v479 = vadd.f32 %v425, %v478
          %v480 = vadd.f32 %v383, %v479
          %vm481 = vcmask 0
          %482 = vst.msk [vmem:[#allocation4] sm:$0x1] %vm481, %v480
        $region77: #{_lambda_.13} parent=60 // pred_fallthru
          _
        // Predicated region
        $region78: #{_lambda_.13} parent=60 // pred_check
          %p483 = pneg %p66
        $region79: #{_lambda_.13} parent=60 // pred_check_branch
          %485 = sbr.rel (%p483) target = $region81
        $region80: #{_lambda_.13} parent=60 // pred_region
          %487 = vsyncadd [#allocation5], 0
          %s489 = sshll.u32 [#allocation4], 4
          %s490 = int_to_ptr.vmem [resolvable:$true] %s489
          %s491 = sshll.u32 %s1, 4
          %s492 = int_to_ptr.hbm [resolvable:$true] %s491
          %494 = dma.vmem_to_hbm [thread:$0]  %s490, 16, %s492, [#allocation5]
        $region81: #{_lambda_.13} parent=60 // pred_fallthru
          _
        // Predicated region
        $region82: #{_lambda_.13} parent=60 // pred_check
          %p495 = pneg %p66
        $region83: #{_lambda_.13} parent=60 // pred_check_branch
          %497 = sbr.rel (%p495) target = $region85
        $region84: #{_lambda_.13} parent=60 // pred_region
          %499 = dma.done [#allocation5], 16
        $region85: #{_lambda_.13} parent=60 // pred_fallthru
          _
      $region61: #{_lambda_.13} parent=5 // pred_fallthru
        _
      %p500 = scmp.le.s32.totalorder 2, %s8
      // Predicated region
      $region86: #{_lambda_.13} parent=5 // pred_check
        %p501 = pneg %p500
      $region87: #{_lambda_.13} parent=5 // pred_check_branch
        %503 = sbr.rel (%p501) target = $region89
      $region88: #{_lambda_.13} parent=5 // pred_region
        %s504 = ssub.s32 %s8, 2
      $region89: #{_lambda_.13} parent=5 // pred_fallthru
        _
    $region6: #{_lambda_.13} parent=1 // loop_footer
      %s12 = sadd.s32 1, %s8
    $region7: #{_lambda_.13} parent=1 // loop_footer_branch
      %7 = sbr.rel target = $region3
    $region8: #{_lambda_.13} parent=1 // loop_exit
      _
    %505 = vsyncpa [#allocation5], 1
    %s506 = scalar_lea.sflag [#allocation5], 1
    %507 = vsyncpa %s506, 1

// kernel: _lambda_.12
$region0: #{_lambda_.12}
  #allocation0 [shape = 'u32[]', space=smem, size = 0x4, offset = 0x4, fixed_abs, tag = 'smem constant byte address 0x4 - core index']
  #allocation1 [shape = 'u32[72,128]{1,0:T(1,128)}', space=vmem, size = 0x9000, scoped, tag = 'internal scratch']
  #allocation2 [shape = 'f32[48,48]{1,0:T(8,128)}', space=vmem, size = 0x6000, scoped, tag = 'scratch operand']
  %s0 = inlined_call_operand.vmem [shape: bf16[3,2,16,16], index: 0, kind: input, shape index: {}]
  %s1 = inlined_call_operand.hbm [shape: f32[1,1], index: 1, kind: output, shape index: {}]
  %s2 = sld [smem:[#allocation0]]
  $region90: #{_lambda_.12} parent=0
    _
  %s4 = ssub.s32 1, %s2
  %s5 = scalar_select 0, %s4, %s2
  $region1: #{_lambda_.12} parent=0
    #allocation3 [shape = 'u8[24576]{0}', space=vmem, size = 0x6000, scoped, tag = 'input window, operand 0']
    #allocation4 [shape = 'u8[512]{0}', space=vmem, size = 0x400, scoped, tag = 'output window, operand 0, single buffered']
    #allocation5 [shape = 's32[2]{0}', space=sflag, size = 0x8, scoped, tag = 'scoped memory for _lambda_.12']
    %6 = vsyncpa [#allocation5], 0
    loop: start=0, step=1, limit=4
    $region2: #{_lambda_.12} parent=1 // loop_pre_header
      _
    $region3: #{_lambda_.12} parent=1 // loop_header
      %s8 = sphi 0, %s12
      %p9 = scmp.ge.s32.totalorder %s8, 4
      %s15 = sphi 0, %s27
      %s16 = sphi 0, %s23
      %s17 = sphi 0, %s15
      %s18 = sphi 0, %s16
      %s19 = sphi 0, %s17
      %s20 = sphi 0, %s18
      %s32 = sphi 0, %s34
      %s35 = sphi 0, %s32
      %s36 = sphi 0, %s35
      %s52 = sphi 0, %s36
      %s56 = sphi 0, %s56
      %s58 = sphi 0, %s56
      %s59 = sphi 0, %s58
      %s73 = sphi 0, %s59
    $region4: #{_lambda_.12} parent=1 // loop_header_branch
      %11 = sbr.rel (%p9) target = $region8
    $region5: #{_lambda_.12} parent=1 // loop_body
      %s13 = ssub.s32 %s8, 1
      %s14 = ssub.s32 %s8, 2
      %s21 = sadd.s32 1, %s16
      %p22 = scmp.ge.s32.totalorder %s21, 1
      %s23 = scalar_select %p22, 0, %s21
      %s24 = sadd.s32 1, %s15
      %s25 = scalar_select %p22, %s24, %s15
      %p26 = scmp.ge.s32.totalorder %s25, 2
      %s27 = scalar_select %p26, 0, %s25
      %s28 = ssub.s32 %s15, %s27
      %s29 = ssub.s32 %s16, %s23
      %s30 = sor.u32 %s28, %s29
      %p31 = scmp.eq.s32.totalorder %s30, 0
      %s33 = sadd.s32 %s32, 1
      %s34 = scalar_select %p31, %s32, %s33
      %p37 = pneg %p31
      %p38 = scmp.eq.s32.totalorder %s8, 1
      %p39 = por %p37, %p38
      %p40 = scmp.ne.s32.totalorder %s32, %s35
      %p41 = scmp.eq.s32.totalorder %s8, 0
      %p42 = por %p40, %p41
      %p43 = scmp.ne.s32.totalorder %s32, %s35
      %p44 = scmp.eq.s32.totalorder %s13, 1
      %p45 = por %p43, %p44
      %p46 = scmp.ne.s32.totalorder %s35, %s36
      %p47 = scmp.eq.s32.totalorder %s13, 0
      %p48 = por %p46, %p47
      %p49 = scmp.ne.s32.totalorder %s35, %s36
      %p50 = scmp.eq.s32.totalorder %s14, 1
      %p51 = por %p49, %p50
      %p53 = scmp.ne.s32.totalorder %s36, %s52
      %p54 = scmp.eq.s32.totalorder %s14, 0
      %p55 = por %p53, %p54
      %s57 = sadd.s32 %s56, 1
      %p60 = scmp.eq.s32.totalorder %s8, 1
      %p61 = scmp.ne.s32.totalorder %s56, %s58
      %p62 = scmp.eq.s32.totalorder %s8, 0
      %p63 = por %p61, %p62
      %p64 = scmp.ne.s32.totalorder %s56, %s58
      %p65 = scmp.eq.s32.totalorder %s13, 1
      %p66 = por %p64, %p65
      %p67 = scmp.ne.s32.totalorder %s58, %s59
      %p68 = scmp.eq.s32.totalorder %s13, 0
      %p69 = por %p67, %p68
      %p70 = scmp.ne.s32.totalorder %s58, %s59
      %p71 = scmp.eq.s32.totalorder %s14, 1
      %p72 = por %p70, %p71
      %p74 = scmp.ne.s32.totalorder %s59, %s73
      %p75 = scmp.eq.s32.totalorder %s14, 0
      %p76 = por %p74, %p75
      %p77 = scmp.le.s32.totalorder 1, %s8
      %p78 = scmp.lt.s32.totalorder %s8, 3
      %p79 = pnand %p77, %p78
      %p80 = pneg %p79
      // Predicated region
      $region9: #{_lambda_.12} parent=5 // pred_check
        _
      $region10: #{_lambda_.12} parent=5 // pred_check_branch
        %82 = sbr.rel (%p79) target = $region12
      $region11: #{_lambda_.12} parent=5 // pred_region
        %s83 = ssub.s32 %s8, 1
      $region12: #{_lambda_.12} parent=5 // pred_fallthru
        _
      %p84 = scmp.lt.s32.totalorder %s8, 2
      // Predicated region
      $region13: #{_lambda_.12} parent=5 // pred_check
        %p85 = pneg %p84
      $region14: #{_lambda_.12} parent=5 // pred_check_branch
        %87 = sbr.rel (%p85) target = $region16
      $region15: #{_lambda_.12} parent=5 // pred_region
        // Predicated region
        $region17: #{_lambda_.12} parent=15 // pred_check
          %p88 = pneg %p42
        $region18: #{_lambda_.12} parent=15 // pred_check_branch
          %90 = sbr.rel (%p88) target = $region20
        $region19: #{_lambda_.12} parent=15 // pred_region
          %s91 = sand.u32 %s32, 1
          %s92 = sand.u32 %s32, 1
          %s93 = smul.addr %s92, 24
          %s94 = scalar_lea.vmem [#allocation3], %s93
          %s95 = smul.addr %s15, 2
          %s96 = sadd.s32 %s16, %s95
          %s97 = smul.addr %s96, 4
          %s98 = scalar_lea.vmem %s0, %s97
          // Predicated region
          $region21: #{_lambda_.12} parent=19 // pred_check
            _
          $region22: #{_lambda_.12} parent=19 // pred_check_branch
            %100 = sbr.rel (0) target = $region24
          $region23: #{_lambda_.12} parent=19 // pred_region
            // Predicated region
            $region25: #{_lambda_.12} parent=23 // pred_check
              _
            $region26: #{_lambda_.12} parent=23 // pred_check_branch
              %102 = sbr.rel target = $region28
            $region27: #{_lambda_.12} parent=23 // pred_region
              // Predicated region
              $region40: #{_lambda_.12} parent=27 // pred_check
                _
              $region41: #{_lambda_.12} parent=27 // pred_check_branch
                %128 = sbr.rel (0) target = $region43
              $region42: #{_lambda_.12} parent=27 // pred_region
                loop: start=0, step=1, limit=1
                $region44: #{_lambda_.12} parent=42 // loop_pre_header
                  _
                $region45: #{_lambda_.12} parent=42 // loop_header
                  %s130 = sphi 0, %s134
                  %p131 = scmp.ge.s32.totalorder %s130, 1
                  %s135 = sphi %s98, %s98
                  %s136 = sphi %s94, %s94
                $region46: #{_lambda_.12} parent=42 // loop_header_branch
                  %133 = sbr.rel (%p131) target = $region50
                $region47: #{_lambda_.12} parent=42 // loop_body
                  _
                $region48: #{_lambda_.12} parent=42 // loop_footer
                  %s134 = sadd.s32 1, %s130
                $region49: #{_lambda_.12} parent=42 // loop_footer_branch
                  %129 = sbr.rel target = $region45
                $region50: #{_lambda_.12} parent=42 // loop_exit
                  _
                %s138 = ssub.s32 16, 1
                loop: start=0, step=1, limit=1
                $region51: #{_lambda_.12} parent=42 // loop_pre_header
                  _
                $region52: #{_lambda_.12} parent=42 // loop_header
                  %s140 = sphi 0, %s144
                  %p141 = scmp.ge.s32.totalorder %s140, 1
                  %s145 = sphi %s98, %s98
                  %s146 = sphi %s94, %s94
                $region53: #{_lambda_.12} parent=42 // loop_header_branch
                  %143 = sbr.rel (%p141) target = $region57
                $region54: #{_lambda_.12} parent=42 // loop_body
                  %v147 = vld [vmem:[%s145] sm:%s138]
                  %148 = vst [vmem:[%s146] sm:%s138] %v147
                  %v149 = vld [vmem:[%s145 + $0x4] sm:%s138]
                  %150 = vst [vmem:[%s146 + $0x4] sm:%s138] %v149
                  %v151 = vld [vmem:[%s145 + $0x10] sm:%s138]
                  %152 = vst [vmem:[%s146 + $0x8] sm:%s138] %v151
                  %v153 = vld [vmem:[%s145 + $0x14] sm:%s138]
                  %154 = vst [vmem:[%s146 + $0xc] sm:%s138] %v153
                  %v155 = vld [vmem:[%s145 + $0x20] sm:%s138]
                  %156 = vst [vmem:[%s146 + $0x10] sm:%s138] %v155
                  %v157 = vld [vmem:[%s145 + $0x24] sm:%s138]
                  %158 = vst [vmem:[%s146 + $0x14] sm:%s138] %v157
                $region55: #{_lambda_.12} parent=42 // loop_footer
                  %s144 = sadd.s32 1, %s140
                $region56: #{_lambda_.12} parent=42 // loop_footer_branch
                  %139 = sbr.rel target = $region52
                $region57: #{_lambda_.12} parent=42 // loop_exit
                  _
              $region43: #{_lambda_.12} parent=27 // pred_fallthru
                _
            $region28: #{_lambda_.12} parent=23 // pred_fallthru
              _
            // Predicated region
            $region29: #{_lambda_.12} parent=23 // pred_check
              _
            $region30: #{_lambda_.12} parent=23 // pred_check_branch
              %104 = sbr.rel (0) target = $region32
            $region31: #{_lambda_.12} parent=23 // pred_region
              %s106 = ssub.s32 16, 1
              loop: start=0, step=1, limit=1
              $region33: #{_lambda_.12} parent=31 // loop_pre_header
                _
              $region34: #{_lambda_.12} parent=31 // loop_header
                %s108 = sphi 0, %s112
                %p109 = scmp.ge.s32.totalorder %s108, 1
                %s113 = sphi %s98, %s98
                %s114 = sphi %s94, %s94
              $region35: #{_lambda_.12} parent=31 // loop_header_branch
                %111 = sbr.rel (%p109) target = $region39
              $region36: #{_lambda_.12} parent=31 // loop_body
                %v115 = vld [vmem:[%s113] sm:%s106]
                %116 = vst [vmem:[%s114] sm:%s106] %v115
                %v117 = vld [vmem:[%s113 + $0x4] sm:%s106]
                %118 = vst [vmem:[%s114 + $0x4] sm:%s106] %v117
                %v119 = vld [vmem:[%s113 + $0x10] sm:%s106]
                %120 = vst [vmem:[%s114 + $0x8] sm:%s106] %v119
                %v121 = vld [vmem:[%s113 + $0x14] sm:%s106]
                %122 = vst [vmem:[%s114 + $0xc] sm:%s106] %v121
                %v123 = vld [vmem:[%s113 + $0x20] sm:%s106]
                %124 = vst [vmem:[%s114 + $0x10] sm:%s106] %v123
                %v125 = vld [vmem:[%s113 + $0x24] sm:%s106]
                %126 = vst [vmem:[%s114 + $0x14] sm:%s106] %v125
              $region37: #{_lambda_.12} parent=31 // loop_footer
                %s112 = sadd.s32 1, %s108
              $region38: #{_lambda_.12} parent=31 // loop_footer_branch
                %107 = sbr.rel target = $region34
              $region39: #{_lambda_.12} parent=31 // loop_exit
                _
            $region32: #{_lambda_.12} parent=23 // pred_fallthru
              _
          $region24: #{_lambda_.12} parent=19 // pred_fallthru
            _
          %159 = vnop
        $region20: #{_lambda_.12} parent=15 // pred_fallthru
          _
      $region16: #{_lambda_.12} parent=5 // pred_fallthru
        _
      %p160 = scmp.le.s32.totalorder 1, %s8
      %p161 = scmp.lt.s32.totalorder %s8, 3
      %p162 = pnand %p160, %p161
      %p163 = pneg %p162
      // Predicated region
      $region58: #{_lambda_.12} parent=5 // pred_check
        _
      $region59: #{_lambda_.12} parent=5 // pred_check_branch
        %165 = sbr.rel (%p162) target = $region61
      $region60: #{_lambda_.12} parent=5 // pred_region
        %s166 = ssub.s32 %s8, 1
        %s167 = sand.u32 %s35, 1
        %s168 = sand.u32 %s35, 1
        %s169 = smul.addr %s168, 24
        %s170 = scalar_lea.vmem [#allocation3], %s169
        // Predicated region
        $region62: #{_lambda_.12} parent=60 // pred_check
          %p171 = pneg %p48
        $region63: #{_lambda_.12} parent=60 // pred_check_branch
          %173 = sbr.rel (%p171) target = $region65
        $region64: #{_lambda_.12} parent=60 // pred_region
          _
        $region65: #{_lambda_.12} parent=60 // pred_fallthru
          _
        %s174 = sand.u32 %s35, 1
        %s175 = sand.u32 %s35, 1
        %s176 = smul.addr %s175, 24
        %s177 = scalar_lea.vmem [#allocation3], %s176
        %p178 = pneg %p48
        %p179 = pneg %p45
        %p180 = pneg %p69
        %p181 = pneg %p66
        %p183 = scmp.eq.s32.totalorder %s17, 0
        %p184 = scmp.eq.s32.totalorder %s18, 0
        %p185 = pnand %p183, %p184
        %p186 = pneg %p185
        // Predicated region
        $region66: #{_lambda_.12} parent=60 // pred_check
          _
        $region67: #{_lambda_.12} parent=60 // pred_check_branch
          %188 = sbr.rel (%p185) target = $region69
        $region68: #{_lambda_.12} parent=60 // pred_region
          %vm189 = vcmask 0
          %190 = vst.msk [vmem:[#allocation4] sm:$0x1] %vm189, 0.0
        $region69: #{_lambda_.12} parent=60 // pred_fallthru
          _
        // Predicated region
        $region70: #{_lambda_.12} parent=60 // pred_check
          %p191 = pneg %p184
        $region71: #{_lambda_.12} parent=60 // pred_check_branch
          %193 = sbr.rel (%p191) target = $region73
        $region72: #{_lambda_.12} parent=60 // pred_region
          %vm194 = vcmask 392192
          %195 = vst.msk [vmem:[#allocation2] sm:$0xff] %vm194, 0.0
          %196 = vst.msk [vmem:[#allocation2 + $0x8] sm:$0xff] %vm194, 0.0
          %197 = vst.msk [vmem:[#allocation2 + $0x10] sm:$0xff] %vm194, 0.0
          %198 = vst.msk [vmem:[#allocation2 + $0x18] sm:$0xff] %vm194, 0.0
          %199 = vst.msk [vmem:[#allocation2 + $0x20] sm:$0xff] %vm194, 0.0
          %200 = vst.msk [vmem:[#allocation2 + $0x28] sm:$0xff] %vm194, 0.0
        $region73: #{_lambda_.12} parent=60 // pred_fallthru
          _
        %v201 = vld [vmem:[%s170] sm:$0xf]
        %v202 = vld [vmem:[%s170 + $0x4] sm:$0xf]
        %v203 = vld [vmem:[%s170 + $0x8] sm:$0xf]
        %v204 = vld [vmem:[%s170 + $0xc] sm:$0xf]
        %v205 = vld [vmem:[%s170 + $0x10] sm:$0xf]
        %v206 = vld [vmem:[%s170 + $0x14] sm:$0xf]
        %v207 = vld [vmem:[#allocation2] sm:$0xff]
        %v208 = vld [vmem:[#allocation2 + $0x8] sm:$0xff]
        %v209 = vld [vmem:[#allocation2 + $0x10] sm:$0xff]
        %v210 = vld [vmem:[#allocation2 + $0x18] sm:$0xff]
        %v211 = vld [vmem:[#allocation2 + $0x20] sm:$0xff]
        %v212 = vld [vmem:[#allocation2 + $0x28] sm:$0xff]
        %v219 = vunpack.c.l.b16 %v201
        %v220 = vunpack.c.l.b16 %v202
        %v221 = vunpack.c.l.b16 %v203
        %v222 = vunpack.c.l.b16 %v204
        %v223 = vunpack.c.l.b16 %v205
        %v224 = vunpack.c.l.b16 %v206
        %v225 = vpack.c.b16 %v220, %v219
        %v226 = vpack.c.b16 %v222, %v221
        %v227 = vpack.c.b16 %v224, %v223
        %vm228 = vcmask 130048
        %v230 = vsel %vm228, %v225, 0
        %v233 = vsel %vm228, %v226, 0
        %v236 = vsel %vm228, %v227, 0
        %238 = vmatpush.bf16.xpose.msra.mxu0 0
        %239 = vmatpush.bf16.xpose.msra.mxu0 0
        %240 = vmatpush.bf16.xpose.msra.mxu0 0
        %241 = vmatpush.bf16.xpose.msra.mxu0 0
        %242 = vmatpush.bf16.xpose.msra.mxu0 0
        %243 = vmatpush.bf16.xpose.msra.mxu0 %v236
        %244 = vmatpush.bf16.xpose.msra.mxu0 %v233
        %245 = vmatpush.bf16.xpose.msra.mxu0 %v230
        %246 = vmatmul.bf16.gmra.mxu0 %v230
        %v247 = vpop.f32.mrf.mxu0
        %v248 = vadd.f32 0.0, %v247
        %v249 = vpop.f32.mrf.mxu0
        %v250 = vadd.f32 0.0, %v249
        %251 = vmatmul.bf16.gmra.mxu0 %v233
        %v252 = vpop.f32.mrf.mxu0
        %v253 = vadd.f32 0.0, %v252
        %v254 = vpop.f32.mrf.mxu0
        %v255 = vadd.f32 0.0, %v254
        %256 = vmatmul.bf16.gmra.mxu0 %v236
        %v257 = vpop.f32.mrf.mxu0
        %v258 = vadd.f32 0.0, %v257
        %v259 = vpop.f32.mrf.mxu0
        %v260 = vadd.f32 0.0, %v259
        %261 = vdwg.mxu0
        %v262 = vadd.f32 %v207, %v248
        %v263 = vadd.f32 %v208, %v250
        %v264 = vadd.f32 %v209, %v253
        %v265 = vadd.f32 %v210, %v255
        %v266 = vadd.f32 %v211, %v258
        %v267 = vadd.f32 %v212, %v260
        %vm268 = vcmask 392192
        %269 = vst.msk [vmem:[#allocation2] sm:$0xff] %vm268, %v262
        %270 = vst.msk [vmem:[#allocation2 + $0x8] sm:$0xff] %vm268, %v263
        %271 = vst.msk [vmem:[#allocation2 + $0x10] sm:$0xff] %vm268, %v264
        %272 = vst.msk [vmem:[#allocation2 + $0x18] sm:$0xff] %vm268, %v265
        %273 = vst.msk [vmem:[#allocation2 + $0x20] sm:$0xff] %vm268, %v266
        %274 = vst.msk [vmem:[#allocation2 + $0x28] sm:$0xff] %vm268, %v267
        // Predicated region
        $region74: #{_lambda_.12} parent=60 // pred_check
          %p275 = pneg %p184
        $region75: #{_lambda_.12} parent=60 // pred_check_branch
          %277 = sbr.rel (%p275) target = $region77
        $region76: #{_lambda_.12} parent=60 // pred_region
          %v278 = vld [vmem:[#allocation2] sm:$0xff]
          %v279 = vld [vmem:[#allocation2 + $0x8] sm:$0xff]
          %v280 = vld [vmem:[#allocation2 + $0x10] sm:$0xff]
          %v281 = vld [vmem:[#allocation2 + $0x18] sm:$0xff]
          %v282 = vld [vmem:[#allocation2 + $0x20] sm:$0xff]
          %v283 = vld [vmem:[#allocation2 + $0x28] sm:$0xff]
          %v284 = vld [vmem:[#allocation4] sm:$0x1]
          %287 = vrot.lane.b32.xlu0 %v280, 112
          %v288 = vpop.permute.xlu0 %287
          %289 = vrot.lane.b32.xlu0 %v281, 112
          %v290 = vpop.permute.xlu0 %289
          %v293 = vsub.f32 %v278, %v288
          %v294 = vsub.f32 %v279, %v290
          %v295 = vand.u32 2147483647, %v293
          %v296 = vand.u32 2147483647, %v294
          %v297 = vsel %vm228, %v295, 0.0
          %v298 = vsel %vm228, %v296, 0.0
          %v299 = vadd.f32 %v297, %v298
          %300 = vadd.xlane.f32.xlu0 %v299
          %v301 = vpop.xlane.xlu0 %300
          %v302 = vrot.slane %v301, 4
          %v303 = vadd.f32 %v301, %v302
          %v304 = vrot.slane %v303, 2
          %v305 = vadd.f32 %v303, %v304
          %v306 = vrot.slane %v305, 1
          %v307 = vadd.f32 %v305, %v306
          %s308 = vtos %v307
          %v309 = vstv %s308
          %310 = vrot.lane.b32.xlu0 %v280, 16
          %v311 = vpop.permute.xlu0 %310
          %312 = vrot.lane.b32.xlu0 %v281, 16
          %v313 = vpop.permute.xlu0 %312
          %v316 = vsub.f32 %v282, %v311
          %v317 = vsub.f32 %v283, %v313
          %v318 = vand.u32 2147483647, %v316
          %v319 = vand.u32 2147483647, %v317
          %322 = vrot.lane.b32.xlu0 %v318, 96
          %v323 = vpop.permute.xlu0 %322
          %324 = vrot.lane.b32.xlu0 %v319, 96
          %v325 = vpop.permute.xlu0 %324
          %v328 = vsel %vm228, %v323, 0.0
          %v329 = vsel %vm228, %v325, 0.0
          %v330 = vadd.f32 %v328, %v329
          %331 = vadd.xlane.f32.xlu0 %v330
          %v332 = vpop.xlane.xlu0 %331
          %v333 = vrot.slane %v332, 4
          %v334 = vadd.f32 %v332, %v333
          %v335 = vrot.slane %v334, 2
          %v336 = vadd.f32 %v334, %v335
          %v337 = vrot.slane %v336, 1
          %v338 = vadd.f32 %v336, %v337
          %s339 = vtos %v338
          %v340 = vstv %s339
          %v341 = vadd.f32 %v309, %v340
          %v342 = vadd.f32 %v284, %v341
          %vm343 = vcmask 0
          %344 = vst.msk [vmem:[#allocation4] sm:$0x1] %vm343, %v342
        $region77: #{_lambda_.12} parent=60 // pred_fallthru
          _
        // Predicated region
        $region78: #{_lambda_.12} parent=60 // pred_check
          %p345 = pneg %p66
        $region79: #{_lambda_.12} parent=60 // pred_check_branch
          %347 = sbr.rel (%p345) target = $region81
        $region80: #{_lambda_.12} parent=60 // pred_region
          %349 = vsyncadd [#allocation5], 0
          %s351 = sshll.u32 [#allocation4], 4
          %s352 = int_to_ptr.vmem [resolvable:$true] %s351
          %s353 = sshll.u32 %s1, 4
          %s354 = int_to_ptr.hbm [resolvable:$true] %s353
          %356 = dma.vmem_to_hbm [thread:$0]  %s352, 16, %s354, [#allocation5]
        $region81: #{_lambda_.12} parent=60 // pred_fallthru
          _
        // Predicated region
        $region82: #{_lambda_.12} parent=60 // pred_check
          %p357 = pneg %p66
        $region83: #{_lambda_.12} parent=60 // pred_check_branch
          %359 = sbr.rel (%p357) target = $region85
        $region84: #{_lambda_.12} parent=60 // pred_region
          %361 = dma.done [#allocation5], 16
        $region85: #{_lambda_.12} parent=60 // pred_fallthru
          _
      $region61: #{_lambda_.12} parent=5 // pred_fallthru
        _
      %p362 = scmp.le.s32.totalorder 2, %s8
      // Predicated region
      $region86: #{_lambda_.12} parent=5 // pred_check
        %p363 = pneg %p362
      $region87: #{_lambda_.12} parent=5 // pred_check_branch
        %365 = sbr.rel (%p363) target = $region89
      $region88: #{_lambda_.12} parent=5 // pred_region
        %s366 = ssub.s32 %s8, 2
      $region89: #{_lambda_.12} parent=5 // pred_fallthru
        _
    $region6: #{_lambda_.12} parent=1 // loop_footer
      %s12 = sadd.s32 1, %s8
    $region7: #{_lambda_.12} parent=1 // loop_footer_branch
      %7 = sbr.rel target = $region3
    $region8: #{_lambda_.12} parent=1 // loop_exit
      _
    %367 = vsyncpa [#allocation5], 1
    %s368 = scalar_lea.sflag [#allocation5], 1
    %369 = vsyncpa %s368, 1

// kernel: _lambda_.11
$region0: #{_lambda_.11}
  #allocation0 [shape = 'u32[]', space=smem, size = 0x4, offset = 0x4, fixed_abs, tag = 'smem constant byte address 0x4 - core index']
  #allocation1 [shape = 'u32[72,128]{1,0:T(1,128)}', space=vmem, size = 0x9000, scoped, tag = 'internal scratch']
  #allocation2 [shape = 'f32[24,24]{1,0:T(8,128)}', space=vmem, size = 0x3000, scoped, tag = 'scratch operand']
  %s0 = inlined_call_operand.vmem [shape: bf16[3,2,8,64], index: 0, kind: input, shape index: {}]
  %s1 = inlined_call_operand.hbm [shape: f32[1,1], index: 1, kind: output, shape index: {}]
  %s2 = sld [smem:[#allocation0]]
  $region90: #{_lambda_.11} parent=0
    _
  %s4 = ssub.s32 1, %s2
  %s5 = scalar_select 0, %s4, %s2
  $region1: #{_lambda_.11} parent=0
    #allocation3 [shape = 'u8[12288]{0}', space=vmem, size = 0x3000, scoped, tag = 'input window, operand 0']
    #allocation4 [shape = 'u8[512]{0}', space=vmem, size = 0x400, scoped, tag = 'output window, operand 0, single buffered']
    #allocation5 [shape = 's32[2]{0}', space=sflag, size = 0x8, scoped, tag = 'scoped memory for _lambda_.11']
    %6 = vsyncpa [#allocation5], 0
    loop: start=0, step=1, limit=4
    $region2: #{_lambda_.11} parent=1 // loop_pre_header
      _
    $region3: #{_lambda_.11} parent=1 // loop_header
      %s8 = sphi 0, %s12
      %p9 = scmp.ge.s32.totalorder %s8, 4
      %s15 = sphi 0, %s27
      %s16 = sphi 0, %s23
      %s17 = sphi 0, %s15
      %s18 = sphi 0, %s16
      %s19 = sphi 0, %s17
      %s20 = sphi 0, %s18
      %s32 = sphi 0, %s34
      %s35 = sphi 0, %s32
      %s36 = sphi 0, %s35
      %s52 = sphi 0, %s36
      %s56 = sphi 0, %s56
      %s58 = sphi 0, %s56
      %s59 = sphi 0, %s58
      %s73 = sphi 0, %s59
    $region4: #{_lambda_.11} parent=1 // loop_header_branch
      %11 = sbr.rel (%p9) target = $region8
    $region5: #{_lambda_.11} parent=1 // loop_body
      %s13 = ssub.s32 %s8, 1
      %s14 = ssub.s32 %s8, 2
      %s21 = sadd.s32 1, %s16
      %p22 = scmp.ge.s32.totalorder %s21, 1
      %s23 = scalar_select %p22, 0, %s21
      %s24 = sadd.s32 1, %s15
      %s25 = scalar_select %p22, %s24, %s15
      %p26 = scmp.ge.s32.totalorder %s25, 2
      %s27 = scalar_select %p26, 0, %s25
      %s28 = ssub.s32 %s15, %s27
      %s29 = ssub.s32 %s16, %s23
      %s30 = sor.u32 %s28, %s29
      %p31 = scmp.eq.s32.totalorder %s30, 0
      %s33 = sadd.s32 %s32, 1
      %s34 = scalar_select %p31, %s32, %s33
      %p37 = pneg %p31
      %p38 = scmp.eq.s32.totalorder %s8, 1
      %p39 = por %p37, %p38
      %p40 = scmp.ne.s32.totalorder %s32, %s35
      %p41 = scmp.eq.s32.totalorder %s8, 0
      %p42 = por %p40, %p41
      %p43 = scmp.ne.s32.totalorder %s32, %s35
      %p44 = scmp.eq.s32.totalorder %s13, 1
      %p45 = por %p43, %p44
      %p46 = scmp.ne.s32.totalorder %s35, %s36
      %p47 = scmp.eq.s32.totalorder %s13, 0
      %p48 = por %p46, %p47
      %p49 = scmp.ne.s32.totalorder %s35, %s36
      %p50 = scmp.eq.s32.totalorder %s14, 1
      %p51 = por %p49, %p50
      %p53 = scmp.ne.s32.totalorder %s36, %s52
      %p54 = scmp.eq.s32.totalorder %s14, 0
      %p55 = por %p53, %p54
      %s57 = sadd.s32 %s56, 1
      %p60 = scmp.eq.s32.totalorder %s8, 1
      %p61 = scmp.ne.s32.totalorder %s56, %s58
      %p62 = scmp.eq.s32.totalorder %s8, 0
      %p63 = por %p61, %p62
      %p64 = scmp.ne.s32.totalorder %s56, %s58
      %p65 = scmp.eq.s32.totalorder %s13, 1
      %p66 = por %p64, %p65
      %p67 = scmp.ne.s32.totalorder %s58, %s59
      %p68 = scmp.eq.s32.totalorder %s13, 0
      %p69 = por %p67, %p68
      %p70 = scmp.ne.s32.totalorder %s58, %s59
      %p71 = scmp.eq.s32.totalorder %s14, 1
      %p72 = por %p70, %p71
      %p74 = scmp.ne.s32.totalorder %s59, %s73
      %p75 = scmp.eq.s32.totalorder %s14, 0
      %p76 = por %p74, %p75
      %p77 = scmp.le.s32.totalorder 1, %s8
      %p78 = scmp.lt.s32.totalorder %s8, 3
      %p79 = pnand %p77, %p78
      %p80 = pneg %p79
      // Predicated region
      $region9: #{_lambda_.11} parent=5 // pred_check
        _
      $region10: #{_lambda_.11} parent=5 // pred_check_branch
        %82 = sbr.rel (%p79) target = $region12
      $region11: #{_lambda_.11} parent=5 // pred_region
        %s83 = ssub.s32 %s8, 1
      $region12: #{_lambda_.11} parent=5 // pred_fallthru
        _
      %p84 = scmp.lt.s32.totalorder %s8, 2
      // Predicated region
      $region13: #{_lambda_.11} parent=5 // pred_check
        %p85 = pneg %p84
      $region14: #{_lambda_.11} parent=5 // pred_check_branch
        %87 = sbr.rel (%p85) target = $region16
      $region15: #{_lambda_.11} parent=5 // pred_region
        // Predicated region
        $region17: #{_lambda_.11} parent=15 // pred_check
          %p88 = pneg %p42
        $region18: #{_lambda_.11} parent=15 // pred_check_branch
          %90 = sbr.rel (%p88) target = $region20
        $region19: #{_lambda_.11} parent=15 // pred_region
          %s91 = sand.u32 %s32, 1
          %s92 = sand.u32 %s32, 1
          %s93 = smul.addr %s92, 12
          %s94 = scalar_lea.vmem [#allocation3], %s93
          %s95 = sadd.s32 %s16, %s15
          %s96 = smul.addr %s95, 4
          %s97 = scalar_lea.vmem %s0, %s96
          // Predicated region
          $region21: #{_lambda_.11} parent=19 // pred_check
            _
          $region22: #{_lambda_.11} parent=19 // pred_check_branch
            %99 = sbr.rel (0) target = $region24
          $region23: #{_lambda_.11} parent=19 // pred_region
            // Predicated region
            $region25: #{_lambda_.11} parent=23 // pred_check
              _
            $region26: #{_lambda_.11} parent=23 // pred_check_branch
              %101 = sbr.rel target = $region28
            $region27: #{_lambda_.11} parent=23 // pred_region
              // Predicated region
              $region40: #{_lambda_.11} parent=27 // pred_check
                _
              $region41: #{_lambda_.11} parent=27 // pred_check_branch
                %121 = sbr.rel (0) target = $region43
              $region42: #{_lambda_.11} parent=27 // pred_region
                loop: start=0, step=1, limit=1
                $region44: #{_lambda_.11} parent=42 // loop_pre_header
                  _
                $region45: #{_lambda_.11} parent=42 // loop_header
                  %s123 = sphi 0, %s127
                  %p124 = scmp.ge.s32.totalorder %s123, 1
                  %s128 = sphi %s97, %s97
                  %s129 = sphi %s94, %s94
                $region46: #{_lambda_.11} parent=42 // loop_header_branch
                  %126 = sbr.rel (%p124) target = $region50
                $region47: #{_lambda_.11} parent=42 // loop_body
                  _
                $region48: #{_lambda_.11} parent=42 // loop_footer
                  %s127 = sadd.s32 1, %s123
                $region49: #{_lambda_.11} parent=42 // loop_footer_branch
                  %122 = sbr.rel target = $region45
                $region50: #{_lambda_.11} parent=42 // loop_exit
                  _
                %s131 = ssub.s32 16, 1
                loop: start=0, step=1, limit=1
                $region51: #{_lambda_.11} parent=42 // loop_pre_header
                  _
                $region52: #{_lambda_.11} parent=42 // loop_header
                  %s133 = sphi 0, %s137
                  %p134 = scmp.ge.s32.totalorder %s133, 1
                  %s138 = sphi %s97, %s97
                  %s139 = sphi %s94, %s94
                $region53: #{_lambda_.11} parent=42 // loop_header_branch
                  %136 = sbr.rel (%p134) target = $region57
                $region54: #{_lambda_.11} parent=42 // loop_body
                  %v140 = vld [vmem:[%s138] sm:%s131]
                  %141 = vst [vmem:[%s139] sm:%s131] %v140
                  %v142 = vld [vmem:[%s138 + $0x8] sm:%s131]
                  %143 = vst [vmem:[%s139 + $0x4] sm:%s131] %v142
                  %v144 = vld [vmem:[%s138 + $0x10] sm:%s131]
                  %145 = vst [vmem:[%s139 + $0x8] sm:%s131] %v144
                $region55: #{_lambda_.11} parent=42 // loop_footer
                  %s137 = sadd.s32 1, %s133
                $region56: #{_lambda_.11} parent=42 // loop_footer_branch
                  %132 = sbr.rel target = $region52
                $region57: #{_lambda_.11} parent=42 // loop_exit
                  _
              $region43: #{_lambda_.11} parent=27 // pred_fallthru
                _
            $region28: #{_lambda_.11} parent=23 // pred_fallthru
              _
            // Predicated region
            $region29: #{_lambda_.11} parent=23 // pred_check
              _
            $region30: #{_lambda_.11} parent=23 // pred_check_branch
              %103 = sbr.rel (0) target = $region32
            $region31: #{_lambda_.11} parent=23 // pred_region
              %s105 = ssub.s32 16, 1
              loop: start=0, step=1, limit=1
              $region33: #{_lambda_.11} parent=31 // loop_pre_header
                _
              $region34: #{_lambda_.11} parent=31 // loop_header
                %s107 = sphi 0, %s111
                %p108 = scmp.ge.s32.totalorder %s107, 1
                %s112 = sphi %s97, %s97
                %s113 = sphi %s94, %s94
              $region35: #{_lambda_.11} parent=31 // loop_header_branch
                %110 = sbr.rel (%p108) target = $region39
              $region36: #{_lambda_.11} parent=31 // loop_body
                %v114 = vld [vmem:[%s112] sm:%s105]
                %115 = vst [vmem:[%s113] sm:%s105] %v114
                %v116 = vld [vmem:[%s112 + $0x8] sm:%s105]
                %117 = vst [vmem:[%s113 + $0x4] sm:%s105] %v116
                %v118 = vld [vmem:[%s112 + $0x10] sm:%s105]
                %119 = vst [vmem:[%s113 + $0x8] sm:%s105] %v118
              $region37: #{_lambda_.11} parent=31 // loop_footer
                %s111 = sadd.s32 1, %s107
              $region38: #{_lambda_.11} parent=31 // loop_footer_branch
                %106 = sbr.rel target = $region34
              $region39: #{_lambda_.11} parent=31 // loop_exit
                _
            $region32: #{_lambda_.11} parent=23 // pred_fallthru
              _
          $region24: #{_lambda_.11} parent=19 // pred_fallthru
            _
          %146 = vnop
        $region20: #{_lambda_.11} parent=15 // pred_fallthru
          _
      $region16: #{_lambda_.11} parent=5 // pred_fallthru
        _
      %p147 = scmp.le.s32.totalorder 1, %s8
      %p148 = scmp.lt.s32.totalorder %s8, 3
      %p149 = pnand %p147, %p148
      %p150 = pneg %p149
      // Predicated region
      $region58: #{_lambda_.11} parent=5 // pred_check
        _
      $region59: #{_lambda_.11} parent=5 // pred_check_branch
        %152 = sbr.rel (%p149) target = $region61
      $region60: #{_lambda_.11} parent=5 // pred_region
        %s153 = ssub.s32 %s8, 1
        %s154 = sand.u32 %s35, 1
        %s155 = sand.u32 %s35, 1
        %s156 = smul.addr %s155, 12
        %s157 = scalar_lea.vmem [#allocation3], %s156
        // Predicated region
        $region62: #{_lambda_.11} parent=60 // pred_check
          %p158 = pneg %p48
        $region63: #{_lambda_.11} parent=60 // pred_check_branch
          %160 = sbr.rel (%p158) target = $region65
        $region64: #{_lambda_.11} parent=60 // pred_region
          _
        $region65: #{_lambda_.11} parent=60 // pred_fallthru
          _
        %s161 = sand.u32 %s35, 1
        %s162 = sand.u32 %s35, 1
        %s163 = smul.addr %s162, 12
        %s164 = scalar_lea.vmem [#allocation3], %s163
        %p165 = pneg %p48
        %p166 = pneg %p45
        %p167 = pneg %p69
        %p168 = pneg %p66
        %p170 = scmp.eq.s32.totalorder %s17, 0
        %p171 = scmp.eq.s32.totalorder %s18, 0
        %p172 = pnand %p170, %p171
        %p173 = pneg %p172
        // Predicated region
        $region66: #{_lambda_.11} parent=60 // pred_check
          _
        $region67: #{_lambda_.11} parent=60 // pred_check_branch
          %175 = sbr.rel (%p172) target = $region69
        $region68: #{_lambda_.11} parent=60 // pred_region
          %vm176 = vcmask 0
          %177 = vst.msk [vmem:[#allocation4] sm:$0x1] %vm176, 0.0
        $region69: #{_lambda_.11} parent=60 // pred_fallthru
          _
        // Predicated region
        $region70: #{_lambda_.11} parent=60 // pred_check
          %p178 = pneg %p171
        $region71: #{_lambda_.11} parent=60 // pred_check_branch
          %180 = sbr.rel (%p178) target = $region73
        $region72: #{_lambda_.11} parent=60 // pred_region
          %vm181 = vcmask 195584
          %182 = vst.msk [vmem:[#allocation2] sm:$0xff] %vm181, 0.0
          %183 = vst.msk [vmem:[#allocation2 + $0x8] sm:$0xff] %vm181, 0.0
          %184 = vst.msk [vmem:[#allocation2 + $0x10] sm:$0xff] %vm181, 0.0
        $region73: #{_lambda_.11} parent=60 // pred_fallthru
          _
        %v185 = vld [vmem:[%s157] sm:$0xf]
        %v186 = vld [vmem:[%s157 + $0x4] sm:$0xf]
        %v187 = vld [vmem:[%s157 + $0x8] sm:$0xf]
        %v188 = vld [vmem:[#allocation2] sm:$0xff]
        %v189 = vld [vmem:[#allocation2 + $0x8] sm:$0xff]
        %v190 = vld [vmem:[#allocation2 + $0x10] sm:$0xff]
        %v194 = vunpack.c.l.b16 %v185
        %v195 = vunpack.c.l.b16 %v186
        %v196 = vunpack.c.l.b16 %v187
        %v197 = vpack.c.b16 %v195, %v194
        %v198 = vpack.c.b16 %v196, %v196
        %vm199 = vcmask 523264
        %v201 = vsel %vm199, %v197, 0
        %v204 = vsel %vm199, %v198, 0
        %206 = vmatpush.bf16.xpose.msra.mxu0 0
        %207 = vmatpush.bf16.xpose.msra.mxu0 0
        %208 = vmatpush.bf16.xpose.msra.mxu0 0
        %209 = vmatpush.bf16.xpose.msra.mxu0 0
        %210 = vmatpush.bf16.xpose.msra.mxu0 0
        %211 = vmatpush.bf16.xpose.msra.mxu0 0
        %212 = vmatpush.bf16.xpose.msra.mxu0 %v204
        %213 = vmatpush.bf16.xpose.msra.mxu0 %v201
        %214 = vmatmul.bf16.gmra.mxu0 %v201
        %v215 = vpop.f32.mrf.mxu0
        %v216 = vadd.f32 0.0, %v215
        %v217 = vpop.f32.mrf.mxu0
        %v218 = vadd.f32 0.0, %v217
        %219 = vmatmul.bf16.gmra.mxu0 %v204
        %v220 = vpop.f32.mrf.mxu0
        %v221 = vadd.f32 0.0, %v220
        %v222 = vpop.f32.mrf.mxu0
        %223 = vdwg.mxu0
        %v224 = vadd.f32 %v188, %v216
        %v225 = vadd.f32 %v189, %v218
        %v226 = vadd.f32 %v190, %v221
        %vm227 = vcmask 195584
        %228 = vst.msk [vmem:[#allocation2] sm:$0xff] %vm227, %v224
        %229 = vst.msk [vmem:[#allocation2 + $0x8] sm:$0xff] %vm227, %v225
        %230 = vst.msk [vmem:[#allocation2 + $0x10] sm:$0xff] %vm227, %v226
        // Predicated region
        $region74: #{_lambda_.11} parent=60 // pred_check
          %p231 = pneg %p171
        $region75: #{_lambda_.11} parent=60 // pred_check_branch
          %233 = sbr.rel (%p231) target = $region77
        $region76: #{_lambda_.11} parent=60 // pred_region
          %v234 = vld [vmem:[#allocation2] sm:$0xff]
          %v235 = vld [vmem:[#allocation2 + $0x8] sm:$0xff]
          %v236 = vld [vmem:[#allocation2 + $0x10] sm:$0xff]
          %v237 = vld [vmem:[#allocation4] sm:$0x1]
          %239 = vrot.lane.b32.xlu0 %v235, 120
          %v240 = vpop.permute.xlu0 %239
          %v242 = vsub.f32 %v234, %v240
          %v243 = vand.u32 2147483647, %v242
          %vm244 = vcmask 64512
          %v245 = vsel %vm244, %v243, 0.0
          %246 = vadd.xlane.f32.xlu0 %v245
          %v247 = vpop.xlane.xlu0 %246
          %v248 = vrot.slane %v247, 4
          %v249 = vadd.f32 %v247, %v248
          %v250 = vrot.slane %v249, 2
          %v251 = vadd.f32 %v249, %v250
          %v252 = vrot.slane %v251, 1
          %v253 = vadd.f32 %v251, %v252
          %s254 = vtos %v253
          %v255 = vstv %s254
          %256 = vrot.lane.b32.xlu0 %v235, 8
          %v257 = vpop.permute.xlu0 %256
          %v259 = vsub.f32 %v236, %v257
          %v260 = vand.u32 2147483647, %v259
          %262 = vrot.lane.b32.xlu0 %v260, 112
          %v263 = vpop.permute.xlu0 %262
          %v265 = vsel %vm244, %v263, 0.0
          %266 = vadd.xlane.f32.xlu0 %v265
          %v267 = vpop.xlane.xlu0 %266
          %v268 = vrot.slane %v267, 4
          %v269 = vadd.f32 %v267, %v268
          %v270 = vrot.slane %v269, 2
          %v271 = vadd.f32 %v269, %v270
          %v272 = vrot.slane %v271, 1
          %v273 = vadd.f32 %v271, %v272
          %s274 = vtos %v273
          %v275 = vstv %s274
          %v276 = vadd.f32 %v255, %v275
          %v277 = vadd.f32 %v237, %v276
          %vm278 = vcmask 0
          %279 = vst.msk [vmem:[#allocation4] sm:$0x1] %vm278, %v277
        $region77: #{_lambda_.11} parent=60 // pred_fallthru
          _
        // Predicated region
        $region78: #{_lambda_.11} parent=60 // pred_check
          %p280 = pneg %p66
        $region79: #{_lambda_.11} parent=60 // pred_check_branch
          %282 = sbr.rel (%p280) target = $region81
        $region80: #{_lambda_.11} parent=60 // pred_region
          %284 = vsyncadd [#allocation5], 0
          %s286 = sshll.u32 [#allocation4], 4
          %s287 = int_to_ptr.vmem [resolvable:$true] %s286
          %s288 = sshll.u32 %s1, 4
          %s289 = int_to_ptr.hbm [resolvable:$true] %s288
          %291 = dma.vmem_to_hbm [thread:$0]  %s287, 16, %s289, [#allocation5]
        $region81: #{_lambda_.11} parent=60 // pred_fallthru
          _
        // Predicated region
        $region82: #{_lambda_.11} parent=60 // pred_check
          %p292 = pneg %p66
        $region83: #{_lambda_.11} parent=60 // pred_check_branch
          %294 = sbr.rel (%p292) target = $region85
        $region84: #{_lambda_.11} parent=60 // pred_region
          %296 = dma.done [#allocation5], 16
        $region85: #{_lambda_.11} parent=60 // pred_fallthru
          _
      $region61: #{_lambda_.11} parent=5 // pred_fallthru
        _
      %p297 = scmp.le.s32.totalorder 2, %s8
      // Predicated region
      $region86: #{_lambda_.11} parent=5 // pred_check
        %p298 = pneg %p297
      $region87: #{_lambda_.11} parent=5 // pred_check_branch
        %300 = sbr.rel (%p298) target = $region89
      $region88: #{_lambda_.11} parent=5 // pred_region
        %s301 = ssub.s32 %s8, 2
      $region89: #{_lambda_.11} parent=5 // pred_fallthru
        _
    $region6: #{_lambda_.11} parent=1 // loop_footer
      %s12 = sadd.s32 1, %s8
    $region7: #{_lambda_.11} parent=1 // loop_footer_branch
      %7 = sbr.rel target = $region3
    $region8: #{_lambda_.11} parent=1 // loop_exit
      _
    %302 = vsyncpa [#allocation5], 1
    %s303 = scalar_lea.sflag [#allocation5], 1
    %304 = vsyncpa %s303, 1

</llo_original>
